<compile_context>
chip_gen: v5e
topology: v5e:2x2
jax: 0.10.0
libtpu: 0.0.40
codegen_flags: <defaults>
</compile_context>

<pallas_src>
import functools

import jax
import jax.numpy as jnp
from jax import lax
from jax.experimental import pallas as pl
from jax.experimental.pallas import tpu as pltpu


def _round_up(x, m):
    return (x + m - 1) // m * m


def _lstm_stack_kernel(x_ref, wih_ref, whh_ref, b_ref, out_ref, gx_scr,
                       *, num_layers):
    """Full LSTM stack over the whole sequence.

    x_ref:   (S, BP, P)    time-major, lane/sublane-padded layer-0 input (f32)
    wih_ref: (L, P, 4P)    per-layer input->hidden weights, gate-block padded (bf16)
    whh_ref: (L, P, 4P)    per-layer hidden->hidden weights, gate-block padded (bf16)
    b_ref:   (L, 1, 4P)    per-layer b_ih + b_hh, gate-block padded (f32)
    out_ref: (S, BP, P)    hidden states, time-major, padded (f32).  Reused as the
                           inter-layer activation buffer; after the last layer it
                           holds the module output.
    gx_scr:  (S, BP, 4P)   hoisted input-projection pre-activations (VMEM, f32)
    """
    S, BP, P = x_ref.shape
    G = 4 * P

    for layer in range(num_layers):
        # ---- hoisted input projection: one GEMM for the whole sequence ----
        # (no time dependence -> off the serial critical path).  For layers > 0
        # this reads the previous layer's hidden states from out_ref BEFORE the
        # current layer's recurrence starts overwriting it, so aliasing is safe.
        xin = x_ref[...] if layer == 0 else out_ref[...]
        x2d = xin.reshape(S * BP, P).astype(jnp.bfloat16)           # (S*BP, P)
        gx = jnp.dot(x2d, wih_ref[layer],
                     preferred_element_type=jnp.float32)            # (S*BP, 4P)
        gx = gx + b_ref[layer]                                      # bias folded once
        gx_scr[...] = gx.reshape(S, BP, G)

        whh = whh_ref[layer]                                        # (P, 4P) bf16

        # ---- recurrence: only h @ W_hh + elementwise per step ----
        def step(t, carry):
            h_bf, c = carry                                         # (BP, P)
            gates = gx_scr[t] + jnp.dot(h_bf, whh,
                                        preferred_element_type=jnp.float32)
            # gate blocks are 128-lane aligned -> whole-vreg slices, no shuffle
            i = jax.nn.sigmoid(gates[:, 0 * P:1 * P])
            f = jax.nn.sigmoid(gates[:, 1 * P:2 * P])
            g = jnp.tanh(gates[:, 2 * P:3 * P])
            o = jax.nn.sigmoid(gates[:, 3 * P:4 * P])
            c_new = f * c + i * g
            h_new = o * jnp.tanh(c_new)
            # lane-dense, leading-dim-indexed (BP, P) unmasked store
            out_ref[t] = h_new
            return h_new.astype(jnp.bfloat16), c_new

        h0 = jnp.zeros((BP, P), jnp.bfloat16)                       # h0 = 0
        c0 = jnp.zeros((BP, P), jnp.float32)                        # c0 = 0
        # TODO(synk): for very long sequences, unroll in fixed-size chunks to
        # bound compile time instead of fully unrolling.
        lax.fori_loop(0, S, step, (h0, c0), unroll=True)


def init_lstm_params(key, input_size, hidden_size, num_layers):
    """Deterministic PyTorch-style init: uniform(-1/sqrt(H), 1/sqrt(H))."""
    k = 1.0 / jnp.sqrt(jnp.float32(hidden_size))
    params = []
    for layer in range(num_layers):
        d_in = input_size if layer == 0 else hidden_size
        key, k1, k2, k3, k4 = jax.random.split(key, 5)
        params.append(dict(
            w_ih=jax.random.uniform(k1, (4 * hidden_size, d_in),
                                    jnp.float32, -k, k),
            w_hh=jax.random.uniform(k2, (4 * hidden_size, hidden_size),
                                    jnp.float32, -k, k),
            b_ih=jax.random.uniform(k3, (4 * hidden_size,),
                                    jnp.float32, -k, k),
            b_hh=jax.random.uniform(k4, (4 * hidden_size,),
                                    jnp.float32, -k, k),
        ))
    return params


def pack_lstm_params(params, input_size, hidden_size):
    """One-time packing: transpose, combine biases, pad each gate block to 128
    lanes, pad the contraction dim to P, stack layers, cast weights to bf16."""
    H = hidden_size
    P = _round_up(max(input_size, hidden_size), 128)

    def pad_gate_cols(w):                       # (rows, 4H) -> (rows, 4P)
        rows = w.shape[0]
        w = w.reshape(rows, 4, H)
        w = jnp.pad(w, ((0, 0), (0, 0), (0, P - H)))
        return w.reshape(rows, 4 * P)

    wih_l, whh_l, b_l = [], [], []
    for layer, p in enumerate(params):
        d_in = input_size if layer == 0 else hidden_size
        wih = jnp.asarray(p["w_ih"], jnp.float32).T              # (d_in, 4H)
        whh = jnp.asarray(p["w_hh"], jnp.float32).T              # (H, 4H)
        b = (jnp.asarray(p["b_ih"], jnp.float32)
             + jnp.asarray(p["b_hh"], jnp.float32)).reshape(1, 4 * H)

        wih = jnp.pad(pad_gate_cols(wih), ((0, P - d_in), (0, 0)))   # (P, 4P)
        whh = jnp.pad(pad_gate_cols(whh), ((0, P - H), (0, 0)))      # (P, 4P)
        b = pad_gate_cols(b)                                         # (1, 4P)

        wih_l.append(wih)
        whh_l.append(whh)
        b_l.append(b)

    return dict(
        wih=jnp.stack(wih_l).astype(jnp.bfloat16),   # (L, P, 4P)
        whh=jnp.stack(whh_l).astype(jnp.bfloat16),   # (L, P, 4P)
        b=jnp.stack(b_l),                            # (L, 1, 4P) f32
        hidden_size=hidden_size,
    )


@functools.partial(jax.jit, static_argnames=("hidden_size",))
def _lstm_forward_impl(pose, wih, whh, b, *, hidden_size):
    B, S, D = pose.shape
    H = hidden_size
    L, P, _ = wih.shape
    BP = _round_up(B, 8)                 # full 8-sublane group per timestep

    # layout plumbing (done once in XLA, outside the recurrence):
    # batch-first -> time-major, pad batch to BP and features to P.
    x = jnp.transpose(pose.astype(jnp.float32), (1, 0, 2))       # (S, B, D)
    x = jnp.pad(x, ((0, 0), (0, BP - B), (0, P - D)))            # (S, BP, P)

    kernel = functools.partial(_lstm_stack_kernel, num_layers=L)

    out = pl.pallas_call(
        kernel,
        out_shape=jax.ShapeDtypeStruct((S, BP, P), jnp.float32),
        in_specs=[
            pl.BlockSpec(memory_space=pltpu.MemorySpace.VMEM),   # x
            pl.BlockSpec(memory_space=pltpu.MemorySpace.VMEM),   # W_ih (stacked)
            pl.BlockSpec(memory_space=pltpu.MemorySpace.VMEM),   # W_hh (stacked)
            pl.BlockSpec(memory_space=pltpu.MemorySpace.VMEM),   # bias (stacked)
        ],
        out_specs=pl.BlockSpec(memory_space=pltpu.MemorySpace.VMEM),
        scratch_shapes=[
            pltpu.VMEM((S, BP, 4 * P), jnp.float32),     # hoisted gate pre-activations
        ],
        # TODO(synk): for large batch, add a batch grid axis with
        # dimension_semantics=("parallel",) to use a second TensorCore, and a
        # seq-tiled pipeline if the (S, BP, 4P) scratch outgrows VMEM (64 MiB
        # on v7x).
    )(x, wih, whh, b)

    # strip padding, back to batch-first: (B, S, H)
    return jnp.transpose(out[:, :B, :H], (1, 0, 2))


def lstm_forward(pose, packed):
    """Equivalent of LSTM.forward: returns the last layer's per-step hidden
    states, shape (batch, seq_len, hidden_size). h_n/c_n are discarded, as in
    the reference module."""
    return _lstm_forward_impl(pose, packed["wih"], packed["whh"], packed["b"],
                              hidden_size=packed["hidden_size"])


if __name__ == "__main__":
    # pose is (batch, seq_len, input_size), matching batch_first=True.
    batch, seq_len, input_size = 2, 8, 16
    hidden_size, num_layers = 32, 2

    key = jax.random.PRNGKey(0)
    key, pkey, xkey = jax.random.split(key, 3)

    params = init_lstm_params(pkey, input_size, hidden_size, num_layers)
    packed = pack_lstm_params(params, input_size, hidden_size)
    pose = jax.random.normal(xkey, (batch, seq_len, input_size), jnp.float32)

    out = lstm_forward(pose, packed)
    out = jax.block_until_ready(out)

    assert out.shape == (batch, seq_len, hidden_size)
    assert out.dtype == jnp.float32
    assert bool(jnp.all(jnp.isfinite(out)))
    print("KERNEL_OK")
</pallas_src>

<mosaic_0001>
module attributes {stable_mosaic.version = 11 : i64} {
  func.func @_lstm_stack_kernel(%arg0: memref<8x8x128xf32, #tpu.memory_space<vmem>>, %arg1: memref<2x128x512xbf16, #tpu.memory_space<vmem>>, %arg2: memref<2x128x512xbf16, #tpu.memory_space<vmem>>, %arg3: memref<2x1x512xf32, #tpu.memory_space<vmem>>, %arg4: memref<8x8x128xf32, #tpu.memory_space<vmem>>, %arg5: memref<8x8x512xf32, #tpu.memory_space<vmem>>) attributes {dimension_semantics = [], scalar_prefetch = 0 : i64, scratch_operands = 1 : i64, tpu.core_type = #tpu.core_type<tc>} {
    %c0 = arith.constant 0 : index
    %c0_0 = arith.constant 0 : index
    %c0_1 = arith.constant 0 : index
    %0 = vector.load %arg0[%c0, %c0_0, %c0_1] : memref<8x8x128xf32, #tpu.memory_space<vmem>>, vector<8x8x128xf32>
    %1 = vector.shape_cast %0 : vector<8x8x128xf32> to vector<64x128xf32>
    %2 = arith.truncf %1 : vector<64x128xf32> to vector<64x128xbf16>
    %c0_2 = arith.constant 0 : index
    %c0_3 = arith.constant 0 : index
    %c0_4 = arith.constant 0 : index
    %3 = vector.load %arg1[%c0_2, %c0_3, %c0_4] : memref<2x128x512xbf16, #tpu.memory_space<vmem>>, vector<1x128x512xbf16>
    %4 = vector.shape_cast %3 : vector<1x128x512xbf16> to vector<128x512xbf16>
    %cst = arith.constant dense<0.000000e+00> : vector<64x512xf32>
    %5 = tpu.matmul %2, %4, %cst {dimension_numbers = #tpu.dot_dimension_numbers<[1], [0], [0], [1], [0, 0, 1, 1], [], []>} : vector<64x128xbf16>, vector<128x512xbf16>, vector<64x512xf32> -> vector<64x512xf32>
    %c0_5 = arith.constant 0 : index
    %c0_6 = arith.constant 0 : index
    %c0_7 = arith.constant 0 : index
    %6 = vector.load %arg3[%c0_5, %c0_6, %c0_7] : memref<2x1x512xf32, #tpu.memory_space<vmem>>, vector<1x1x512xf32>
    %7 = vector.shape_cast %6 : vector<1x1x512xf32> to vector<1x512xf32>
    %8 = vector.broadcast %7 : vector<1x512xf32> to vector<64x512xf32>
    %9 = arith.addf %5, %8 : vector<64x512xf32>
    %10 = vector.shape_cast %9 : vector<64x512xf32> to vector<8x8x512xf32>
    %c0_8 = arith.constant 0 : index
    %c0_9 = arith.constant 0 : index
    %c0_10 = arith.constant 0 : index
    %11 = vector.load %arg5[%c0_8, %c0_9, %c0_10] : memref<8x8x512xf32, #tpu.memory_space<vmem>>, vector<8x8x512xf32>
    tpu.vector_store %arg5[%c0_8, %c0_9, %c0_10], %10 {strides = array<i32>} : memref<8x8x512xf32, #tpu.memory_space<vmem>>, vector<8x8x512xf32>,
    %c0_11 = arith.constant 0 : index
    %c0_12 = arith.constant 0 : index
    %c0_13 = arith.constant 0 : index
    %12 = vector.load %arg2[%c0_11, %c0_12, %c0_13] : memref<2x128x512xbf16, #tpu.memory_space<vmem>>, vector<1x128x512xbf16>
    %13 = vector.shape_cast %12 : vector<1x128x512xbf16> to vector<128x512xbf16>
    %cst_14 = arith.constant 0.000000e+00 : bf16
    %14 = vector.broadcast %cst_14 : bf16 to vector<8x128xbf16>
    %cst_15 = arith.constant 0.000000e+00 : f32
    %15 = vector.broadcast %cst_15 : f32 to vector<8x128xf32>
    %c0_i32 = arith.constant 0 : i32
    %16 = arith.index_cast %c0_i32 : i32 to index
    %c0_16 = arith.constant 0 : index
    %c0_17 = arith.constant 0 : index
    %17 = vector.load %arg5[%16, %c0_16, %c0_17] : memref<8x8x512xf32, #tpu.memory_space<vmem>>, vector<1x8x512xf32>
    %18 = vector.shape_cast %17 : vector<1x8x512xf32> to vector<8x512xf32>
    %cst_18 = arith.constant dense<0.000000e+00> : vector<8x512xf32>
    %19 = tpu.matmul %14, %13, %cst_18 {dimension_numbers = #tpu.dot_dimension_numbers<[1], [0], [0], [1], [0, 0, 1, 1], [], []>} : vector<8x128xbf16>, vector<128x512xbf16>, vector<8x512xf32> -> vector<8x512xf32>
    %20 = arith.addf %18, %19 : vector<8x512xf32>
    %21 = vector.extract_strided_slice %20 {offsets = [0, 0], sizes = [8, 128], strides = [1, 1]} : vector<8x512xf32> to vector<8x128xf32>
    %22 = arith.negf %21 : vector<8x128xf32>
    %23 = math.exp %22 : vector<8x128xf32>
    %cst_19 = arith.constant 1.000000e+00 : f32
    %24 = vector.broadcast %cst_19 : f32 to vector<8x128xf32>
    %25 = arith.addf %24, %23 : vector<8x128xf32>
    %26 = arith.divf %24, %25 : vector<8x128xf32>
    %27 = vector.extract_strided_slice %20 {offsets = [0, 128], sizes = [8, 128], strides = [1, 1]} : vector<8x512xf32> to vector<8x128xf32>
    %28 = arith.negf %27 : vector<8x128xf32>
    %29 = math.exp %28 : vector<8x128xf32>
    %cst_20 = arith.constant 1.000000e+00 : f32
    %30 = vector.broadcast %cst_20 : f32 to vector<8x128xf32>
    %31 = arith.addf %30, %29 : vector<8x128xf32>
    %32 = arith.divf %30, %31 : vector<8x128xf32>
    %33 = vector.extract_strided_slice %20 {offsets = [0, 256], sizes = [8, 128], strides = [1, 1]} : vector<8x512xf32> to vector<8x128xf32>
    %34 = math.tanh %33 : vector<8x128xf32>
    %35 = vector.extract_strided_slice %20 {offsets = [0, 384], sizes = [8, 128], strides = [1, 1]} : vector<8x512xf32> to vector<8x128xf32>
    %36 = arith.negf %35 : vector<8x128xf32>
    %37 = math.exp %36 : vector<8x128xf32>
    %cst_21 = arith.constant 1.000000e+00 : f32
    %38 = vector.broadcast %cst_21 : f32 to vector<8x128xf32>
    %39 = arith.addf %38, %37 : vector<8x128xf32>
    %40 = arith.divf %38, %39 : vector<8x128xf32>
    %41 = arith.mulf %32, %15 : vector<8x128xf32>
    %42 = arith.mulf %26, %34 : vector<8x128xf32>
    %43 = arith.addf %41, %42 : vector<8x128xf32>
    %44 = math.tanh %43 : vector<8x128xf32>
    %45 = arith.mulf %40, %44 : vector<8x128xf32>
    %46 = arith.index_cast %c0_i32 : i32 to index
    %c0_22 = arith.constant 0 : index
    %c0_23 = arith.constant 0 : index
    %47 = vector.load %arg4[%46, %c0_22, %c0_23] : memref<8x8x128xf32, #tpu.memory_space<vmem>>, vector<1x8x128xf32>
    %48 = vector.shape_cast %47 : vector<1x8x128xf32> to vector<8x128xf32>
    %49 = vector.shape_cast %45 : vector<8x128xf32> to vector<1x8x128xf32>
    tpu.vector_store %arg4[%46, %c0_22, %c0_23], %49 {strides = array<i32>} : memref<8x8x128xf32, #tpu.memory_space<vmem>>, vector<1x8x128xf32>,
    %50 = arith.truncf %45 : vector<8x128xf32> to vector<8x128xbf16>
    %c1_i32 = arith.constant 1 : i32
    %51 = arith.index_cast %c1_i32 : i32 to index
    %c0_24 = arith.constant 0 : index
    %c0_25 = arith.constant 0 : index
    %52 = vector.load %arg5[%51, %c0_24, %c0_25] : memref<8x8x512xf32, #tpu.memory_space<vmem>>, vector<1x8x512xf32>
    %53 = vector.shape_cast %52 : vector<1x8x512xf32> to vector<8x512xf32>
    %cst_26 = arith.constant dense<0.000000e+00> : vector<8x512xf32>
    %54 = tpu.matmul %50, %13, %cst_26 {dimension_numbers = #tpu.dot_dimension_numbers<[1], [0], [0], [1], [0, 0, 1, 1], [], []>} : vector<8x128xbf16>, vector<128x512xbf16>, vector<8x512xf32> -> vector<8x512xf32>
    %55 = arith.addf %53, %54 : vector<8x512xf32>
    %56 = vector.extract_strided_slice %55 {offsets = [0, 0], sizes = [8, 128], strides = [1, 1]} : vector<8x512xf32> to vector<8x128xf32>
    %57 = arith.negf %56 : vector<8x128xf32>
    %58 = math.exp %57 : vector<8x128xf32>
    %cst_27 = arith.constant 1.000000e+00 : f32
    %59 = vector.broadcast %cst_27 : f32 to vector<8x128xf32>
    %60 = arith.addf %59, %58 : vector<8x128xf32>
    %61 = arith.divf %59, %60 : vector<8x128xf32>
    %62 = vector.extract_strided_slice %55 {offsets = [0, 128], sizes = [8, 128], strides = [1, 1]} : vector<8x512xf32> to vector<8x128xf32>
    %63 = arith.negf %62 : vector<8x128xf32>
    %64 = math.exp %63 : vector<8x128xf32>
    %cst_28 = arith.constant 1.000000e+00 : f32
    %65 = vector.broadcast %cst_28 : f32 to vector<8x128xf32>
    %66 = arith.addf %65, %64 : vector<8x128xf32>
    %67 = arith.divf %65, %66 : vector<8x128xf32>
    %68 = vector.extract_strided_slice %55 {offsets = [0, 256], sizes = [8, 128], strides = [1, 1]} : vector<8x512xf32> to vector<8x128xf32>
    %69 = math.tanh %68 : vector<8x128xf32>
    %70 = vector.extract_strided_slice %55 {offsets = [0, 384], sizes = [8, 128], strides = [1, 1]} : vector<8x512xf32> to vector<8x128xf32>
    %71 = arith.negf %70 : vector<8x128xf32>
    %72 = math.exp %71 : vector<8x128xf32>
    %cst_29 = arith.constant 1.000000e+00 : f32
    %73 = vector.broadcast %cst_29 : f32 to vector<8x128xf32>
    %74 = arith.addf %73, %72 : vector<8x128xf32>
    %75 = arith.divf %73, %74 : vector<8x128xf32>
    %76 = arith.mulf %67, %43 : vector<8x128xf32>
    %77 = arith.mulf %61, %69 : vector<8x128xf32>
    %78 = arith.addf %76, %77 : vector<8x128xf32>
    %79 = math.tanh %78 : vector<8x128xf32>
    %80 = arith.mulf %75, %79 : vector<8x128xf32>
    %81 = arith.index_cast %c1_i32 : i32 to index
    %c0_30 = arith.constant 0 : index
    %c0_31 = arith.constant 0 : index
    %82 = vector.load %arg4[%81, %c0_30, %c0_31] : memref<8x8x128xf32, #tpu.memory_space<vmem>>, vector<1x8x128xf32>
    %83 = vector.shape_cast %82 : vector<1x8x128xf32> to vector<8x128xf32>
    %84 = vector.shape_cast %80 : vector<8x128xf32> to vector<1x8x128xf32>
    tpu.vector_store %arg4[%81, %c0_30, %c0_31], %84 {strides = array<i32>} : memref<8x8x128xf32, #tpu.memory_space<vmem>>, vector<1x8x128xf32>,
    %85 = arith.truncf %80 : vector<8x128xf32> to vector<8x128xbf16>
    %c2_i32 = arith.constant 2 : i32
    %86 = arith.index_cast %c2_i32 : i32 to index
    %c0_32 = arith.constant 0 : index
    %c0_33 = arith.constant 0 : index
    %87 = vector.load %arg5[%86, %c0_32, %c0_33] : memref<8x8x512xf32, #tpu.memory_space<vmem>>, vector<1x8x512xf32>
    %88 = vector.shape_cast %87 : vector<1x8x512xf32> to vector<8x512xf32>
    %cst_34 = arith.constant dense<0.000000e+00> : vector<8x512xf32>
    %89 = tpu.matmul %85, %13, %cst_34 {dimension_numbers = #tpu.dot_dimension_numbers<[1], [0], [0], [1], [0, 0, 1, 1], [], []>} : vector<8x128xbf16>, vector<128x512xbf16>, vector<8x512xf32> -> vector<8x512xf32>
    %90 = arith.addf %88, %89 : vector<8x512xf32>
    %91 = vector.extract_strided_slice %90 {offsets = [0, 0], sizes = [8, 128], strides = [1, 1]} : vector<8x512xf32> to vector<8x128xf32>
    %92 = arith.negf %91 : vector<8x128xf32>
    %93 = math.exp %92 : vector<8x128xf32>
    %cst_35 = arith.constant 1.000000e+00 : f32
    %94 = vector.broadcast %cst_35 : f32 to vector<8x128xf32>
    %95 = arith.addf %94, %93 : vector<8x128xf32>
    %96 = arith.divf %94, %95 : vector<8x128xf32>
    %97 = vector.extract_strided_slice %90 {offsets = [0, 128], sizes = [8, 128], strides = [1, 1]} : vector<8x512xf32> to vector<8x128xf32>
    %98 = arith.negf %97 : vector<8x128xf32>
    %99 = math.exp %98 : vector<8x128xf32>
    %cst_36 = arith.constant 1.000000e+00 : f32
    %100 = vector.broadcast %cst_36 : f32 to vector<8x128xf32>
    %101 = arith.addf %100, %99 : vector<8x128xf32>
    %102 = arith.divf %100, %101 : vector<8x128xf32>
    %103 = vector.extract_strided_slice %90 {offsets = [0, 256], sizes = [8, 128], strides = [1, 1]} : vector<8x512xf32> to vector<8x128xf32>
    %104 = math.tanh %103 : vector<8x128xf32>
    %105 = vector.extract_strided_slice %90 {offsets = [0, 384], sizes = [8, 128], strides = [1, 1]} : vector<8x512xf32> to vector<8x128xf32>
    %106 = arith.negf %105 : vector<8x128xf32>
    %107 = math.exp %106 : vector<8x128xf32>
    %cst_37 = arith.constant 1.000000e+00 : f32
    %108 = vector.broadcast %cst_37 : f32 to vector<8x128xf32>
    %109 = arith.addf %108, %107 : vector<8x128xf32>
    %110 = arith.divf %108, %109 : vector<8x128xf32>
    %111 = arith.mulf %102, %78 : vector<8x128xf32>
    %112 = arith.mulf %96, %104 : vector<8x128xf32>
    %113 = arith.addf %111, %112 : vector<8x128xf32>
    %114 = math.tanh %113 : vector<8x128xf32>
    %115 = arith.mulf %110, %114 : vector<8x128xf32>
    %116 = arith.index_cast %c2_i32 : i32 to index
    %c0_38 = arith.constant 0 : index
    %c0_39 = arith.constant 0 : index
    %117 = vector.load %arg4[%116, %c0_38, %c0_39] : memref<8x8x128xf32, #tpu.memory_space<vmem>>, vector<1x8x128xf32>
    %118 = vector.shape_cast %117 : vector<1x8x128xf32> to vector<8x128xf32>
    %119 = vector.shape_cast %115 : vector<8x128xf32> to vector<1x8x128xf32>
    tpu.vector_store %arg4[%116, %c0_38, %c0_39], %119 {strides = array<i32>} : memref<8x8x128xf32, #tpu.memory_space<vmem>>, vector<1x8x128xf32>,
    %120 = arith.truncf %115 : vector<8x128xf32> to vector<8x128xbf16>
    %c3_i32 = arith.constant 3 : i32
    %121 = arith.index_cast %c3_i32 : i32 to index
    %c0_40 = arith.constant 0 : index
    %c0_41 = arith.constant 0 : index
    %122 = vector.load %arg5[%121, %c0_40, %c0_41] : memref<8x8x512xf32, #tpu.memory_space<vmem>>, vector<1x8x512xf32>
    %123 = vector.shape_cast %122 : vector<1x8x512xf32> to vector<8x512xf32>
    %cst_42 = arith.constant dense<0.000000e+00> : vector<8x512xf32>
    %124 = tpu.matmul %120, %13, %cst_42 {dimension_numbers = #tpu.dot_dimension_numbers<[1], [0], [0], [1], [0, 0, 1, 1], [], []>} : vector<8x128xbf16>, vector<128x512xbf16>, vector<8x512xf32> -> vector<8x512xf32>
    %125 = arith.addf %123, %124 : vector<8x512xf32>
    %126 = vector.extract_strided_slice %125 {offsets = [0, 0], sizes = [8, 128], strides = [1, 1]} : vector<8x512xf32> to vector<8x128xf32>
    %127 = arith.negf %126 : vector<8x128xf32>
    %128 = math.exp %127 : vector<8x128xf32>
    %cst_43 = arith.constant 1.000000e+00 : f32
    %129 = vector.broadcast %cst_43 : f32 to vector<8x128xf32>
    %130 = arith.addf %129, %128 : vector<8x128xf32>
    %131 = arith.divf %129, %130 : vector<8x128xf32>
    %132 = vector.extract_strided_slice %125 {offsets = [0, 128], sizes = [8, 128], strides = [1, 1]} : vector<8x512xf32> to vector<8x128xf32>
    %133 = arith.negf %132 : vector<8x128xf32>
    %134 = math.exp %133 : vector<8x128xf32>
    %cst_44 = arith.constant 1.000000e+00 : f32
    %135 = vector.broadcast %cst_44 : f32 to vector<8x128xf32>
    %136 = arith.addf %135, %134 : vector<8x128xf32>
    %137 = arith.divf %135, %136 : vector<8x128xf32>
    %138 = vector.extract_strided_slice %125 {offsets = [0, 256], sizes = [8, 128], strides = [1, 1]} : vector<8x512xf32> to vector<8x128xf32>
    %139 = math.tanh %138 : vector<8x128xf32>
    %140 = vector.extract_strided_slice %125 {offsets = [0, 384], sizes = [8, 128], strides = [1, 1]} : vector<8x512xf32> to vector<8x128xf32>
    %141 = arith.negf %140 : vector<8x128xf32>
    %142 = math.exp %141 : vector<8x128xf32>
    %cst_45 = arith.constant 1.000000e+00 : f32
    %143 = vector.broadcast %cst_45 : f32 to vector<8x128xf32>
    %144 = arith.addf %143, %142 : vector<8x128xf32>
    %145 = arith.divf %143, %144 : vector<8x128xf32>
    %146 = arith.mulf %137, %113 : vector<8x128xf32>
    %147 = arith.mulf %131, %139 : vector<8x128xf32>
    %148 = arith.addf %146, %147 : vector<8x128xf32>
    %149 = math.tanh %148 : vector<8x128xf32>
    %150 = arith.mulf %145, %149 : vector<8x128xf32>
    %151 = arith.index_cast %c3_i32 : i32 to index
    %c0_46 = arith.constant 0 : index
    %c0_47 = arith.constant 0 : index
    %152 = vector.load %arg4[%151, %c0_46, %c0_47] : memref<8x8x128xf32, #tpu.memory_space<vmem>>, vector<1x8x128xf32>
    %153 = vector.shape_cast %152 : vector<1x8x128xf32> to vector<8x128xf32>
    %154 = vector.shape_cast %150 : vector<8x128xf32> to vector<1x8x128xf32>
    tpu.vector_store %arg4[%151, %c0_46, %c0_47], %154 {strides = array<i32>} : memref<8x8x128xf32, #tpu.memory_space<vmem>>, vector<1x8x128xf32>,
    %155 = arith.truncf %150 : vector<8x128xf32> to vector<8x128xbf16>
    %c4_i32 = arith.constant 4 : i32
    %156 = arith.index_cast %c4_i32 : i32 to index
    %c0_48 = arith.constant 0 : index
    %c0_49 = arith.constant 0 : index
    %157 = vector.load %arg5[%156, %c0_48, %c0_49] : memref<8x8x512xf32, #tpu.memory_space<vmem>>, vector<1x8x512xf32>
    %158 = vector.shape_cast %157 : vector<1x8x512xf32> to vector<8x512xf32>
    %cst_50 = arith.constant dense<0.000000e+00> : vector<8x512xf32>
    %159 = tpu.matmul %155, %13, %cst_50 {dimension_numbers = #tpu.dot_dimension_numbers<[1], [0], [0], [1], [0, 0, 1, 1], [], []>} : vector<8x128xbf16>, vector<128x512xbf16>, vector<8x512xf32> -> vector<8x512xf32>
    %160 = arith.addf %158, %159 : vector<8x512xf32>
    %161 = vector.extract_strided_slice %160 {offsets = [0, 0], sizes = [8, 128], strides = [1, 1]} : vector<8x512xf32> to vector<8x128xf32>
    %162 = arith.negf %161 : vector<8x128xf32>
    %163 = math.exp %162 : vector<8x128xf32>
    %cst_51 = arith.constant 1.000000e+00 : f32
    %164 = vector.broadcast %cst_51 : f32 to vector<8x128xf32>
    %165 = arith.addf %164, %163 : vector<8x128xf32>
    %166 = arith.divf %164, %165 : vector<8x128xf32>
    %167 = vector.extract_strided_slice %160 {offsets = [0, 128], sizes = [8, 128], strides = [1, 1]} : vector<8x512xf32> to vector<8x128xf32>
    %168 = arith.negf %167 : vector<8x128xf32>
    %169 = math.exp %168 : vector<8x128xf32>
    %cst_52 = arith.constant 1.000000e+00 : f32
    %170 = vector.broadcast %cst_52 : f32 to vector<8x128xf32>
    %171 = arith.addf %170, %169 : vector<8x128xf32>
    %172 = arith.divf %170, %171 : vector<8x128xf32>
    %173 = vector.extract_strided_slice %160 {offsets = [0, 256], sizes = [8, 128], strides = [1, 1]} : vector<8x512xf32> to vector<8x128xf32>
    %174 = math.tanh %173 : vector<8x128xf32>
    %175 = vector.extract_strided_slice %160 {offsets = [0, 384], sizes = [8, 128], strides = [1, 1]} : vector<8x512xf32> to vector<8x128xf32>
    %176 = arith.negf %175 : vector<8x128xf32>
    %177 = math.exp %176 : vector<8x128xf32>
    %cst_53 = arith.constant 1.000000e+00 : f32
    %178 = vector.broadcast %cst_53 : f32 to vector<8x128xf32>
    %179 = arith.addf %178, %177 : vector<8x128xf32>
    %180 = arith.divf %178, %179 : vector<8x128xf32>
    %181 = arith.mulf %172, %148 : vector<8x128xf32>
    %182 = arith.mulf %166, %174 : vector<8x128xf32>
    %183 = arith.addf %181, %182 : vector<8x128xf32>
    %184 = math.tanh %183 : vector<8x128xf32>
    %185 = arith.mulf %180, %184 : vector<8x128xf32>
    %186 = arith.index_cast %c4_i32 : i32 to index
    %c0_54 = arith.constant 0 : index
    %c0_55 = arith.constant 0 : index
    %187 = vector.load %arg4[%186, %c0_54, %c0_55] : memref<8x8x128xf32, #tpu.memory_space<vmem>>, vector<1x8x128xf32>
    %188 = vector.shape_cast %187 : vector<1x8x128xf32> to vector<8x128xf32>
    %189 = vector.shape_cast %185 : vector<8x128xf32> to vector<1x8x128xf32>
    tpu.vector_store %arg4[%186, %c0_54, %c0_55], %189 {strides = array<i32>} : memref<8x8x128xf32, #tpu.memory_space<vmem>>, vector<1x8x128xf32>,
    %190 = arith.truncf %185 : vector<8x128xf32> to vector<8x128xbf16>
    %c5_i32 = arith.constant 5 : i32
    %191 = arith.index_cast %c5_i32 : i32 to index
    %c0_56 = arith.constant 0 : index
    %c0_57 = arith.constant 0 : index
    %192 = vector.load %arg5[%191, %c0_56, %c0_57] : memref<8x8x512xf32, #tpu.memory_space<vmem>>, vector<1x8x512xf32>
    %193 = vector.shape_cast %192 : vector<1x8x512xf32> to vector<8x512xf32>
    %cst_58 = arith.constant dense<0.000000e+00> : vector<8x512xf32>
    %194 = tpu.matmul %190, %13, %cst_58 {dimension_numbers = #tpu.dot_dimension_numbers<[1], [0], [0], [1], [0, 0, 1, 1], [], []>} : vector<8x128xbf16>, vector<128x512xbf16>, vector<8x512xf32> -> vector<8x512xf32>
    %195 = arith.addf %193, %194 : vector<8x512xf32>
    %196 = vector.extract_strided_slice %195 {offsets = [0, 0], sizes = [8, 128], strides = [1, 1]} : vector<8x512xf32> to vector<8x128xf32>
    %197 = arith.negf %196 : vector<8x128xf32>
    %198 = math.exp %197 : vector<8x128xf32>
    %cst_59 = arith.constant 1.000000e+00 : f32
    %199 = vector.broadcast %cst_59 : f32 to vector<8x128xf32>
    %200 = arith.addf %199, %198 : vector<8x128xf32>
    %201 = arith.divf %199, %200 : vector<8x128xf32>
    %202 = vector.extract_strided_slice %195 {offsets = [0, 128], sizes = [8, 128], strides = [1, 1]} : vector<8x512xf32> to vector<8x128xf32>
    %203 = arith.negf %202 : vector<8x128xf32>
    %204 = math.exp %203 : vector<8x128xf32>
    %cst_60 = arith.constant 1.000000e+00 : f32
    %205 = vector.broadcast %cst_60 : f32 to vector<8x128xf32>
    %206 = arith.addf %205, %204 : vector<8x128xf32>
    %207 = arith.divf %205, %206 : vector<8x128xf32>
    %208 = vector.extract_strided_slice %195 {offsets = [0, 256], sizes = [8, 128], strides = [1, 1]} : vector<8x512xf32> to vector<8x128xf32>
    %209 = math.tanh %208 : vector<8x128xf32>
    %210 = vector.extract_strided_slice %195 {offsets = [0, 384], sizes = [8, 128], strides = [1, 1]} : vector<8x512xf32> to vector<8x128xf32>
    %211 = arith.negf %210 : vector<8x128xf32>
    %212 = math.exp %211 : vector<8x128xf32>
    %cst_61 = arith.constant 1.000000e+00 : f32
    %213 = vector.broadcast %cst_61 : f32 to vector<8x128xf32>
    %214 = arith.addf %213, %212 : vector<8x128xf32>
    %215 = arith.divf %213, %214 : vector<8x128xf32>
    %216 = arith.mulf %207, %183 : vector<8x128xf32>
    %217 = arith.mulf %201, %209 : vector<8x128xf32>
    %218 = arith.addf %216, %217 : vector<8x128xf32>
    %219 = math.tanh %218 : vector<8x128xf32>
    %220 = arith.mulf %215, %219 : vector<8x128xf32>
    %221 = arith.index_cast %c5_i32 : i32 to index
    %c0_62 = arith.constant 0 : index
    %c0_63 = arith.constant 0 : index
    %222 = vector.load %arg4[%221, %c0_62, %c0_63] : memref<8x8x128xf32, #tpu.memory_space<vmem>>, vector<1x8x128xf32>
    %223 = vector.shape_cast %222 : vector<1x8x128xf32> to vector<8x128xf32>
    %224 = vector.shape_cast %220 : vector<8x128xf32> to vector<1x8x128xf32>
    tpu.vector_store %arg4[%221, %c0_62, %c0_63], %224 {strides = array<i32>} : memref<8x8x128xf32, #tpu.memory_space<vmem>>, vector<1x8x128xf32>,
    %225 = arith.truncf %220 : vector<8x128xf32> to vector<8x128xbf16>
    %c6_i32 = arith.constant 6 : i32
    %226 = arith.index_cast %c6_i32 : i32 to index
    %c0_64 = arith.constant 0 : index
    %c0_65 = arith.constant 0 : index
    %227 = vector.load %arg5[%226, %c0_64, %c0_65] : memref<8x8x512xf32, #tpu.memory_space<vmem>>, vector<1x8x512xf32>
    %228 = vector.shape_cast %227 : vector<1x8x512xf32> to vector<8x512xf32>
    %cst_66 = arith.constant dense<0.000000e+00> : vector<8x512xf32>
    %229 = tpu.matmul %225, %13, %cst_66 {dimension_numbers = #tpu.dot_dimension_numbers<[1], [0], [0], [1], [0, 0, 1, 1], [], []>} : vector<8x128xbf16>, vector<128x512xbf16>, vector<8x512xf32> -> vector<8x512xf32>
    %230 = arith.addf %228, %229 : vector<8x512xf32>
    %231 = vector.extract_strided_slice %230 {offsets = [0, 0], sizes = [8, 128], strides = [1, 1]} : vector<8x512xf32> to vector<8x128xf32>
    %232 = arith.negf %231 : vector<8x128xf32>
    %233 = math.exp %232 : vector<8x128xf32>
    %cst_67 = arith.constant 1.000000e+00 : f32
    %234 = vector.broadcast %cst_67 : f32 to vector<8x128xf32>
    %235 = arith.addf %234, %233 : vector<8x128xf32>
    %236 = arith.divf %234, %235 : vector<8x128xf32>
    %237 = vector.extract_strided_slice %230 {offsets = [0, 128], sizes = [8, 128], strides = [1, 1]} : vector<8x512xf32> to vector<8x128xf32>
    %238 = arith.negf %237 : vector<8x128xf32>
    %239 = math.exp %238 : vector<8x128xf32>
    %cst_68 = arith.constant 1.000000e+00 : f32
    %240 = vector.broadcast %cst_68 : f32 to vector<8x128xf32>
    %241 = arith.addf %240, %239 : vector<8x128xf32>
    %242 = arith.divf %240, %241 : vector<8x128xf32>
    %243 = vector.extract_strided_slice %230 {offsets = [0, 256], sizes = [8, 128], strides = [1, 1]} : vector<8x512xf32> to vector<8x128xf32>
    %244 = math.tanh %243 : vector<8x128xf32>
    %245 = vector.extract_strided_slice %230 {offsets = [0, 384], sizes = [8, 128], strides = [1, 1]} : vector<8x512xf32> to vector<8x128xf32>
    %246 = arith.negf %245 : vector<8x128xf32>
    %247 = math.exp %246 : vector<8x128xf32>
    %cst_69 = arith.constant 1.000000e+00 : f32
    %248 = vector.broadcast %cst_69 : f32 to vector<8x128xf32>
    %249 = arith.addf %248, %247 : vector<8x128xf32>
    %250 = arith.divf %248, %249 : vector<8x128xf32>
    %251 = arith.mulf %242, %218 : vector<8x128xf32>
    %252 = arith.mulf %236, %244 : vector<8x128xf32>
    %253 = arith.addf %251, %252 : vector<8x128xf32>
    %254 = math.tanh %253 : vector<8x128xf32>
    %255 = arith.mulf %250, %254 : vector<8x128xf32>
    %256 = arith.index_cast %c6_i32 : i32 to index
    %c0_70 = arith.constant 0 : index
    %c0_71 = arith.constant 0 : index
    %257 = vector.load %arg4[%256, %c0_70, %c0_71] : memref<8x8x128xf32, #tpu.memory_space<vmem>>, vector<1x8x128xf32>
    %258 = vector.shape_cast %257 : vector<1x8x128xf32> to vector<8x128xf32>
    %259 = vector.shape_cast %255 : vector<8x128xf32> to vector<1x8x128xf32>
    tpu.vector_store %arg4[%256, %c0_70, %c0_71], %259 {strides = array<i32>} : memref<8x8x128xf32, #tpu.memory_space<vmem>>, vector<1x8x128xf32>,
    %260 = arith.truncf %255 : vector<8x128xf32> to vector<8x128xbf16>
    %c7_i32 = arith.constant 7 : i32
    %261 = arith.index_cast %c7_i32 : i32 to index
    %c0_72 = arith.constant 0 : index
    %c0_73 = arith.constant 0 : index
    %262 = vector.load %arg5[%261, %c0_72, %c0_73] : memref<8x8x512xf32, #tpu.memory_space<vmem>>, vector<1x8x512xf32>
    %263 = vector.shape_cast %262 : vector<1x8x512xf32> to vector<8x512xf32>
    %cst_74 = arith.constant dense<0.000000e+00> : vector<8x512xf32>
    %264 = tpu.matmul %260, %13, %cst_74 {dimension_numbers = #tpu.dot_dimension_numbers<[1], [0], [0], [1], [0, 0, 1, 1], [], []>} : vector<8x128xbf16>, vector<128x512xbf16>, vector<8x512xf32> -> vector<8x512xf32>
    %265 = arith.addf %263, %264 : vector<8x512xf32>
    %266 = vector.extract_strided_slice %265 {offsets = [0, 0], sizes = [8, 128], strides = [1, 1]} : vector<8x512xf32> to vector<8x128xf32>
    %267 = arith.negf %266 : vector<8x128xf32>
    %268 = math.exp %267 : vector<8x128xf32>
    %cst_75 = arith.constant 1.000000e+00 : f32
    %269 = vector.broadcast %cst_75 : f32 to vector<8x128xf32>
    %270 = arith.addf %269, %268 : vector<8x128xf32>
    %271 = arith.divf %269, %270 : vector<8x128xf32>
    %272 = vector.extract_strided_slice %265 {offsets = [0, 128], sizes = [8, 128], strides = [1, 1]} : vector<8x512xf32> to vector<8x128xf32>
    %273 = arith.negf %272 : vector<8x128xf32>
    %274 = math.exp %273 : vector<8x128xf32>
    %cst_76 = arith.constant 1.000000e+00 : f32
    %275 = vector.broadcast %cst_76 : f32 to vector<8x128xf32>
    %276 = arith.addf %275, %274 : vector<8x128xf32>
    %277 = arith.divf %275, %276 : vector<8x128xf32>
    %278 = vector.extract_strided_slice %265 {offsets = [0, 256], sizes = [8, 128], strides = [1, 1]} : vector<8x512xf32> to vector<8x128xf32>
    %279 = math.tanh %278 : vector<8x128xf32>
    %280 = vector.extract_strided_slice %265 {offsets = [0, 384], sizes = [8, 128], strides = [1, 1]} : vector<8x512xf32> to vector<8x128xf32>
    %281 = arith.negf %280 : vector<8x128xf32>
    %282 = math.exp %281 : vector<8x128xf32>
    %cst_77 = arith.constant 1.000000e+00 : f32
    %283 = vector.broadcast %cst_77 : f32 to vector<8x128xf32>
    %284 = arith.addf %283, %282 : vector<8x128xf32>
    %285 = arith.divf %283, %284 : vector<8x128xf32>
    %286 = arith.mulf %277, %253 : vector<8x128xf32>
    %287 = arith.mulf %271, %279 : vector<8x128xf32>
    %288 = arith.addf %286, %287 : vector<8x128xf32>
    %289 = math.tanh %288 : vector<8x128xf32>
    %290 = arith.mulf %285, %289 : vector<8x128xf32>
    %291 = arith.index_cast %c7_i32 : i32 to index
    %c0_78 = arith.constant 0 : index
    %c0_79 = arith.constant 0 : index
    %292 = vector.load %arg4[%291, %c0_78, %c0_79] : memref<8x8x128xf32, #tpu.memory_space<vmem>>, vector<1x8x128xf32>
    %293 = vector.shape_cast %292 : vector<1x8x128xf32> to vector<8x128xf32>
    %294 = vector.shape_cast %290 : vector<8x128xf32> to vector<1x8x128xf32>
    tpu.vector_store %arg4[%291, %c0_78, %c0_79], %294 {strides = array<i32>} : memref<8x8x128xf32, #tpu.memory_space<vmem>>, vector<1x8x128xf32>,
    %295 = arith.truncf %290 : vector<8x128xf32> to vector<8x128xbf16>
    %c8_i32 = arith.constant 8 : i32
    %c0_80 = arith.constant 0 : index
    %c0_81 = arith.constant 0 : index
    %c0_82 = arith.constant 0 : index
    %296 = vector.load %arg4[%c0_80, %c0_81, %c0_82] : memref<8x8x128xf32, #tpu.memory_space<vmem>>, vector<8x8x128xf32>
    %297 = vector.shape_cast %296 : vector<8x8x128xf32> to vector<64x128xf32>
    %298 = arith.truncf %297 : vector<64x128xf32> to vector<64x128xbf16>
    %c1 = arith.constant 1 : index
    %c0_83 = arith.constant 0 : index
    %c0_84 = arith.constant 0 : index
    %299 = vector.load %arg1[%c1, %c0_83, %c0_84] : memref<2x128x512xbf16, #tpu.memory_space<vmem>>, vector<1x128x512xbf16>
    %300 = vector.shape_cast %299 : vector<1x128x512xbf16> to vector<128x512xbf16>
    %cst_85 = arith.constant dense<0.000000e+00> : vector<64x512xf32>
    %301 = tpu.matmul %298, %300, %cst_85 {dimension_numbers = #tpu.dot_dimension_numbers<[1], [0], [0], [1], [0, 0, 1, 1], [], []>} : vector<64x128xbf16>, vector<128x512xbf16>, vector<64x512xf32> -> vector<64x512xf32>
    %c1_86 = arith.constant 1 : index
    %c0_87 = arith.constant 0 : index
    %c0_88 = arith.constant 0 : index
    %302 = vector.load %arg3[%c1_86, %c0_87, %c0_88] : memref<2x1x512xf32, #tpu.memory_space<vmem>>, vector<1x1x512xf32>
    %303 = vector.shape_cast %302 : vector<1x1x512xf32> to vector<1x512xf32>
    %304 = vector.broadcast %303 : vector<1x512xf32> to vector<64x512xf32>
    %305 = arith.addf %301, %304 : vector<64x512xf32>
    %306 = vector.shape_cast %305 : vector<64x512xf32> to vector<8x8x512xf32>
    %c0_89 = arith.constant 0 : index
    %c0_90 = arith.constant 0 : index
    %c0_91 = arith.constant 0 : index
    %307 = vector.load %arg5[%c0_89, %c0_90, %c0_91] : memref<8x8x512xf32, #tpu.memory_space<vmem>>, vector<8x8x512xf32>
    tpu.vector_store %arg5[%c0_89, %c0_90, %c0_91], %306 {strides = array<i32>} : memref<8x8x512xf32, #tpu.memory_space<vmem>>, vector<8x8x512xf32>,
    %c1_92 = arith.constant 1 : index
    %c0_93 = arith.constant 0 : index
    %c0_94 = arith.constant 0 : index
    %308 = vector.load %arg2[%c1_92, %c0_93, %c0_94] : memref<2x128x512xbf16, #tpu.memory_space<vmem>>, vector<1x128x512xbf16>
    %309 = vector.shape_cast %308 : vector<1x128x512xbf16> to vector<128x512xbf16>
    %cst_95 = arith.constant 0.000000e+00 : bf16
    %310 = vector.broadcast %cst_95 : bf16 to vector<8x128xbf16>
    %cst_96 = arith.constant 0.000000e+00 : f32
    %311 = vector.broadcast %cst_96 : f32 to vector<8x128xf32>
    %c0_i32_97 = arith.constant 0 : i32
    %312 = arith.index_cast %c0_i32_97 : i32 to index
    %c0_98 = arith.constant 0 : index
    %c0_99 = arith.constant 0 : index
    %313 = vector.load %arg5[%312, %c0_98, %c0_99] : memref<8x8x512xf32, #tpu.memory_space<vmem>>, vector<1x8x512xf32>
    %314 = vector.shape_cast %313 : vector<1x8x512xf32> to vector<8x512xf32>
    %cst_100 = arith.constant dense<0.000000e+00> : vector<8x512xf32>
    %315 = tpu.matmul %310, %309, %cst_100 {dimension_numbers = #tpu.dot_dimension_numbers<[1], [0], [0], [1], [0, 0, 1, 1], [], []>} : vector<8x128xbf16>, vector<128x512xbf16>, vector<8x512xf32> -> vector<8x512xf32>
    %316 = arith.addf %314, %315 : vector<8x512xf32>
    %317 = vector.extract_strided_slice %316 {offsets = [0, 0], sizes = [8, 128], strides = [1, 1]} : vector<8x512xf32> to vector<8x128xf32>
    %318 = arith.negf %317 : vector<8x128xf32>
    %319 = math.exp %318 : vector<8x128xf32>
    %cst_101 = arith.constant 1.000000e+00 : f32
    %320 = vector.broadcast %cst_101 : f32 to vector<8x128xf32>
    %321 = arith.addf %320, %319 : vector<8x128xf32>
    %322 = arith.divf %320, %321 : vector<8x128xf32>
    %323 = vector.extract_strided_slice %316 {offsets = [0, 128], sizes = [8, 128], strides = [1, 1]} : vector<8x512xf32> to vector<8x128xf32>
    %324 = arith.negf %323 : vector<8x128xf32>
    %325 = math.exp %324 : vector<8x128xf32>
    %cst_102 = arith.constant 1.000000e+00 : f32
    %326 = vector.broadcast %cst_102 : f32 to vector<8x128xf32>
    %327 = arith.addf %326, %325 : vector<8x128xf32>
    %328 = arith.divf %326, %327 : vector<8x128xf32>
    %329 = vector.extract_strided_slice %316 {offsets = [0, 256], sizes = [8, 128], strides = [1, 1]} : vector<8x512xf32> to vector<8x128xf32>
    %330 = math.tanh %329 : vector<8x128xf32>
    %331 = vector.extract_strided_slice %316 {offsets = [0, 384], sizes = [8, 128], strides = [1, 1]} : vector<8x512xf32> to vector<8x128xf32>
    %332 = arith.negf %331 : vector<8x128xf32>
    %333 = math.exp %332 : vector<8x128xf32>
    %cst_103 = arith.constant 1.000000e+00 : f32
    %334 = vector.broadcast %cst_103 : f32 to vector<8x128xf32>
    %335 = arith.addf %334, %333 : vector<8x128xf32>
    %336 = arith.divf %334, %335 : vector<8x128xf32>
    %337 = arith.mulf %328, %311 : vector<8x128xf32>
    %338 = arith.mulf %322, %330 : vector<8x128xf32>
    %339 = arith.addf %337, %338 : vector<8x128xf32>
    %340 = math.tanh %339 : vector<8x128xf32>
    %341 = arith.mulf %336, %340 : vector<8x128xf32>
    %342 = arith.index_cast %c0_i32_97 : i32 to index
    %c0_104 = arith.constant 0 : index
    %c0_105 = arith.constant 0 : index
    %343 = vector.load %arg4[%342, %c0_104, %c0_105] : memref<8x8x128xf32, #tpu.memory_space<vmem>>, vector<1x8x128xf32>
    %344 = vector.shape_cast %343 : vector<1x8x128xf32> to vector<8x128xf32>
    %345 = vector.shape_cast %341 : vector<8x128xf32> to vector<1x8x128xf32>
    tpu.vector_store %arg4[%342, %c0_104, %c0_105], %345 {strides = array<i32>} : memref<8x8x128xf32, #tpu.memory_space<vmem>>, vector<1x8x128xf32>,
    %346 = arith.truncf %341 : vector<8x128xf32> to vector<8x128xbf16>
    %c1_i32_106 = arith.constant 1 : i32
    %347 = arith.index_cast %c1_i32_106 : i32 to index
    %c0_107 = arith.constant 0 : index
    %c0_108 = arith.constant 0 : index
    %348 = vector.load %arg5[%347, %c0_107, %c0_108] : memref<8x8x512xf32, #tpu.memory_space<vmem>>, vector<1x8x512xf32>
    %349 = vector.shape_cast %348 : vector<1x8x512xf32> to vector<8x512xf32>
    %cst_109 = arith.constant dense<0.000000e+00> : vector<8x512xf32>
    %350 = tpu.matmul %346, %309, %cst_109 {dimension_numbers = #tpu.dot_dimension_numbers<[1], [0], [0], [1], [0, 0, 1, 1], [], []>} : vector<8x128xbf16>, vector<128x512xbf16>, vector<8x512xf32> -> vector<8x512xf32>
    %351 = arith.addf %349, %350 : vector<8x512xf32>
    %352 = vector.extract_strided_slice %351 {offsets = [0, 0], sizes = [8, 128], strides = [1, 1]} : vector<8x512xf32> to vector<8x128xf32>
    %353 = arith.negf %352 : vector<8x128xf32>
    %354 = math.exp %353 : vector<8x128xf32>
    %cst_110 = arith.constant 1.000000e+00 : f32
    %355 = vector.broadcast %cst_110 : f32 to vector<8x128xf32>
    %356 = arith.addf %355, %354 : vector<8x128xf32>
    %357 = arith.divf %355, %356 : vector<8x128xf32>
    %358 = vector.extract_strided_slice %351 {offsets = [0, 128], sizes = [8, 128], strides = [1, 1]} : vector<8x512xf32> to vector<8x128xf32>
    %359 = arith.negf %358 : vector<8x128xf32>
    %360 = math.exp %359 : vector<8x128xf32>
    %cst_111 = arith.constant 1.000000e+00 : f32
    %361 = vector.broadcast %cst_111 : f32 to vector<8x128xf32>
    %362 = arith.addf %361, %360 : vector<8x128xf32>
    %363 = arith.divf %361, %362 : vector<8x128xf32>
    %364 = vector.extract_strided_slice %351 {offsets = [0, 256], sizes = [8, 128], strides = [1, 1]} : vector<8x512xf32> to vector<8x128xf32>
    %365 = math.tanh %364 : vector<8x128xf32>
    %366 = vector.extract_strided_slice %351 {offsets = [0, 384], sizes = [8, 128], strides = [1, 1]} : vector<8x512xf32> to vector<8x128xf32>
    %367 = arith.negf %366 : vector<8x128xf32>
    %368 = math.exp %367 : vector<8x128xf32>
    %cst_112 = arith.constant 1.000000e+00 : f32
    %369 = vector.broadcast %cst_112 : f32 to vector<8x128xf32>
    %370 = arith.addf %369, %368 : vector<8x128xf32>
    %371 = arith.divf %369, %370 : vector<8x128xf32>
    %372 = arith.mulf %363, %339 : vector<8x128xf32>
    %373 = arith.mulf %357, %365 : vector<8x128xf32>
    %374 = arith.addf %372, %373 : vector<8x128xf32>
    %375 = math.tanh %374 : vector<8x128xf32>
    %376 = arith.mulf %371, %375 : vector<8x128xf32>
    %377 = arith.index_cast %c1_i32_106 : i32 to index
    %c0_113 = arith.constant 0 : index
    %c0_114 = arith.constant 0 : index
    %378 = vector.load %arg4[%377, %c0_113, %c0_114] : memref<8x8x128xf32, #tpu.memory_space<vmem>>, vector<1x8x128xf32>
    %379 = vector.shape_cast %378 : vector<1x8x128xf32> to vector<8x128xf32>
    %380 = vector.shape_cast %376 : vector<8x128xf32> to vector<1x8x128xf32>
    tpu.vector_store %arg4[%377, %c0_113, %c0_114], %380 {strides = array<i32>} : memref<8x8x128xf32, #tpu.memory_space<vmem>>, vector<1x8x128xf32>,
    %381 = arith.truncf %376 : vector<8x128xf32> to vector<8x128xbf16>
    %c2_i32_115 = arith.constant 2 : i32
    %382 = arith.index_cast %c2_i32_115 : i32 to index
    %c0_116 = arith.constant 0 : index
    %c0_117 = arith.constant 0 : index
    %383 = vector.load %arg5[%382, %c0_116, %c0_117] : memref<8x8x512xf32, #tpu.memory_space<vmem>>, vector<1x8x512xf32>
    %384 = vector.shape_cast %383 : vector<1x8x512xf32> to vector<8x512xf32>
    %cst_118 = arith.constant dense<0.000000e+00> : vector<8x512xf32>
    %385 = tpu.matmul %381, %309, %cst_118 {dimension_numbers = #tpu.dot_dimension_numbers<[1], [0], [0], [1], [0, 0, 1, 1], [], []>} : vector<8x128xbf16>, vector<128x512xbf16>, vector<8x512xf32> -> vector<8x512xf32>
    %386 = arith.addf %384, %385 : vector<8x512xf32>
    %387 = vector.extract_strided_slice %386 {offsets = [0, 0], sizes = [8, 128], strides = [1, 1]} : vector<8x512xf32> to vector<8x128xf32>
    %388 = arith.negf %387 : vector<8x128xf32>
    %389 = math.exp %388 : vector<8x128xf32>
    %cst_119 = arith.constant 1.000000e+00 : f32
    %390 = vector.broadcast %cst_119 : f32 to vector<8x128xf32>
    %391 = arith.addf %390, %389 : vector<8x128xf32>
    %392 = arith.divf %390, %391 : vector<8x128xf32>
    %393 = vector.extract_strided_slice %386 {offsets = [0, 128], sizes = [8, 128], strides = [1, 1]} : vector<8x512xf32> to vector<8x128xf32>
    %394 = arith.negf %393 : vector<8x128xf32>
    %395 = math.exp %394 : vector<8x128xf32>
    %cst_120 = arith.constant 1.000000e+00 : f32
    %396 = vector.broadcast %cst_120 : f32 to vector<8x128xf32>
    %397 = arith.addf %396, %395 : vector<8x128xf32>
    %398 = arith.divf %396, %397 : vector<8x128xf32>
    %399 = vector.extract_strided_slice %386 {offsets = [0, 256], sizes = [8, 128], strides = [1, 1]} : vector<8x512xf32> to vector<8x128xf32>
    %400 = math.tanh %399 : vector<8x128xf32>
    %401 = vector.extract_strided_slice %386 {offsets = [0, 384], sizes = [8, 128], strides = [1, 1]} : vector<8x512xf32> to vector<8x128xf32>
    %402 = arith.negf %401 : vector<8x128xf32>
    %403 = math.exp %402 : vector<8x128xf32>
    %cst_121 = arith.constant 1.000000e+00 : f32
    %404 = vector.broadcast %cst_121 : f32 to vector<8x128xf32>
    %405 = arith.addf %404, %403 : vector<8x128xf32>
    %406 = arith.divf %404, %405 : vector<8x128xf32>
    %407 = arith.mulf %398, %374 : vector<8x128xf32>
    %408 = arith.mulf %392, %400 : vector<8x128xf32>
    %409 = arith.addf %407, %408 : vector<8x128xf32>
    %410 = math.tanh %409 : vector<8x128xf32>
    %411 = arith.mulf %406, %410 : vector<8x128xf32>
    %412 = arith.index_cast %c2_i32_115 : i32 to index
    %c0_122 = arith.constant 0 : index
    %c0_123 = arith.constant 0 : index
    %413 = vector.load %arg4[%412, %c0_122, %c0_123] : memref<8x8x128xf32, #tpu.memory_space<vmem>>, vector<1x8x128xf32>
    %414 = vector.shape_cast %413 : vector<1x8x128xf32> to vector<8x128xf32>
    %415 = vector.shape_cast %411 : vector<8x128xf32> to vector<1x8x128xf32>
    tpu.vector_store %arg4[%412, %c0_122, %c0_123], %415 {strides = array<i32>} : memref<8x8x128xf32, #tpu.memory_space<vmem>>, vector<1x8x128xf32>,
    %416 = arith.truncf %411 : vector<8x128xf32> to vector<8x128xbf16>
    %c3_i32_124 = arith.constant 3 : i32
    %417 = arith.index_cast %c3_i32_124 : i32 to index
    %c0_125 = arith.constant 0 : index
    %c0_126 = arith.constant 0 : index
    %418 = vector.load %arg5[%417, %c0_125, %c0_126] : memref<8x8x512xf32, #tpu.memory_space<vmem>>, vector<1x8x512xf32>
    %419 = vector.shape_cast %418 : vector<1x8x512xf32> to vector<8x512xf32>
    %cst_127 = arith.constant dense<0.000000e+00> : vector<8x512xf32>
    %420 = tpu.matmul %416, %309, %cst_127 {dimension_numbers = #tpu.dot_dimension_numbers<[1], [0], [0], [1], [0, 0, 1, 1], [], []>} : vector<8x128xbf16>, vector<128x512xbf16>, vector<8x512xf32> -> vector<8x512xf32>
    %421 = arith.addf %419, %420 : vector<8x512xf32>
    %422 = vector.extract_strided_slice %421 {offsets = [0, 0], sizes = [8, 128], strides = [1, 1]} : vector<8x512xf32> to vector<8x128xf32>
    %423 = arith.negf %422 : vector<8x128xf32>
    %424 = math.exp %423 : vector<8x128xf32>
    %cst_128 = arith.constant 1.000000e+00 : f32
    %425 = vector.broadcast %cst_128 : f32 to vector<8x128xf32>
    %426 = arith.addf %425, %424 : vector<8x128xf32>
    %427 = arith.divf %425, %426 : vector<8x128xf32>
    %428 = vector.extract_strided_slice %421 {offsets = [0, 128], sizes = [8, 128], strides = [1, 1]} : vector<8x512xf32> to vector<8x128xf32>
    %429 = arith.negf %428 : vector<8x128xf32>
    %430 = math.exp %429 : vector<8x128xf32>
    %cst_129 = arith.constant 1.000000e+00 : f32
    %431 = vector.broadcast %cst_129 : f32 to vector<8x128xf32>
    %432 = arith.addf %431, %430 : vector<8x128xf32>
    %433 = arith.divf %431, %432 : vector<8x128xf32>
    %434 = vector.extract_strided_slice %421 {offsets = [0, 256], sizes = [8, 128], strides = [1, 1]} : vector<8x512xf32> to vector<8x128xf32>
    %435 = math.tanh %434 : vector<8x128xf32>
    %436 = vector.extract_strided_slice %421 {offsets = [0, 384], sizes = [8, 128], strides = [1, 1]} : vector<8x512xf32> to vector<8x128xf32>
    %437 = arith.negf %436 : vector<8x128xf32>
    %438 = math.exp %437 : vector<8x128xf32>
    %cst_130 = arith.constant 1.000000e+00 : f32
    %439 = vector.broadcast %cst_130 : f32 to vector<8x128xf32>
    %440 = arith.addf %439, %438 : vector<8x128xf32>
    %441 = arith.divf %439, %440 : vector<8x128xf32>
    %442 = arith.mulf %433, %409 : vector<8x128xf32>
    %443 = arith.mulf %427, %435 : vector<8x128xf32>
    %444 = arith.addf %442, %443 : vector<8x128xf32>
    %445 = math.tanh %444 : vector<8x128xf32>
    %446 = arith.mulf %441, %445 : vector<8x128xf32>
    %447 = arith.index_cast %c3_i32_124 : i32 to index
    %c0_131 = arith.constant 0 : index
    %c0_132 = arith.constant 0 : index
    %448 = vector.load %arg4[%447, %c0_131, %c0_132] : memref<8x8x128xf32, #tpu.memory_space<vmem>>, vector<1x8x128xf32>
    %449 = vector.shape_cast %448 : vector<1x8x128xf32> to vector<8x128xf32>
    %450 = vector.shape_cast %446 : vector<8x128xf32> to vector<1x8x128xf32>
    tpu.vector_store %arg4[%447, %c0_131, %c0_132], %450 {strides = array<i32>} : memref<8x8x128xf32, #tpu.memory_space<vmem>>, vector<1x8x128xf32>,
    %451 = arith.truncf %446 : vector<8x128xf32> to vector<8x128xbf16>
    %c4_i32_133 = arith.constant 4 : i32
    %452 = arith.index_cast %c4_i32_133 : i32 to index
    %c0_134 = arith.constant 0 : index
    %c0_135 = arith.constant 0 : index
    %453 = vector.load %arg5[%452, %c0_134, %c0_135] : memref<8x8x512xf32, #tpu.memory_space<vmem>>, vector<1x8x512xf32>
    %454 = vector.shape_cast %453 : vector<1x8x512xf32> to vector<8x512xf32>
    %cst_136 = arith.constant dense<0.000000e+00> : vector<8x512xf32>
    %455 = tpu.matmul %451, %309, %cst_136 {dimension_numbers = #tpu.dot_dimension_numbers<[1], [0], [0], [1], [0, 0, 1, 1], [], []>} : vector<8x128xbf16>, vector<128x512xbf16>, vector<8x512xf32> -> vector<8x512xf32>
    %456 = arith.addf %454, %455 : vector<8x512xf32>
    %457 = vector.extract_strided_slice %456 {offsets = [0, 0], sizes = [8, 128], strides = [1, 1]} : vector<8x512xf32> to vector<8x128xf32>
    %458 = arith.negf %457 : vector<8x128xf32>
    %459 = math.exp %458 : vector<8x128xf32>
    %cst_137 = arith.constant 1.000000e+00 : f32
    %460 = vector.broadcast %cst_137 : f32 to vector<8x128xf32>
    %461 = arith.addf %460, %459 : vector<8x128xf32>
    %462 = arith.divf %460, %461 : vector<8x128xf32>
    %463 = vector.extract_strided_slice %456 {offsets = [0, 128], sizes = [8, 128], strides = [1, 1]} : vector<8x512xf32> to vector<8x128xf32>
    %464 = arith.negf %463 : vector<8x128xf32>
    %465 = math.exp %464 : vector<8x128xf32>
    %cst_138 = arith.constant 1.000000e+00 : f32
    %466 = vector.broadcast %cst_138 : f32 to vector<8x128xf32>
    %467 = arith.addf %466, %465 : vector<8x128xf32>
    %468 = arith.divf %466, %467 : vector<8x128xf32>
    %469 = vector.extract_strided_slice %456 {offsets = [0, 256], sizes = [8, 128], strides = [1, 1]} : vector<8x512xf32> to vector<8x128xf32>
    %470 = math.tanh %469 : vector<8x128xf32>
    %471 = vector.extract_strided_slice %456 {offsets = [0, 384], sizes = [8, 128], strides = [1, 1]} : vector<8x512xf32> to vector<8x128xf32>
    %472 = arith.negf %471 : vector<8x128xf32>
    %473 = math.exp %472 : vector<8x128xf32>
    %cst_139 = arith.constant 1.000000e+00 : f32
    %474 = vector.broadcast %cst_139 : f32 to vector<8x128xf32>
    %475 = arith.addf %474, %473 : vector<8x128xf32>
    %476 = arith.divf %474, %475 : vector<8x128xf32>
    %477 = arith.mulf %468, %444 : vector<8x128xf32>
    %478 = arith.mulf %462, %470 : vector<8x128xf32>
    %479 = arith.addf %477, %478 : vector<8x128xf32>
    %480 = math.tanh %479 : vector<8x128xf32>
    %481 = arith.mulf %476, %480 : vector<8x128xf32>
    %482 = arith.index_cast %c4_i32_133 : i32 to index
    %c0_140 = arith.constant 0 : index
    %c0_141 = arith.constant 0 : index
    %483 = vector.load %arg4[%482, %c0_140, %c0_141] : memref<8x8x128xf32, #tpu.memory_space<vmem>>, vector<1x8x128xf32>
    %484 = vector.shape_cast %483 : vector<1x8x128xf32> to vector<8x128xf32>
    %485 = vector.shape_cast %481 : vector<8x128xf32> to vector<1x8x128xf32>
    tpu.vector_store %arg4[%482, %c0_140, %c0_141], %485 {strides = array<i32>} : memref<8x8x128xf32, #tpu.memory_space<vmem>>, vector<1x8x128xf32>,
    %486 = arith.truncf %481 : vector<8x128xf32> to vector<8x128xbf16>
    %c5_i32_142 = arith.constant 5 : i32
    %487 = arith.index_cast %c5_i32_142 : i32 to index
    %c0_143 = arith.constant 0 : index
    %c0_144 = arith.constant 0 : index
    %488 = vector.load %arg5[%487, %c0_143, %c0_144] : memref<8x8x512xf32, #tpu.memory_space<vmem>>, vector<1x8x512xf32>
    %489 = vector.shape_cast %488 : vector<1x8x512xf32> to vector<8x512xf32>
    %cst_145 = arith.constant dense<0.000000e+00> : vector<8x512xf32>
    %490 = tpu.matmul %486, %309, %cst_145 {dimension_numbers = #tpu.dot_dimension_numbers<[1], [0], [0], [1], [0, 0, 1, 1], [], []>} : vector<8x128xbf16>, vector<128x512xbf16>, vector<8x512xf32> -> vector<8x512xf32>
    %491 = arith.addf %489, %490 : vector<8x512xf32>
    %492 = vector.extract_strided_slice %491 {offsets = [0, 0], sizes = [8, 128], strides = [1, 1]} : vector<8x512xf32> to vector<8x128xf32>
    %493 = arith.negf %492 : vector<8x128xf32>
    %494 = math.exp %493 : vector<8x128xf32>
    %cst_146 = arith.constant 1.000000e+00 : f32
    %495 = vector.broadcast %cst_146 : f32 to vector<8x128xf32>
    %496 = arith.addf %495, %494 : vector<8x128xf32>
    %497 = arith.divf %495, %496 : vector<8x128xf32>
    %498 = vector.extract_strided_slice %491 {offsets = [0, 128], sizes = [8, 128], strides = [1, 1]} : vector<8x512xf32> to vector<8x128xf32>
    %499 = arith.negf %498 : vector<8x128xf32>
    %500 = math.exp %499 : vector<8x128xf32>
    %cst_147 = arith.constant 1.000000e+00 : f32
    %501 = vector.broadcast %cst_147 : f32 to vector<8x128xf32>
    %502 = arith.addf %501, %500 : vector<8x128xf32>
    %503 = arith.divf %501, %502 : vector<8x128xf32>
    %504 = vector.extract_strided_slice %491 {offsets = [0, 256], sizes = [8, 128], strides = [1, 1]} : vector<8x512xf32> to vector<8x128xf32>
    %505 = math.tanh %504 : vector<8x128xf32>
    %506 = vector.extract_strided_slice %491 {offsets = [0, 384], sizes = [8, 128], strides = [1, 1]} : vector<8x512xf32> to vector<8x128xf32>
    %507 = arith.negf %506 : vector<8x128xf32>
    %508 = math.exp %507 : vector<8x128xf32>
    %cst_148 = arith.constant 1.000000e+00 : f32
    %509 = vector.broadcast %cst_148 : f32 to vector<8x128xf32>
    %510 = arith.addf %509, %508 : vector<8x128xf32>
    %511 = arith.divf %509, %510 : vector<8x128xf32>
    %512 = arith.mulf %503, %479 : vector<8x128xf32>
    %513 = arith.mulf %497, %505 : vector<8x128xf32>
    %514 = arith.addf %512, %513 : vector<8x128xf32>
    %515 = math.tanh %514 : vector<8x128xf32>
    %516 = arith.mulf %511, %515 : vector<8x128xf32>
    %517 = arith.index_cast %c5_i32_142 : i32 to index
    %c0_149 = arith.constant 0 : index
    %c0_150 = arith.constant 0 : index
    %518 = vector.load %arg4[%517, %c0_149, %c0_150] : memref<8x8x128xf32, #tpu.memory_space<vmem>>, vector<1x8x128xf32>
    %519 = vector.shape_cast %518 : vector<1x8x128xf32> to vector<8x128xf32>
    %520 = vector.shape_cast %516 : vector<8x128xf32> to vector<1x8x128xf32>
    tpu.vector_store %arg4[%517, %c0_149, %c0_150], %520 {strides = array<i32>} : memref<8x8x128xf32, #tpu.memory_space<vmem>>, vector<1x8x128xf32>,
    %521 = arith.truncf %516 : vector<8x128xf32> to vector<8x128xbf16>
    %c6_i32_151 = arith.constant 6 : i32
    %522 = arith.index_cast %c6_i32_151 : i32 to index
    %c0_152 = arith.constant 0 : index
    %c0_153 = arith.constant 0 : index
    %523 = vector.load %arg5[%522, %c0_152, %c0_153] : memref<8x8x512xf32, #tpu.memory_space<vmem>>, vector<1x8x512xf32>
    %524 = vector.shape_cast %523 : vector<1x8x512xf32> to vector<8x512xf32>
    %cst_154 = arith.constant dense<0.000000e+00> : vector<8x512xf32>
    %525 = tpu.matmul %521, %309, %cst_154 {dimension_numbers = #tpu.dot_dimension_numbers<[1], [0], [0], [1], [0, 0, 1, 1], [], []>} : vector<8x128xbf16>, vector<128x512xbf16>, vector<8x512xf32> -> vector<8x512xf32>
    %526 = arith.addf %524, %525 : vector<8x512xf32>
    %527 = vector.extract_strided_slice %526 {offsets = [0, 0], sizes = [8, 128], strides = [1, 1]} : vector<8x512xf32> to vector<8x128xf32>
    %528 = arith.negf %527 : vector<8x128xf32>
    %529 = math.exp %528 : vector<8x128xf32>
    %cst_155 = arith.constant 1.000000e+00 : f32
    %530 = vector.broadcast %cst_155 : f32 to vector<8x128xf32>
    %531 = arith.addf %530, %529 : vector<8x128xf32>
    %532 = arith.divf %530, %531 : vector<8x128xf32>
    %533 = vector.extract_strided_slice %526 {offsets = [0, 128], sizes = [8, 128], strides = [1, 1]} : vector<8x512xf32> to vector<8x128xf32>
    %534 = arith.negf %533 : vector<8x128xf32>
    %535 = math.exp %534 : vector<8x128xf32>
    %cst_156 = arith.constant 1.000000e+00 : f32
    %536 = vector.broadcast %cst_156 : f32 to vector<8x128xf32>
    %537 = arith.addf %536, %535 : vector<8x128xf32>
    %538 = arith.divf %536, %537 : vector<8x128xf32>
    %539 = vector.extract_strided_slice %526 {offsets = [0, 256], sizes = [8, 128], strides = [1, 1]} : vector<8x512xf32> to vector<8x128xf32>
    %540 = math.tanh %539 : vector<8x128xf32>
    %541 = vector.extract_strided_slice %526 {offsets = [0, 384], sizes = [8, 128], strides = [1, 1]} : vector<8x512xf32> to vector<8x128xf32>
    %542 = arith.negf %541 : vector<8x128xf32>
    %543 = math.exp %542 : vector<8x128xf32>
    %cst_157 = arith.constant 1.000000e+00 : f32
    %544 = vector.broadcast %cst_157 : f32 to vector<8x128xf32>
    %545 = arith.addf %544, %543 : vector<8x128xf32>
    %546 = arith.divf %544, %545 : vector<8x128xf32>
    %547 = arith.mulf %538, %514 : vector<8x128xf32>
    %548 = arith.mulf %532, %540 : vector<8x128xf32>
    %549 = arith.addf %547, %548 : vector<8x128xf32>
    %550 = math.tanh %549 : vector<8x128xf32>
    %551 = arith.mulf %546, %550 : vector<8x128xf32>
    %552 = arith.index_cast %c6_i32_151 : i32 to index
    %c0_158 = arith.constant 0 : index
    %c0_159 = arith.constant 0 : index
    %553 = vector.load %arg4[%552, %c0_158, %c0_159] : memref<8x8x128xf32, #tpu.memory_space<vmem>>, vector<1x8x128xf32>
    %554 = vector.shape_cast %553 : vector<1x8x128xf32> to vector<8x128xf32>
    %555 = vector.shape_cast %551 : vector<8x128xf32> to vector<1x8x128xf32>
    tpu.vector_store %arg4[%552, %c0_158, %c0_159], %555 {strides = array<i32>} : memref<8x8x128xf32, #tpu.memory_space<vmem>>, vector<1x8x128xf32>,
    %556 = arith.truncf %551 : vector<8x128xf32> to vector<8x128xbf16>
    %c7_i32_160 = arith.constant 7 : i32
    %557 = arith.index_cast %c7_i32_160 : i32 to index
    %c0_161 = arith.constant 0 : index
    %c0_162 = arith.constant 0 : index
    %558 = vector.load %arg5[%557, %c0_161, %c0_162] : memref<8x8x512xf32, #tpu.memory_space<vmem>>, vector<1x8x512xf32>
    %559 = vector.shape_cast %558 : vector<1x8x512xf32> to vector<8x512xf32>
    %cst_163 = arith.constant dense<0.000000e+00> : vector<8x512xf32>
    %560 = tpu.matmul %556, %309, %cst_163 {dimension_numbers = #tpu.dot_dimension_numbers<[1], [0], [0], [1], [0, 0, 1, 1], [], []>} : vector<8x128xbf16>, vector<128x512xbf16>, vector<8x512xf32> -> vector<8x512xf32>
    %561 = arith.addf %559, %560 : vector<8x512xf32>
    %562 = vector.extract_strided_slice %561 {offsets = [0, 0], sizes = [8, 128], strides = [1, 1]} : vector<8x512xf32> to vector<8x128xf32>
    %563 = arith.negf %562 : vector<8x128xf32>
    %564 = math.exp %563 : vector<8x128xf32>
    %cst_164 = arith.constant 1.000000e+00 : f32
    %565 = vector.broadcast %cst_164 : f32 to vector<8x128xf32>
    %566 = arith.addf %565, %564 : vector<8x128xf32>
    %567 = arith.divf %565, %566 : vector<8x128xf32>
    %568 = vector.extract_strided_slice %561 {offsets = [0, 128], sizes = [8, 128], strides = [1, 1]} : vector<8x512xf32> to vector<8x128xf32>
    %569 = arith.negf %568 : vector<8x128xf32>
    %570 = math.exp %569 : vector<8x128xf32>
    %cst_165 = arith.constant 1.000000e+00 : f32
    %571 = vector.broadcast %cst_165 : f32 to vector<8x128xf32>
    %572 = arith.addf %571, %570 : vector<8x128xf32>
    %573 = arith.divf %571, %572 : vector<8x128xf32>
    %574 = vector.extract_strided_slice %561 {offsets = [0, 256], sizes = [8, 128], strides = [1, 1]} : vector<8x512xf32> to vector<8x128xf32>
    %575 = math.tanh %574 : vector<8x128xf32>
    %576 = vector.extract_strided_slice %561 {offsets = [0, 384], sizes = [8, 128], strides = [1, 1]} : vector<8x512xf32> to vector<8x128xf32>
    %577 = arith.negf %576 : vector<8x128xf32>
    %578 = math.exp %577 : vector<8x128xf32>
    %cst_166 = arith.constant 1.000000e+00 : f32
    %579 = vector.broadcast %cst_166 : f32 to vector<8x128xf32>
    %580 = arith.addf %579, %578 : vector<8x128xf32>
    %581 = arith.divf %579, %580 : vector<8x128xf32>
    %582 = arith.mulf %573, %549 : vector<8x128xf32>
    %583 = arith.mulf %567, %575 : vector<8x128xf32>
    %584 = arith.addf %582, %583 : vector<8x128xf32>
    %585 = math.tanh %584 : vector<8x128xf32>
    %586 = arith.mulf %581, %585 : vector<8x128xf32>
    %587 = arith.index_cast %c7_i32_160 : i32 to index
    %c0_167 = arith.constant 0 : index
    %c0_168 = arith.constant 0 : index
    %588 = vector.load %arg4[%587, %c0_167, %c0_168] : memref<8x8x128xf32, #tpu.memory_space<vmem>>, vector<1x8x128xf32>
    %589 = vector.shape_cast %588 : vector<1x8x128xf32> to vector<8x128xf32>
    %590 = vector.shape_cast %586 : vector<8x128xf32> to vector<1x8x128xf32>
    tpu.vector_store %arg4[%587, %c0_167, %c0_168], %590 {strides = array<i32>} : memref<8x8x128xf32, #tpu.memory_space<vmem>>, vector<1x8x128xf32>,
    %591 = arith.truncf %586 : vector<8x128xf32> to vector<8x128xbf16>
    %c8_i32_169 = arith.constant 8 : i32
    return
  }
}

</mosaic_0001>

<llo_original>
// kernel: _lstm_forward_impl.1
$region0: #{_lstm_forward_impl.1}
  #allocation0 [shape = 'u32[]', space=smem, size = 0x4, offset = 0x4, fixed_abs, tag = 'smem constant byte address 0x4 - core index']
  #allocation1 [shape = 'u32[72,128]{1,0:T(1,128)}', space=vmem, size = 0x9000, scoped, tag = 'internal scratch']
  #allocation2 [shape = 'f32[8,8,512]{2,1,0:T(8,128)}', space=vmem, size = 0x20000, scoped, tag = 'scratch operand']
  %s0 = inlined_call_operand.vmem [shape: f32[8,8,128], index: 0, kind: input, shape index: {}]
  %s1 = inlined_call_operand.hbm [shape: bf16[2,128,512], index: 1, kind: input, shape index: {}]
  %s2 = inlined_call_operand.hbm [shape: bf16[2,128,512], index: 2, kind: input, shape index: {}]
  %s3 = inlined_call_operand.vmem [shape: f32[2,1,512], index: 3, kind: input, shape index: {}]
  %s4 = inlined_call_operand.vmem [shape: f32[8,8,128], index: 4, kind: output, shape index: {}]
  %s5 = sld [smem:[#allocation0]]
  $region34: #{_lstm_forward_impl.1} parent=0
    _
  %s7 = ssub.s32 1, %s5
  %s8 = scalar_select 0, %s7, %s5
  $region1: #{_lstm_forward_impl.1} parent=0
    #allocation3 [shape = 'u8[262144]{0}', space=vmem, size = 0x40000, scoped, tag = 'input window, operand 1, single buffered']
    #allocation4 [shape = 's32[1]{0}', space=sflag, size = 0x4, scoped, tag = 'scoped memory for _lstm_forward_impl.1']
    #allocation5 [shape = 'u8[262144]{0}', space=vmem, size = 0x40000, scoped, tag = 'input window, operand 2, single buffered']
    #allocation6 [shape = 's32[1]{0}', space=sflag, size = 0x4, scoped, tag = 'scoped memory for _lstm_forward_impl.1']
    %9 = vsyncpa [#allocation4], 0
    %10 = vsyncpa [#allocation6], 0
    // Predicated region
    $region2: #{_lstm_forward_impl.1} parent=1 // pred_check
      _
    $region3: #{_lstm_forward_impl.1} parent=1 // pred_check_branch
      %12 = sbr.rel (0) target = $region5
    $region4: #{_lstm_forward_impl.1} parent=1 // pred_region
      _
    $region5: #{_lstm_forward_impl.1} parent=1 // pred_fallthru
      _
    // Predicated region
    $region6: #{_lstm_forward_impl.1} parent=1 // pred_check
      _
    $region7: #{_lstm_forward_impl.1} parent=1 // pred_check_branch
      %14 = sbr.rel (0) target = $region9
    $region8: #{_lstm_forward_impl.1} parent=1 // pred_region
      %16 = vsyncadd [#allocation4], 0
      %s17 = sshll.u32 %s1, 4
      %s18 = int_to_ptr.hbm [resolvable:$true] %s17
      %s19 = sshll.u32 [#allocation3], 4
      %s20 = int_to_ptr.vmem [resolvable:$true] %s19
      %25 = dma.hbm_to_vmem [thread:$0]  %s18, 8192, %s20, [#allocation4], 256, 256, 16
    $region9: #{_lstm_forward_impl.1} parent=1 // pred_fallthru
      _
    // Predicated region
    $region10: #{_lstm_forward_impl.1} parent=1 // pred_check
      _
    $region11: #{_lstm_forward_impl.1} parent=1 // pred_check_branch
      %27 = sbr.rel (0) target = $region13
    $region12: #{_lstm_forward_impl.1} parent=1 // pred_region
      %29 = vsyncadd [#allocation6], 0
      %s30 = sshll.u32 %s2, 4
      %s31 = int_to_ptr.hbm [resolvable:$true] %s30
      %s32 = sshll.u32 [#allocation5], 4
      %s33 = int_to_ptr.vmem [resolvable:$true] %s32
      %38 = dma.hbm_to_vmem [thread:$0]  %s31, 8192, %s33, [#allocation6], 256, 256, 16
    $region13: #{_lstm_forward_impl.1} parent=1 // pred_fallthru
      _
    // Predicated region
    $region14: #{_lstm_forward_impl.1} parent=1 // pred_check
      _
    $region15: #{_lstm_forward_impl.1} parent=1 // pred_check_branch
      %40 = sbr.rel (0) target = $region17
    $region16: #{_lstm_forward_impl.1} parent=1 // pred_region
      _
    $region17: #{_lstm_forward_impl.1} parent=1 // pred_fallthru
      _
    // Predicated region
    $region18: #{_lstm_forward_impl.1} parent=1 // pred_check
      _
    $region19: #{_lstm_forward_impl.1} parent=1 // pred_check_branch
      %42 = sbr.rel (0) target = $region21
    $region20: #{_lstm_forward_impl.1} parent=1 // pred_region
      %44 = dma.done [#allocation4], 8192
    $region21: #{_lstm_forward_impl.1} parent=1 // pred_fallthru
      _
    // Predicated region
    $region22: #{_lstm_forward_impl.1} parent=1 // pred_check
      _
    $region23: #{_lstm_forward_impl.1} parent=1 // pred_check_branch
      %46 = sbr.rel (0) target = $region25
    $region24: #{_lstm_forward_impl.1} parent=1 // pred_region
      %48 = dma.done [#allocation6], 8192
    $region25: #{_lstm_forward_impl.1} parent=1 // pred_fallthru
      _
    %v50 = vld [vmem:[%s0] sm:$0xff]
    %v51 = vld [vmem:[%s0 + $0x8] sm:$0xff]
    %v52 = vld [vmem:[%s0 + $0x10] sm:$0xff]
    %v53 = vld [vmem:[%s0 + $0x18] sm:$0xff]
    %v54 = vld [vmem:[%s0 + $0x20] sm:$0xff]
    %v55 = vld [vmem:[%s0 + $0x28] sm:$0xff]
    %v56 = vld [vmem:[%s0 + $0x30] sm:$0xff]
    %v57 = vld [vmem:[%s0 + $0x38] sm:$0xff]
    %v58 = vpack.c.bf16 %v51, %v50
    %v59 = vpack.c.bf16 %v53, %v52
    %v60 = vpack.c.bf16 %v55, %v54
    %v61 = vpack.c.bf16 %v57, %v56
    %v62 = vld [vmem:[#allocation3] sm:$0xff]
    %v63 = vld [vmem:[#allocation3 + $0x8] sm:$0xff]
    %v64 = vld [vmem:[#allocation3 + $0x10] sm:$0xff]
    %v65 = vld [vmem:[#allocation3 + $0x18] sm:$0xff]
    %v66 = vld [vmem:[#allocation3 + $0x20] sm:$0xff]
    %v67 = vld [vmem:[#allocation3 + $0x28] sm:$0xff]
    %v68 = vld [vmem:[#allocation3 + $0x30] sm:$0xff]
    %v69 = vld [vmem:[#allocation3 + $0x38] sm:$0xff]
    %v70 = vld [vmem:[#allocation3 + $0x40] sm:$0xff]
    %v71 = vld [vmem:[#allocation3 + $0x48] sm:$0xff]
    %v72 = vld [vmem:[#allocation3 + $0x50] sm:$0xff]
    %v73 = vld [vmem:[#allocation3 + $0x58] sm:$0xff]
    %v74 = vld [vmem:[#allocation3 + $0x60] sm:$0xff]
    %v75 = vld [vmem:[#allocation3 + $0x68] sm:$0xff]
    %v76 = vld [vmem:[#allocation3 + $0x70] sm:$0xff]
    %v77 = vld [vmem:[#allocation3 + $0x78] sm:$0xff]
    %v78 = vld [vmem:[#allocation3 + $0x80] sm:$0xff]
    %v79 = vld [vmem:[#allocation3 + $0x88] sm:$0xff]
    %v80 = vld [vmem:[#allocation3 + $0x90] sm:$0xff]
    %v81 = vld [vmem:[#allocation3 + $0x98] sm:$0xff]
    %v82 = vld [vmem:[#allocation3 + $0xa0] sm:$0xff]
    %v83 = vld [vmem:[#allocation3 + $0xa8] sm:$0xff]
    %v84 = vld [vmem:[#allocation3 + $0xb0] sm:$0xff]
    %v85 = vld [vmem:[#allocation3 + $0xb8] sm:$0xff]
    %v86 = vld [vmem:[#allocation3 + $0xc0] sm:$0xff]
    %v87 = vld [vmem:[#allocation3 + $0xc8] sm:$0xff]
    %v88 = vld [vmem:[#allocation3 + $0xd0] sm:$0xff]
    %v89 = vld [vmem:[#allocation3 + $0xd8] sm:$0xff]
    %v90 = vld [vmem:[#allocation3 + $0xe0] sm:$0xff]
    %v91 = vld [vmem:[#allocation3 + $0xe8] sm:$0xff]
    %v92 = vld [vmem:[#allocation3 + $0xf0] sm:$0xff]
    %v93 = vld [vmem:[#allocation3 + $0xf8] sm:$0xff]
    %v94 = vld [vmem:[%s3] sm:$0xf]
    %v96 = vperm.slane %v94, 0
    %v97 = vperm.slane %v94, 1
    %v98 = vperm.slane %v94, 2
    %v99 = vperm.slane %v94, 3
    %v136 = vunpack.c.l.b16 %v62
    %v137 = vunpack.c.h.b16 %v62
    %v138 = vunpack.c.l.b16 %v63
    %v139 = vunpack.c.h.b16 %v63
    %v140 = vunpack.c.l.b16 %v64
    %v141 = vunpack.c.h.b16 %v64
    %v142 = vunpack.c.l.b16 %v65
    %v143 = vunpack.c.h.b16 %v65
    %v144 = vunpack.c.l.b16 %v66
    %v145 = vunpack.c.h.b16 %v66
    %v146 = vunpack.c.l.b16 %v67
    %v147 = vunpack.c.h.b16 %v67
    %v148 = vunpack.c.l.b16 %v68
    %v149 = vunpack.c.h.b16 %v68
    %v150 = vunpack.c.l.b16 %v69
    %v151 = vunpack.c.h.b16 %v69
    %v152 = vunpack.c.l.b16 %v70
    %v153 = vunpack.c.h.b16 %v70
    %v154 = vunpack.c.l.b16 %v71
    %v155 = vunpack.c.h.b16 %v71
    %v156 = vunpack.c.l.b16 %v72
    %v157 = vunpack.c.h.b16 %v72
    %v158 = vunpack.c.l.b16 %v73
    %v159 = vunpack.c.h.b16 %v73
    %v160 = vunpack.c.l.b16 %v74
    %v161 = vunpack.c.h.b16 %v74
    %v162 = vunpack.c.l.b16 %v75
    %v163 = vunpack.c.h.b16 %v75
    %v164 = vunpack.c.l.b16 %v76
    %v165 = vunpack.c.h.b16 %v76
    %v166 = vunpack.c.l.b16 %v77
    %v167 = vunpack.c.h.b16 %v77
    %v168 = vunpack.c.l.b16 %v78
    %v169 = vunpack.c.h.b16 %v78
    %v170 = vunpack.c.l.b16 %v79
    %v171 = vunpack.c.h.b16 %v79
    %v172 = vunpack.c.l.b16 %v80
    %v173 = vunpack.c.h.b16 %v80
    %v174 = vunpack.c.l.b16 %v81
    %v175 = vunpack.c.h.b16 %v81
    %v176 = vunpack.c.l.b16 %v82
    %v177 = vunpack.c.h.b16 %v82
    %v178 = vunpack.c.l.b16 %v83
    %v179 = vunpack.c.h.b16 %v83
    %v180 = vunpack.c.l.b16 %v84
    %v181 = vunpack.c.h.b16 %v84
    %v182 = vunpack.c.l.b16 %v85
    %v183 = vunpack.c.h.b16 %v85
    %v184 = vunpack.c.l.b16 %v86
    %v185 = vunpack.c.h.b16 %v86
    %v186 = vunpack.c.l.b16 %v87
    %v187 = vunpack.c.h.b16 %v87
    %v188 = vunpack.c.l.b16 %v88
    %v189 = vunpack.c.h.b16 %v88
    %v190 = vunpack.c.l.b16 %v89
    %v191 = vunpack.c.h.b16 %v89
    %v192 = vunpack.c.l.b16 %v90
    %v193 = vunpack.c.h.b16 %v90
    %v194 = vunpack.c.l.b16 %v91
    %v195 = vunpack.c.h.b16 %v91
    %v196 = vunpack.c.l.b16 %v92
    %v197 = vunpack.c.h.b16 %v92
    %v198 = vunpack.c.l.b16 %v93
    %v199 = vunpack.c.h.b16 %v93
    %v200 = vpack.c.b16 %v140, %v136
    %v201 = vpack.c.b16 %v141, %v137
    %v202 = vpack.c.b16 %v142, %v138
    %v203 = vpack.c.b16 %v143, %v139
    %v204 = vpack.c.b16 %v148, %v144
    %v205 = vpack.c.b16 %v149, %v145
    %v206 = vpack.c.b16 %v150, %v146
    %v207 = vpack.c.b16 %v151, %v147
    %v208 = vpack.c.b16 %v156, %v152
    %v209 = vpack.c.b16 %v157, %v153
    %v210 = vpack.c.b16 %v158, %v154
    %v211 = vpack.c.b16 %v159, %v155
    %v212 = vpack.c.b16 %v164, %v160
    %v213 = vpack.c.b16 %v165, %v161
    %v214 = vpack.c.b16 %v166, %v162
    %v215 = vpack.c.b16 %v167, %v163
    %v216 = vpack.c.b16 %v172, %v168
    %v217 = vpack.c.b16 %v173, %v169
    %v218 = vpack.c.b16 %v174, %v170
    %v219 = vpack.c.b16 %v175, %v171
    %v220 = vpack.c.b16 %v180, %v176
    %v221 = vpack.c.b16 %v181, %v177
    %v222 = vpack.c.b16 %v182, %v178
    %v223 = vpack.c.b16 %v183, %v179
    %v224 = vpack.c.b16 %v188, %v184
    %v225 = vpack.c.b16 %v189, %v185
    %v226 = vpack.c.b16 %v190, %v186
    %v227 = vpack.c.b16 %v191, %v187
    %v228 = vpack.c.b16 %v196, %v192
    %v229 = vpack.c.b16 %v197, %v193
    %v230 = vpack.c.b16 %v198, %v194
    %v231 = vpack.c.b16 %v199, %v195
    %264 = vmatpush.bf16.msra.mxu0 %v228
    %265 = vmatpush.bf16.msra.mxu0 %v224
    %266 = vmatpush.bf16.msra.mxu0 %v220
    %267 = vmatpush.bf16.msra.mxu0 %v216
    %268 = vmatpush.bf16.msra.mxu0 %v212
    %269 = vmatpush.bf16.msra.mxu0 %v208
    %270 = vmatpush.bf16.msra.mxu0 %v204
    %271 = vmatpush.bf16.msra.mxu0 %v200
    %272 = vmatmul.bf16.gmra.mxu0 %v58
    %v273 = vpop.f32.mrf.mxu0
    %v274 = vadd.f32 %v96, %v273
    %v275 = vpop.f32.mrf.mxu0
    %v276 = vadd.f32 %v96, %v275
    %277 = vmatmul.bf16.gmra.mxu0 %v59
    %v278 = vpop.f32.mrf.mxu0
    %v279 = vadd.f32 %v96, %v278
    %v280 = vpop.f32.mrf.mxu0
    %v281 = vadd.f32 %v96, %v280
    %282 = vmatmul.bf16.gmra.mxu0 %v60
    %v283 = vpop.f32.mrf.mxu0
    %v284 = vadd.f32 %v96, %v283
    %v285 = vpop.f32.mrf.mxu0
    %v286 = vadd.f32 %v96, %v285
    %287 = vmatmul.bf16.gmra.mxu0 %v61
    %v288 = vpop.f32.mrf.mxu0
    %v289 = vadd.f32 %v96, %v288
    %v290 = vpop.f32.mrf.mxu0
    %v291 = vadd.f32 %v96, %v290
    %292 = vdwg.mxu0
    %293 = vmatpush.bf16.msra.mxu0 %v229
    %294 = vmatpush.bf16.msra.mxu0 %v225
    %295 = vmatpush.bf16.msra.mxu0 %v221
    %296 = vmatpush.bf16.msra.mxu0 %v217
    %297 = vmatpush.bf16.msra.mxu0 %v213
    %298 = vmatpush.bf16.msra.mxu0 %v209
    %299 = vmatpush.bf16.msra.mxu0 %v205
    %300 = vmatpush.bf16.msra.mxu0 %v201
    %301 = vmatmul.bf16.gmra.mxu0 %v58
    %v302 = vpop.f32.mrf.mxu0
    %v303 = vadd.f32 %v97, %v302
    %v304 = vpop.f32.mrf.mxu0
    %v305 = vadd.f32 %v97, %v304
    %306 = vmatmul.bf16.gmra.mxu0 %v59
    %v307 = vpop.f32.mrf.mxu0
    %v308 = vadd.f32 %v97, %v307
    %v309 = vpop.f32.mrf.mxu0
    %v310 = vadd.f32 %v97, %v309
    %311 = vmatmul.bf16.gmra.mxu0 %v60
    %v312 = vpop.f32.mrf.mxu0
    %v313 = vadd.f32 %v97, %v312
    %v314 = vpop.f32.mrf.mxu0
    %v315 = vadd.f32 %v97, %v314
    %316 = vmatmul.bf16.gmra.mxu0 %v61
    %v317 = vpop.f32.mrf.mxu0
    %v318 = vadd.f32 %v97, %v317
    %v319 = vpop.f32.mrf.mxu0
    %v320 = vadd.f32 %v97, %v319
    %321 = vdwg.mxu0
    %322 = vmatpush.bf16.msra.mxu0 %v230
    %323 = vmatpush.bf16.msra.mxu0 %v226
    %324 = vmatpush.bf16.msra.mxu0 %v222
    %325 = vmatpush.bf16.msra.mxu0 %v218
    %326 = vmatpush.bf16.msra.mxu0 %v214
    %327 = vmatpush.bf16.msra.mxu0 %v210
    %328 = vmatpush.bf16.msra.mxu0 %v206
    %329 = vmatpush.bf16.msra.mxu0 %v202
    %330 = vmatmul.bf16.gmra.mxu0 %v58
    %v331 = vpop.f32.mrf.mxu0
    %v332 = vadd.f32 %v98, %v331
    %v333 = vpop.f32.mrf.mxu0
    %v334 = vadd.f32 %v98, %v333
    %335 = vmatmul.bf16.gmra.mxu0 %v59
    %v336 = vpop.f32.mrf.mxu0
    %v337 = vadd.f32 %v98, %v336
    %v338 = vpop.f32.mrf.mxu0
    %v339 = vadd.f32 %v98, %v338
    %340 = vmatmul.bf16.gmra.mxu0 %v60
    %v341 = vpop.f32.mrf.mxu0
    %v342 = vadd.f32 %v98, %v341
    %v343 = vpop.f32.mrf.mxu0
    %v344 = vadd.f32 %v98, %v343
    %345 = vmatmul.bf16.gmra.mxu0 %v61
    %v346 = vpop.f32.mrf.mxu0
    %v347 = vadd.f32 %v98, %v346
    %v348 = vpop.f32.mrf.mxu0
    %v349 = vadd.f32 %v98, %v348
    %350 = vdwg.mxu0
    %351 = vmatpush.bf16.msra.mxu0 %v231
    %352 = vmatpush.bf16.msra.mxu0 %v227
    %353 = vmatpush.bf16.msra.mxu0 %v223
    %354 = vmatpush.bf16.msra.mxu0 %v219
    %355 = vmatpush.bf16.msra.mxu0 %v215
    %356 = vmatpush.bf16.msra.mxu0 %v211
    %357 = vmatpush.bf16.msra.mxu0 %v207
    %358 = vmatpush.bf16.msra.mxu0 %v203
    %359 = vmatmul.bf16.gmra.mxu0 %v58
    %v360 = vpop.f32.mrf.mxu0
    %v361 = vadd.f32 %v99, %v360
    %v362 = vpop.f32.mrf.mxu0
    %v363 = vadd.f32 %v99, %v362
    %364 = vmatmul.bf16.gmra.mxu0 %v59
    %v365 = vpop.f32.mrf.mxu0
    %v366 = vadd.f32 %v99, %v365
    %v367 = vpop.f32.mrf.mxu0
    %v368 = vadd.f32 %v99, %v367
    %369 = vmatmul.bf16.gmra.mxu0 %v60
    %v370 = vpop.f32.mrf.mxu0
    %v371 = vadd.f32 %v99, %v370
    %v372 = vpop.f32.mrf.mxu0
    %v373 = vadd.f32 %v99, %v372
    %374 = vmatmul.bf16.gmra.mxu0 %v61
    %v375 = vpop.f32.mrf.mxu0
    %v376 = vadd.f32 %v99, %v375
    %v377 = vpop.f32.mrf.mxu0
    %v378 = vadd.f32 %v99, %v377
    %379 = vdwg.mxu0
    %380 = vst [vmem:[#allocation2] sm:$0xff] %v274
    %381 = vst [vmem:[#allocation2 + $0x8] sm:$0xff] %v303
    %382 = vst [vmem:[#allocation2 + $0x10] sm:$0xff] %v332
    %383 = vst [vmem:[#allocation2 + $0x18] sm:$0xff] %v361
    %384 = vst [vmem:[#allocation2 + $0x20] sm:$0xff] %v276
    %385 = vst [vmem:[#allocation2 + $0x28] sm:$0xff] %v305
    %386 = vst [vmem:[#allocation2 + $0x30] sm:$0xff] %v334
    %387 = vst [vmem:[#allocation2 + $0x38] sm:$0xff] %v363
    %388 = vst [vmem:[#allocation2 + $0x40] sm:$0xff] %v279
    %389 = vst [vmem:[#allocation2 + $0x48] sm:$0xff] %v308
    %390 = vst [vmem:[#allocation2 + $0x50] sm:$0xff] %v337
    %391 = vst [vmem:[#allocation2 + $0x58] sm:$0xff] %v366
    %392 = vst [vmem:[#allocation2 + $0x60] sm:$0xff] %v281
    %393 = vst [vmem:[#allocation2 + $0x68] sm:$0xff] %v310
    %394 = vst [vmem:[#allocation2 + $0x70] sm:$0xff] %v339
    %395 = vst [vmem:[#allocation2 + $0x78] sm:$0xff] %v368
    %396 = vst [vmem:[#allocation2 + $0x80] sm:$0xff] %v284
    %397 = vst [vmem:[#allocation2 + $0x88] sm:$0xff] %v313
    %398 = vst [vmem:[#allocation2 + $0x90] sm:$0xff] %v342
    %399 = vst [vmem:[#allocation2 + $0x98] sm:$0xff] %v371
    %400 = vst [vmem:[#allocation2 + $0xa0] sm:$0xff] %v286
    %401 = vst [vmem:[#allocation2 + $0xa8] sm:$0xff] %v315
    %402 = vst [vmem:[#allocation2 + $0xb0] sm:$0xff] %v344
    %403 = vst [vmem:[#allocation2 + $0xb8] sm:$0xff] %v373
    %404 = vst [vmem:[#allocation2 + $0xc0] sm:$0xff] %v289
    %405 = vst [vmem:[#allocation2 + $0xc8] sm:$0xff] %v318
    %406 = vst [vmem:[#allocation2 + $0xd0] sm:$0xff] %v347
    %407 = vst [vmem:[#allocation2 + $0xd8] sm:$0xff] %v376
    %408 = vst [vmem:[#allocation2 + $0xe0] sm:$0xff] %v291
    %409 = vst [vmem:[#allocation2 + $0xe8] sm:$0xff] %v320
    %410 = vst [vmem:[#allocation2 + $0xf0] sm:$0xff] %v349
    %411 = vst [vmem:[#allocation2 + $0xf8] sm:$0xff] %v378
    %v412 = vld [vmem:[#allocation5] sm:$0xff]
    %v413 = vld [vmem:[#allocation5 + $0x8] sm:$0xff]
    %v414 = vld [vmem:[#allocation5 + $0x10] sm:$0xff]
    %v415 = vld [vmem:[#allocation5 + $0x18] sm:$0xff]
    %v416 = vld [vmem:[#allocation5 + $0x20] sm:$0xff]
    %v417 = vld [vmem:[#allocation5 + $0x28] sm:$0xff]
    %v418 = vld [vmem:[#allocation5 + $0x30] sm:$0xff]
    %v419 = vld [vmem:[#allocation5 + $0x38] sm:$0xff]
    %v420 = vld [vmem:[#allocation5 + $0x40] sm:$0xff]
    %v421 = vld [vmem:[#allocation5 + $0x48] sm:$0xff]
    %v422 = vld [vmem:[#allocation5 + $0x50] sm:$0xff]
    %v423 = vld [vmem:[#allocation5 + $0x58] sm:$0xff]
    %v424 = vld [vmem:[#allocation5 + $0x60] sm:$0xff]
    %v425 = vld [vmem:[#allocation5 + $0x68] sm:$0xff]
    %v426 = vld [vmem:[#allocation5 + $0x70] sm:$0xff]
    %v427 = vld [vmem:[#allocation5 + $0x78] sm:$0xff]
    %v428 = vld [vmem:[#allocation5 + $0x80] sm:$0xff]
    %v429 = vld [vmem:[#allocation5 + $0x88] sm:$0xff]
    %v430 = vld [vmem:[#allocation5 + $0x90] sm:$0xff]
    %v431 = vld [vmem:[#allocation5 + $0x98] sm:$0xff]
    %v432 = vld [vmem:[#allocation5 + $0xa0] sm:$0xff]
    %v433 = vld [vmem:[#allocation5 + $0xa8] sm:$0xff]
    %v434 = vld [vmem:[#allocation5 + $0xb0] sm:$0xff]
    %v435 = vld [vmem:[#allocation5 + $0xb8] sm:$0xff]
    %v436 = vld [vmem:[#allocation5 + $0xc0] sm:$0xff]
    %v437 = vld [vmem:[#allocation5 + $0xc8] sm:$0xff]
    %v438 = vld [vmem:[#allocation5 + $0xd0] sm:$0xff]
    %v439 = vld [vmem:[#allocation5 + $0xd8] sm:$0xff]
    %v440 = vld [vmem:[#allocation5 + $0xe0] sm:$0xff]
    %v441 = vld [vmem:[#allocation5 + $0xe8] sm:$0xff]
    %v442 = vld [vmem:[#allocation5 + $0xf0] sm:$0xff]
    %v443 = vld [vmem:[#allocation5 + $0xf8] sm:$0xff]
    %v444 = vld [vmem:[#allocation2] sm:$0xff]
    %v445 = vld [vmem:[#allocation2 + $0x8] sm:$0xff]
    %v446 = vld [vmem:[#allocation2 + $0x10] sm:$0xff]
    %v447 = vld [vmem:[#allocation2 + $0x18] sm:$0xff]
    %v480 = vunpack.c.l.b16 %v412
    %v481 = vunpack.c.h.b16 %v412
    %v482 = vunpack.c.l.b16 %v413
    %v483 = vunpack.c.h.b16 %v413
    %v484 = vunpack.c.l.b16 %v414
    %v485 = vunpack.c.h.b16 %v414
    %v486 = vunpack.c.l.b16 %v415
    %v487 = vunpack.c.h.b16 %v415
    %v488 = vunpack.c.l.b16 %v416
    %v489 = vunpack.c.h.b16 %v416
    %v490 = vunpack.c.l.b16 %v417
    %v491 = vunpack.c.h.b16 %v417
    %v492 = vunpack.c.l.b16 %v418
    %v493 = vunpack.c.h.b16 %v418
    %v494 = vunpack.c.l.b16 %v419
    %v495 = vunpack.c.h.b16 %v419
    %v496 = vunpack.c.l.b16 %v420
    %v497 = vunpack.c.h.b16 %v420
    %v498 = vunpack.c.l.b16 %v421
    %v499 = vunpack.c.h.b16 %v421
    %v500 = vunpack.c.l.b16 %v422
    %v501 = vunpack.c.h.b16 %v422
    %v502 = vunpack.c.l.b16 %v423
    %v503 = vunpack.c.h.b16 %v423
    %v504 = vunpack.c.l.b16 %v424
    %v505 = vunpack.c.h.b16 %v424
    %v506 = vunpack.c.l.b16 %v425
    %v507 = vunpack.c.h.b16 %v425
    %v508 = vunpack.c.l.b16 %v426
    %v509 = vunpack.c.h.b16 %v426
    %v510 = vunpack.c.l.b16 %v427
    %v511 = vunpack.c.h.b16 %v427
    %v512 = vunpack.c.l.b16 %v428
    %v513 = vunpack.c.h.b16 %v428
    %v514 = vunpack.c.l.b16 %v429
    %v515 = vunpack.c.h.b16 %v429
    %v516 = vunpack.c.l.b16 %v430
    %v517 = vunpack.c.h.b16 %v430
    %v518 = vunpack.c.l.b16 %v431
    %v519 = vunpack.c.h.b16 %v431
    %v520 = vunpack.c.l.b16 %v432
    %v521 = vunpack.c.h.b16 %v432
    %v522 = vunpack.c.l.b16 %v433
    %v523 = vunpack.c.h.b16 %v433
    %v524 = vunpack.c.l.b16 %v434
    %v525 = vunpack.c.h.b16 %v434
    %v526 = vunpack.c.l.b16 %v435
    %v527 = vunpack.c.h.b16 %v435
    %v528 = vunpack.c.l.b16 %v436
    %v529 = vunpack.c.h.b16 %v436
    %v530 = vunpack.c.l.b16 %v437
    %v531 = vunpack.c.h.b16 %v437
    %v532 = vunpack.c.l.b16 %v438
    %v533 = vunpack.c.h.b16 %v438
    %v534 = vunpack.c.l.b16 %v439
    %v535 = vunpack.c.h.b16 %v439
    %v536 = vunpack.c.l.b16 %v440
    %v537 = vunpack.c.h.b16 %v440
    %v538 = vunpack.c.l.b16 %v441
    %v539 = vunpack.c.h.b16 %v441
    %v540 = vunpack.c.l.b16 %v442
    %v541 = vunpack.c.h.b16 %v442
    %v542 = vunpack.c.l.b16 %v443
    %v543 = vunpack.c.h.b16 %v443
    %v544 = vpack.c.b16 %v484, %v480
    %v545 = vpack.c.b16 %v485, %v481
    %v546 = vpack.c.b16 %v486, %v482
    %v547 = vpack.c.b16 %v487, %v483
    %v548 = vpack.c.b16 %v492, %v488
    %v549 = vpack.c.b16 %v493, %v489
    %v550 = vpack.c.b16 %v494, %v490
    %v551 = vpack.c.b16 %v495, %v491
    %v552 = vpack.c.b16 %v500, %v496
    %v553 = vpack.c.b16 %v501, %v497
    %v554 = vpack.c.b16 %v502, %v498
    %v555 = vpack.c.b16 %v503, %v499
    %v556 = vpack.c.b16 %v508, %v504
    %v557 = vpack.c.b16 %v509, %v505
    %v558 = vpack.c.b16 %v510, %v506
    %v559 = vpack.c.b16 %v511, %v507
    %v560 = vpack.c.b16 %v516, %v512
    %v561 = vpack.c.b16 %v517, %v513
    %v562 = vpack.c.b16 %v518, %v514
    %v563 = vpack.c.b16 %v519, %v515
    %v564 = vpack.c.b16 %v524, %v520
    %v565 = vpack.c.b16 %v525, %v521
    %v566 = vpack.c.b16 %v526, %v522
    %v567 = vpack.c.b16 %v527, %v523
    %v568 = vpack.c.b16 %v532, %v528
    %v569 = vpack.c.b16 %v533, %v529
    %v570 = vpack.c.b16 %v534, %v530
    %v571 = vpack.c.b16 %v535, %v531
    %v572 = vpack.c.b16 %v540, %v536
    %v573 = vpack.c.b16 %v541, %v537
    %v574 = vpack.c.b16 %v542, %v538
    %v575 = vpack.c.b16 %v543, %v539
    %608 = vmatpush.bf16.msra.mxu0 %v572
    %609 = vmatpush.bf16.msra.mxu0 %v568
    %610 = vmatpush.bf16.msra.mxu0 %v564
    %611 = vmatpush.bf16.msra.mxu0 %v560
    %612 = vmatpush.bf16.msra.mxu0 %v556
    %613 = vmatpush.bf16.msra.mxu0 %v552
    %614 = vmatpush.bf16.msra.mxu0 %v548
    %615 = vmatpush.bf16.msra.mxu0 %v544
    %616 = vmatmul.bf16.gmra.mxu0 0
    %v617 = vpop.f32.mrf.mxu0
    %v618 = vadd.f32 0.0, %v617
    %v619 = vpop.f32.mrf.mxu0
    %620 = vdwg.mxu0
    %621 = vmatpush.bf16.msra.mxu0 %v573
    %622 = vmatpush.bf16.msra.mxu0 %v569
    %623 = vmatpush.bf16.msra.mxu0 %v565
    %624 = vmatpush.bf16.msra.mxu0 %v561
    %625 = vmatpush.bf16.msra.mxu0 %v557
    %626 = vmatpush.bf16.msra.mxu0 %v553
    %627 = vmatpush.bf16.msra.mxu0 %v549
    %628 = vmatpush.bf16.msra.mxu0 %v545
    %629 = vmatmul.bf16.gmra.mxu0 0
    %v630 = vpop.f32.mrf.mxu0
    %v631 = vadd.f32 0.0, %v630
    %v632 = vpop.f32.mrf.mxu0
    %633 = vdwg.mxu0
    %634 = vmatpush.bf16.msra.mxu0 %v574
    %635 = vmatpush.bf16.msra.mxu0 %v570
    %636 = vmatpush.bf16.msra.mxu0 %v566
    %637 = vmatpush.bf16.msra.mxu0 %v562
    %638 = vmatpush.bf16.msra.mxu0 %v558
    %639 = vmatpush.bf16.msra.mxu0 %v554
    %640 = vmatpush.bf16.msra.mxu0 %v550
    %641 = vmatpush.bf16.msra.mxu0 %v546
    %642 = vmatmul.bf16.gmra.mxu0 0
    %v643 = vpop.f32.mrf.mxu0
    %v644 = vadd.f32 0.0, %v643
    %v645 = vpop.f32.mrf.mxu0
    %646 = vdwg.mxu0
    %647 = vmatpush.bf16.msra.mxu0 %v575
    %648 = vmatpush.bf16.msra.mxu0 %v571
    %649 = vmatpush.bf16.msra.mxu0 %v567
    %650 = vmatpush.bf16.msra.mxu0 %v563
    %651 = vmatpush.bf16.msra.mxu0 %v559
    %652 = vmatpush.bf16.msra.mxu0 %v555
    %653 = vmatpush.bf16.msra.mxu0 %v551
    %654 = vmatpush.bf16.msra.mxu0 %v547
    %655 = vmatmul.bf16.gmra.mxu0 0
    %v656 = vpop.f32.mrf.mxu0
    %v657 = vadd.f32 0.0, %v656
    %v658 = vpop.f32.mrf.mxu0
    %659 = vdwg.mxu0
    %v660 = vadd.f32 %v444, %v618
    %v661 = vadd.f32 %v445, %v631
    %v662 = vadd.f32 %v446, %v644
    %v663 = vadd.f32 %v447, %v657
    %v664 = vxor.u32 %v660, 2147483648
    %v665 = vmul.f32 %v664, 1.442695
    %v666 = vpow.pop %v665
    %v667 = vadd.f32 %v666, 1.0
    %v668 = vrcp.pop %v667
    %v669 = vmul.f32 %v667, %v668
    %v670 = vsub.f32 1.0, %v669
    %v671 = vmul.f32 %v668, %v670
    %v672 = vadd.f32 %v668, %v671
    %vm673 = vweird.f32 %v667
    %vm674 = vweird.f32 %v668
    %vm675 = vmor %vm673, %vm674
    %v676 = vsel %vm675, %v668, %v672
    %v677 = vand.u32 2147483647, %v667
    %vm678 = vcmp.eq.f32.partialorder %v677, 8.507059e+37
    %v679 = vand.u32 %v667, 2147483648
    %v680 = vor.u32 1.1754944e-38, %v679
    %v681 = vsel %vm678, %v680, %v676
    %v682 = vmul.f32 1.0, %v681
    %v683 = vxor.u32 %v661, 2147483648
    %v684 = vmul.f32 %v683, 1.442695
    %v685 = vpow.pop %v684
    %v686 = vadd.f32 %v685, 1.0
    %v687 = vrcp.pop %v686
    %v688 = vmul.f32 %v686, %v687
    %v689 = vsub.f32 1.0, %v688
    %v690 = vmul.f32 %v687, %v689
    %v691 = vadd.f32 %v687, %v690
    %vm692 = vweird.f32 %v686
    %vm693 = vweird.f32 %v687
    %vm694 = vmor %vm692, %vm693
    %v695 = vsel %vm694, %v687, %v691
    %v696 = vand.u32 2147483647, %v686
    %vm697 = vcmp.eq.f32.partialorder %v696, 8.507059e+37
    %v698 = vand.u32 %v686, 2147483648
    %v699 = vor.u32 1.1754944e-38, %v698
    %v700 = vsel %vm697, %v699, %v695
    %v701 = vmul.f32 1.0, %v700
    %v702 = vtanh.pop %v662
    %v703 = vxor.u32 %v663, 2147483648
    %v704 = vmul.f32 %v703, 1.442695
    %v705 = vpow.pop %v704
    %v706 = vadd.f32 %v705, 1.0
    %v707 = vrcp.pop %v706
    %v708 = vmul.f32 %v706, %v707
    %v709 = vsub.f32 1.0, %v708
    %v710 = vmul.f32 %v707, %v709
    %v711 = vadd.f32 %v707, %v710
    %vm712 = vweird.f32 %v706
    %vm713 = vweird.f32 %v707
    %vm714 = vmor %vm712, %vm713
    %v715 = vsel %vm714, %v707, %v711
    %v716 = vand.u32 2147483647, %v706
    %vm717 = vcmp.eq.f32.partialorder %v716, 8.507059e+37
    %v718 = vand.u32 %v706, 2147483648
    %v719 = vor.u32 1.1754944e-38, %v718
    %v720 = vsel %vm717, %v719, %v715
    %v721 = vmul.f32 1.0, %v720
    %v722 = vmul.f32 %v701, 0.0
    %v723 = vmul.f32 %v682, %v702
    %v724 = vadd.f32 %v722, %v723
    %v725 = vtanh.pop %v724
    %v726 = vmul.f32 %v721, %v725
    %727 = vst [vmem:[%s4] sm:$0xff] %v726
    %v728 = vpack.c.bf16 %v726, %v726
    %s729 = scalar_lea.vmem [#allocation2], 32
    %v730 = vld [vmem:[%s729] sm:$0xff]
    %v731 = vld [vmem:[%s729 + $0x8] sm:$0xff]
    %v732 = vld [vmem:[%s729 + $0x10] sm:$0xff]
    %v733 = vld [vmem:[%s729 + $0x18] sm:$0xff]
    %734 = vmatpush.bf16.msra.mxu0 %v572
    %735 = vmatpush.bf16.msra.mxu0 %v568
    %736 = vmatpush.bf16.msra.mxu0 %v564
    %737 = vmatpush.bf16.msra.mxu0 %v560
    %738 = vmatpush.bf16.msra.mxu0 %v556
    %739 = vmatpush.bf16.msra.mxu0 %v552
    %740 = vmatpush.bf16.msra.mxu0 %v548
    %741 = vmatpush.bf16.msra.mxu0 %v544
    %742 = vmatmul.bf16.gmra.mxu0 %v728
    %v743 = vpop.f32.mrf.mxu0
    %v744 = vadd.f32 0.0, %v743
    %v745 = vpop.f32.mrf.mxu0
    %746 = vdwg.mxu0
    %747 = vmatpush.bf16.msra.mxu0 %v573
    %748 = vmatpush.bf16.msra.mxu0 %v569
    %749 = vmatpush.bf16.msra.mxu0 %v565
    %750 = vmatpush.bf16.msra.mxu0 %v561
    %751 = vmatpush.bf16.msra.mxu0 %v557
    %752 = vmatpush.bf16.msra.mxu0 %v553
    %753 = vmatpush.bf16.msra.mxu0 %v549
    %754 = vmatpush.bf16.msra.mxu0 %v545
    %755 = vmatmul.bf16.gmra.mxu0 %v728
    %v756 = vpop.f32.mrf.mxu0
    %v757 = vadd.f32 0.0, %v756
    %v758 = vpop.f32.mrf.mxu0
    %759 = vdwg.mxu0
    %760 = vmatpush.bf16.msra.mxu0 %v574
    %761 = vmatpush.bf16.msra.mxu0 %v570
    %762 = vmatpush.bf16.msra.mxu0 %v566
    %763 = vmatpush.bf16.msra.mxu0 %v562
    %764 = vmatpush.bf16.msra.mxu0 %v558
    %765 = vmatpush.bf16.msra.mxu0 %v554
    %766 = vmatpush.bf16.msra.mxu0 %v550
    %767 = vmatpush.bf16.msra.mxu0 %v546
    %768 = vmatmul.bf16.gmra.mxu0 %v728
    %v769 = vpop.f32.mrf.mxu0
    %v770 = vadd.f32 0.0, %v769
    %v771 = vpop.f32.mrf.mxu0
    %772 = vdwg.mxu0
    %773 = vmatpush.bf16.msra.mxu0 %v575
    %774 = vmatpush.bf16.msra.mxu0 %v571
    %775 = vmatpush.bf16.msra.mxu0 %v567
    %776 = vmatpush.bf16.msra.mxu0 %v563
    %777 = vmatpush.bf16.msra.mxu0 %v559
    %778 = vmatpush.bf16.msra.mxu0 %v555
    %779 = vmatpush.bf16.msra.mxu0 %v551
    %780 = vmatpush.bf16.msra.mxu0 %v547
    %781 = vmatmul.bf16.gmra.mxu0 %v728
    %v782 = vpop.f32.mrf.mxu0
    %v783 = vadd.f32 0.0, %v782
    %v784 = vpop.f32.mrf.mxu0
    %785 = vdwg.mxu0
    %v786 = vadd.f32 %v730, %v744
    %v787 = vadd.f32 %v731, %v757
    %v788 = vadd.f32 %v732, %v770
    %v789 = vadd.f32 %v733, %v783
    %v790 = vxor.u32 %v786, 2147483648
    %v791 = vmul.f32 %v790, 1.442695
    %v792 = vpow.pop %v791
    %v793 = vadd.f32 %v792, 1.0
    %v794 = vrcp.pop %v793
    %v795 = vmul.f32 %v793, %v794
    %v796 = vsub.f32 1.0, %v795
    %v797 = vmul.f32 %v794, %v796
    %v798 = vadd.f32 %v794, %v797
    %vm799 = vweird.f32 %v793
    %vm800 = vweird.f32 %v794
    %vm801 = vmor %vm799, %vm800
    %v802 = vsel %vm801, %v794, %v798
    %v803 = vand.u32 2147483647, %v793
    %vm804 = vcmp.eq.f32.partialorder %v803, 8.507059e+37
    %v805 = vand.u32 %v793, 2147483648
    %v806 = vor.u32 1.1754944e-38, %v805
    %v807 = vsel %vm804, %v806, %v802
    %v808 = vmul.f32 1.0, %v807
    %v809 = vxor.u32 %v787, 2147483648
    %v810 = vmul.f32 %v809, 1.442695
    %v811 = vpow.pop %v810
    %v812 = vadd.f32 %v811, 1.0
    %v813 = vrcp.pop %v812
    %v814 = vmul.f32 %v812, %v813
    %v815 = vsub.f32 1.0, %v814
    %v816 = vmul.f32 %v813, %v815
    %v817 = vadd.f32 %v813, %v816
    %vm818 = vweird.f32 %v812
    %vm819 = vweird.f32 %v813
    %vm820 = vmor %vm818, %vm819
    %v821 = vsel %vm820, %v813, %v817
    %v822 = vand.u32 2147483647, %v812
    %vm823 = vcmp.eq.f32.partialorder %v822, 8.507059e+37
    %v824 = vand.u32 %v812, 2147483648
    %v825 = vor.u32 1.1754944e-38, %v824
    %v826 = vsel %vm823, %v825, %v821
    %v827 = vmul.f32 1.0, %v826
    %v828 = vtanh.pop %v788
    %v829 = vxor.u32 %v789, 2147483648
    %v830 = vmul.f32 %v829, 1.442695
    %v831 = vpow.pop %v830
    %v832 = vadd.f32 %v831, 1.0
    %v833 = vrcp.pop %v832
    %v834 = vmul.f32 %v832, %v833
    %v835 = vsub.f32 1.0, %v834
    %v836 = vmul.f32 %v833, %v835
    %v837 = vadd.f32 %v833, %v836
    %vm838 = vweird.f32 %v832
    %vm839 = vweird.f32 %v833
    %vm840 = vmor %vm838, %vm839
    %v841 = vsel %vm840, %v833, %v837
    %v842 = vand.u32 2147483647, %v832
    %vm843 = vcmp.eq.f32.partialorder %v842, 8.507059e+37
    %v844 = vand.u32 %v832, 2147483648
    %v845 = vor.u32 1.1754944e-38, %v844
    %v846 = vsel %vm843, %v845, %v841
    %v847 = vmul.f32 1.0, %v846
    %v848 = vmul.f32 %v827, %v724
    %v849 = vmul.f32 %v808, %v828
    %v850 = vadd.f32 %v848, %v849
    %v851 = vtanh.pop %v850
    %v852 = vmul.f32 %v847, %v851
    %s853 = scalar_lea.vmem %s4, 8
    %854 = vst [vmem:[%s853] sm:$0xff] %v852
    %v855 = vpack.c.bf16 %v852, %v852
    %s856 = scalar_lea.vmem [#allocation2], 64
    %v857 = vld [vmem:[%s856] sm:$0xff]
    %v858 = vld [vmem:[%s856 + $0x8] sm:$0xff]
    %v859 = vld [vmem:[%s856 + $0x10] sm:$0xff]
    %v860 = vld [vmem:[%s856 + $0x18] sm:$0xff]
    %861 = vmatpush.bf16.msra.mxu0 %v572
    %862 = vmatpush.bf16.msra.mxu0 %v568
    %863 = vmatpush.bf16.msra.mxu0 %v564
    %864 = vmatpush.bf16.msra.mxu0 %v560
    %865 = vmatpush.bf16.msra.mxu0 %v556
    %866 = vmatpush.bf16.msra.mxu0 %v552
    %867 = vmatpush.bf16.msra.mxu0 %v548
    %868 = vmatpush.bf16.msra.mxu0 %v544
    %869 = vmatmul.bf16.gmra.mxu0 %v855
    %v870 = vpop.f32.mrf.mxu0
    %v871 = vadd.f32 0.0, %v870
    %v872 = vpop.f32.mrf.mxu0
    %873 = vdwg.mxu0
    %874 = vmatpush.bf16.msra.mxu0 %v573
    %875 = vmatpush.bf16.msra.mxu0 %v569
    %876 = vmatpush.bf16.msra.mxu0 %v565
    %877 = vmatpush.bf16.msra.mxu0 %v561
    %878 = vmatpush.bf16.msra.mxu0 %v557
    %879 = vmatpush.bf16.msra.mxu0 %v553
    %880 = vmatpush.bf16.msra.mxu0 %v549
    %881 = vmatpush.bf16.msra.mxu0 %v545
    %882 = vmatmul.bf16.gmra.mxu0 %v855
    %v883 = vpop.f32.mrf.mxu0
    %v884 = vadd.f32 0.0, %v883
    %v885 = vpop.f32.mrf.mxu0
    %886 = vdwg.mxu0
    %887 = vmatpush.bf16.msra.mxu0 %v574
    %888 = vmatpush.bf16.msra.mxu0 %v570
    %889 = vmatpush.bf16.msra.mxu0 %v566
    %890 = vmatpush.bf16.msra.mxu0 %v562
    %891 = vmatpush.bf16.msra.mxu0 %v558
    %892 = vmatpush.bf16.msra.mxu0 %v554
    %893 = vmatpush.bf16.msra.mxu0 %v550
    %894 = vmatpush.bf16.msra.mxu0 %v546
    %895 = vmatmul.bf16.gmra.mxu0 %v855
    %v896 = vpop.f32.mrf.mxu0
    %v897 = vadd.f32 0.0, %v896
    %v898 = vpop.f32.mrf.mxu0
    %899 = vdwg.mxu0
    %900 = vmatpush.bf16.msra.mxu0 %v575
    %901 = vmatpush.bf16.msra.mxu0 %v571
    %902 = vmatpush.bf16.msra.mxu0 %v567
    %903 = vmatpush.bf16.msra.mxu0 %v563
    %904 = vmatpush.bf16.msra.mxu0 %v559
    %905 = vmatpush.bf16.msra.mxu0 %v555
    %906 = vmatpush.bf16.msra.mxu0 %v551
    %907 = vmatpush.bf16.msra.mxu0 %v547
    %908 = vmatmul.bf16.gmra.mxu0 %v855
    %v909 = vpop.f32.mrf.mxu0
    %v910 = vadd.f32 0.0, %v909
    %v911 = vpop.f32.mrf.mxu0
    %912 = vdwg.mxu0
    %v913 = vadd.f32 %v857, %v871
    %v914 = vadd.f32 %v858, %v884
    %v915 = vadd.f32 %v859, %v897
    %v916 = vadd.f32 %v860, %v910
    %v917 = vxor.u32 %v913, 2147483648
    %v918 = vmul.f32 %v917, 1.442695
    %v919 = vpow.pop %v918
    %v920 = vadd.f32 %v919, 1.0
    %v921 = vrcp.pop %v920
    %v922 = vmul.f32 %v920, %v921
    %v923 = vsub.f32 1.0, %v922
    %v924 = vmul.f32 %v921, %v923
    %v925 = vadd.f32 %v921, %v924
    %vm926 = vweird.f32 %v920
    %vm927 = vweird.f32 %v921
    %vm928 = vmor %vm926, %vm927
    %v929 = vsel %vm928, %v921, %v925
    %v930 = vand.u32 2147483647, %v920
    %vm931 = vcmp.eq.f32.partialorder %v930, 8.507059e+37
    %v932 = vand.u32 %v920, 2147483648
    %v933 = vor.u32 1.1754944e-38, %v932
    %v934 = vsel %vm931, %v933, %v929
    %v935 = vmul.f32 1.0, %v934
    %v936 = vxor.u32 %v914, 2147483648
    %v937 = vmul.f32 %v936, 1.442695
    %v938 = vpow.pop %v937
    %v939 = vadd.f32 %v938, 1.0
    %v940 = vrcp.pop %v939
    %v941 = vmul.f32 %v939, %v940
    %v942 = vsub.f32 1.0, %v941
    %v943 = vmul.f32 %v940, %v942
    %v944 = vadd.f32 %v940, %v943
    %vm945 = vweird.f32 %v939
    %vm946 = vweird.f32 %v940
    %vm947 = vmor %vm945, %vm946
    %v948 = vsel %vm947, %v940, %v944
    %v949 = vand.u32 2147483647, %v939
    %vm950 = vcmp.eq.f32.partialorder %v949, 8.507059e+37
    %v951 = vand.u32 %v939, 2147483648
    %v952 = vor.u32 1.1754944e-38, %v951
    %v953 = vsel %vm950, %v952, %v948
    %v954 = vmul.f32 1.0, %v953
    %v955 = vtanh.pop %v915
    %v956 = vxor.u32 %v916, 2147483648
    %v957 = vmul.f32 %v956, 1.442695
    %v958 = vpow.pop %v957
    %v959 = vadd.f32 %v958, 1.0
    %v960 = vrcp.pop %v959
    %v961 = vmul.f32 %v959, %v960
    %v962 = vsub.f32 1.0, %v961
    %v963 = vmul.f32 %v960, %v962
    %v964 = vadd.f32 %v960, %v963
    %vm965 = vweird.f32 %v959
    %vm966 = vweird.f32 %v960
    %vm967 = vmor %vm965, %vm966
    %v968 = vsel %vm967, %v960, %v964
    %v969 = vand.u32 2147483647, %v959
    %vm970 = vcmp.eq.f32.partialorder %v969, 8.507059e+37
    %v971 = vand.u32 %v959, 2147483648
    %v972 = vor.u32 1.1754944e-38, %v971
    %v973 = vsel %vm970, %v972, %v968
    %v974 = vmul.f32 1.0, %v973
    %v975 = vmul.f32 %v954, %v850
    %v976 = vmul.f32 %v935, %v955
    %v977 = vadd.f32 %v975, %v976
    %v978 = vtanh.pop %v977
    %v979 = vmul.f32 %v974, %v978
    %s980 = scalar_lea.vmem %s4, 16
    %981 = vst [vmem:[%s980] sm:$0xff] %v979
    %v982 = vpack.c.bf16 %v979, %v979
    %s983 = scalar_lea.vmem [#allocation2], 96
    %v984 = vld [vmem:[%s983] sm:$0xff]
    %v985 = vld [vmem:[%s983 + $0x8] sm:$0xff]
    %v986 = vld [vmem:[%s983 + $0x10] sm:$0xff]
    %v987 = vld [vmem:[%s983 + $0x18] sm:$0xff]
    %988 = vmatpush.bf16.msra.mxu0 %v572
    %989 = vmatpush.bf16.msra.mxu0 %v568
    %990 = vmatpush.bf16.msra.mxu0 %v564
    %991 = vmatpush.bf16.msra.mxu0 %v560
    %992 = vmatpush.bf16.msra.mxu0 %v556
    %993 = vmatpush.bf16.msra.mxu0 %v552
    %994 = vmatpush.bf16.msra.mxu0 %v548
    %995 = vmatpush.bf16.msra.mxu0 %v544
    %996 = vmatmul.bf16.gmra.mxu0 %v982
    %v997 = vpop.f32.mrf.mxu0
    %v998 = vadd.f32 0.0, %v997
    %v999 = vpop.f32.mrf.mxu0
    %1000 = vdwg.mxu0
    %1001 = vmatpush.bf16.msra.mxu0 %v573
    %1002 = vmatpush.bf16.msra.mxu0 %v569
    %1003 = vmatpush.bf16.msra.mxu0 %v565
    %1004 = vmatpush.bf16.msra.mxu0 %v561
    %1005 = vmatpush.bf16.msra.mxu0 %v557
    %1006 = vmatpush.bf16.msra.mxu0 %v553
    %1007 = vmatpush.bf16.msra.mxu0 %v549
    %1008 = vmatpush.bf16.msra.mxu0 %v545
    %1009 = vmatmul.bf16.gmra.mxu0 %v982
    %v1010 = vpop.f32.mrf.mxu0
    %v1011 = vadd.f32 0.0, %v1010
    %v1012 = vpop.f32.mrf.mxu0
    %1013 = vdwg.mxu0
    %1014 = vmatpush.bf16.msra.mxu0 %v574
    %1015 = vmatpush.bf16.msra.mxu0 %v570
    %1016 = vmatpush.bf16.msra.mxu0 %v566
    %1017 = vmatpush.bf16.msra.mxu0 %v562
    %1018 = vmatpush.bf16.msra.mxu0 %v558
    %1019 = vmatpush.bf16.msra.mxu0 %v554
    %1020 = vmatpush.bf16.msra.mxu0 %v550
    %1021 = vmatpush.bf16.msra.mxu0 %v546
    %1022 = vmatmul.bf16.gmra.mxu0 %v982
    %v1023 = vpop.f32.mrf.mxu0
    %v1024 = vadd.f32 0.0, %v1023
    %v1025 = vpop.f32.mrf.mxu0
    %1026 = vdwg.mxu0
    %1027 = vmatpush.bf16.msra.mxu0 %v575
    %1028 = vmatpush.bf16.msra.mxu0 %v571
    %1029 = vmatpush.bf16.msra.mxu0 %v567
    %1030 = vmatpush.bf16.msra.mxu0 %v563
    %1031 = vmatpush.bf16.msra.mxu0 %v559
    %1032 = vmatpush.bf16.msra.mxu0 %v555
    %1033 = vmatpush.bf16.msra.mxu0 %v551
    %1034 = vmatpush.bf16.msra.mxu0 %v547
    %1035 = vmatmul.bf16.gmra.mxu0 %v982
    %v1036 = vpop.f32.mrf.mxu0
    %v1037 = vadd.f32 0.0, %v1036
    %v1038 = vpop.f32.mrf.mxu0
    %1039 = vdwg.mxu0
    %v1040 = vadd.f32 %v984, %v998
    %v1041 = vadd.f32 %v985, %v1011
    %v1042 = vadd.f32 %v986, %v1024
    %v1043 = vadd.f32 %v987, %v1037
    %v1044 = vxor.u32 %v1040, 2147483648
    %v1045 = vmul.f32 %v1044, 1.442695
    %v1046 = vpow.pop %v1045
    %v1047 = vadd.f32 %v1046, 1.0
    %v1048 = vrcp.pop %v1047
    %v1049 = vmul.f32 %v1047, %v1048
    %v1050 = vsub.f32 1.0, %v1049
    %v1051 = vmul.f32 %v1048, %v1050
    %v1052 = vadd.f32 %v1048, %v1051
    %vm1053 = vweird.f32 %v1047
    %vm1054 = vweird.f32 %v1048
    %vm1055 = vmor %vm1053, %vm1054
    %v1056 = vsel %vm1055, %v1048, %v1052
    %v1057 = vand.u32 2147483647, %v1047
    %vm1058 = vcmp.eq.f32.partialorder %v1057, 8.507059e+37
    %v1059 = vand.u32 %v1047, 2147483648
    %v1060 = vor.u32 1.1754944e-38, %v1059
    %v1061 = vsel %vm1058, %v1060, %v1056
    %v1062 = vmul.f32 1.0, %v1061
    %v1063 = vxor.u32 %v1041, 2147483648
    %v1064 = vmul.f32 %v1063, 1.442695
    %v1065 = vpow.pop %v1064
    %v1066 = vadd.f32 %v1065, 1.0
    %v1067 = vrcp.pop %v1066
    %v1068 = vmul.f32 %v1066, %v1067
    %v1069 = vsub.f32 1.0, %v1068
    %v1070 = vmul.f32 %v1067, %v1069
    %v1071 = vadd.f32 %v1067, %v1070
    %vm1072 = vweird.f32 %v1066
    %vm1073 = vweird.f32 %v1067
    %vm1074 = vmor %vm1072, %vm1073
    %v1075 = vsel %vm1074, %v1067, %v1071
    %v1076 = vand.u32 2147483647, %v1066
    %vm1077 = vcmp.eq.f32.partialorder %v1076, 8.507059e+37
    %v1078 = vand.u32 %v1066, 2147483648
    %v1079 = vor.u32 1.1754944e-38, %v1078
    %v1080 = vsel %vm1077, %v1079, %v1075
    %v1081 = vmul.f32 1.0, %v1080
    %v1082 = vtanh.pop %v1042
    %v1083 = vxor.u32 %v1043, 2147483648
    %v1084 = vmul.f32 %v1083, 1.442695
    %v1085 = vpow.pop %v1084
    %v1086 = vadd.f32 %v1085, 1.0
    %v1087 = vrcp.pop %v1086
    %v1088 = vmul.f32 %v1086, %v1087
    %v1089 = vsub.f32 1.0, %v1088
    %v1090 = vmul.f32 %v1087, %v1089
    %v1091 = vadd.f32 %v1087, %v1090
    %vm1092 = vweird.f32 %v1086
    %vm1093 = vweird.f32 %v1087
    %vm1094 = vmor %vm1092, %vm1093
    %v1095 = vsel %vm1094, %v1087, %v1091
    %v1096 = vand.u32 2147483647, %v1086
    %vm1097 = vcmp.eq.f32.partialorder %v1096, 8.507059e+37
    %v1098 = vand.u32 %v1086, 2147483648
    %v1099 = vor.u32 1.1754944e-38, %v1098
    %v1100 = vsel %vm1097, %v1099, %v1095
    %v1101 = vmul.f32 1.0, %v1100
    %v1102 = vmul.f32 %v1081, %v977
    %v1103 = vmul.f32 %v1062, %v1082
    %v1104 = vadd.f32 %v1102, %v1103
    %v1105 = vtanh.pop %v1104
    %v1106 = vmul.f32 %v1101, %v1105
    %s1107 = scalar_lea.vmem %s4, 24
    %1108 = vst [vmem:[%s1107] sm:$0xff] %v1106
    %v1109 = vpack.c.bf16 %v1106, %v1106
    %s1110 = scalar_lea.vmem [#allocation2], 128
    %v1111 = vld [vmem:[%s1110] sm:$0xff]
    %v1112 = vld [vmem:[%s1110 + $0x8] sm:$0xff]
    %v1113 = vld [vmem:[%s1110 + $0x10] sm:$0xff]
    %v1114 = vld [vmem:[%s1110 + $0x18] sm:$0xff]
    %1115 = vmatpush.bf16.msra.mxu0 %v572
    %1116 = vmatpush.bf16.msra.mxu0 %v568
    %1117 = vmatpush.bf16.msra.mxu0 %v564
    %1118 = vmatpush.bf16.msra.mxu0 %v560
    %1119 = vmatpush.bf16.msra.mxu0 %v556
    %1120 = vmatpush.bf16.msra.mxu0 %v552
    %1121 = vmatpush.bf16.msra.mxu0 %v548
    %1122 = vmatpush.bf16.msra.mxu0 %v544
    %1123 = vmatmul.bf16.gmra.mxu0 %v1109
    %v1124 = vpop.f32.mrf.mxu0
    %v1125 = vadd.f32 0.0, %v1124
    %v1126 = vpop.f32.mrf.mxu0
    %1127 = vdwg.mxu0
    %1128 = vmatpush.bf16.msra.mxu0 %v573
    %1129 = vmatpush.bf16.msra.mxu0 %v569
    %1130 = vmatpush.bf16.msra.mxu0 %v565
    %1131 = vmatpush.bf16.msra.mxu0 %v561
    %1132 = vmatpush.bf16.msra.mxu0 %v557
    %1133 = vmatpush.bf16.msra.mxu0 %v553
    %1134 = vmatpush.bf16.msra.mxu0 %v549
    %1135 = vmatpush.bf16.msra.mxu0 %v545
    %1136 = vmatmul.bf16.gmra.mxu0 %v1109
    %v1137 = vpop.f32.mrf.mxu0
    %v1138 = vadd.f32 0.0, %v1137
    %v1139 = vpop.f32.mrf.mxu0
    %1140 = vdwg.mxu0
    %1141 = vmatpush.bf16.msra.mxu0 %v574
    %1142 = vmatpush.bf16.msra.mxu0 %v570
    %1143 = vmatpush.bf16.msra.mxu0 %v566
    %1144 = vmatpush.bf16.msra.mxu0 %v562
    %1145 = vmatpush.bf16.msra.mxu0 %v558
    %1146 = vmatpush.bf16.msra.mxu0 %v554
    %1147 = vmatpush.bf16.msra.mxu0 %v550
    %1148 = vmatpush.bf16.msra.mxu0 %v546
    %1149 = vmatmul.bf16.gmra.mxu0 %v1109
    %v1150 = vpop.f32.mrf.mxu0
    %v1151 = vadd.f32 0.0, %v1150
    %v1152 = vpop.f32.mrf.mxu0
    %1153 = vdwg.mxu0
    %1154 = vmatpush.bf16.msra.mxu0 %v575
    %1155 = vmatpush.bf16.msra.mxu0 %v571
    %1156 = vmatpush.bf16.msra.mxu0 %v567
    %1157 = vmatpush.bf16.msra.mxu0 %v563
    %1158 = vmatpush.bf16.msra.mxu0 %v559
    %1159 = vmatpush.bf16.msra.mxu0 %v555
    %1160 = vmatpush.bf16.msra.mxu0 %v551
    %1161 = vmatpush.bf16.msra.mxu0 %v547
    %1162 = vmatmul.bf16.gmra.mxu0 %v1109
    %v1163 = vpop.f32.mrf.mxu0
    %v1164 = vadd.f32 0.0, %v1163
    %v1165 = vpop.f32.mrf.mxu0
    %1166 = vdwg.mxu0
    %v1167 = vadd.f32 %v1111, %v1125
    %v1168 = vadd.f32 %v1112, %v1138
    %v1169 = vadd.f32 %v1113, %v1151
    %v1170 = vadd.f32 %v1114, %v1164
    %v1171 = vxor.u32 %v1167, 2147483648
    %v1172 = vmul.f32 %v1171, 1.442695
    %v1173 = vpow.pop %v1172
    %v1174 = vadd.f32 %v1173, 1.0
    %v1175 = vrcp.pop %v1174
    %v1176 = vmul.f32 %v1174, %v1175
    %v1177 = vsub.f32 1.0, %v1176
    %v1178 = vmul.f32 %v1175, %v1177
    %v1179 = vadd.f32 %v1175, %v1178
    %vm1180 = vweird.f32 %v1174
    %vm1181 = vweird.f32 %v1175
    %vm1182 = vmor %vm1180, %vm1181
    %v1183 = vsel %vm1182, %v1175, %v1179
    %v1184 = vand.u32 2147483647, %v1174
    %vm1185 = vcmp.eq.f32.partialorder %v1184, 8.507059e+37
    %v1186 = vand.u32 %v1174, 2147483648
    %v1187 = vor.u32 1.1754944e-38, %v1186
    %v1188 = vsel %vm1185, %v1187, %v1183
    %v1189 = vmul.f32 1.0, %v1188
    %v1190 = vxor.u32 %v1168, 2147483648
    %v1191 = vmul.f32 %v1190, 1.442695
    %v1192 = vpow.pop %v1191
    %v1193 = vadd.f32 %v1192, 1.0
    %v1194 = vrcp.pop %v1193
    %v1195 = vmul.f32 %v1193, %v1194
    %v1196 = vsub.f32 1.0, %v1195
    %v1197 = vmul.f32 %v1194, %v1196
    %v1198 = vadd.f32 %v1194, %v1197
    %vm1199 = vweird.f32 %v1193
    %vm1200 = vweird.f32 %v1194
    %vm1201 = vmor %vm1199, %vm1200
    %v1202 = vsel %vm1201, %v1194, %v1198
    %v1203 = vand.u32 2147483647, %v1193
    %vm1204 = vcmp.eq.f32.partialorder %v1203, 8.507059e+37
    %v1205 = vand.u32 %v1193, 2147483648
    %v1206 = vor.u32 1.1754944e-38, %v1205
    %v1207 = vsel %vm1204, %v1206, %v1202
    %v1208 = vmul.f32 1.0, %v1207
    %v1209 = vtanh.pop %v1169
    %v1210 = vxor.u32 %v1170, 2147483648
    %v1211 = vmul.f32 %v1210, 1.442695
    %v1212 = vpow.pop %v1211
    %v1213 = vadd.f32 %v1212, 1.0
    %v1214 = vrcp.pop %v1213
    %v1215 = vmul.f32 %v1213, %v1214
    %v1216 = vsub.f32 1.0, %v1215
    %v1217 = vmul.f32 %v1214, %v1216
    %v1218 = vadd.f32 %v1214, %v1217
    %vm1219 = vweird.f32 %v1213
    %vm1220 = vweird.f32 %v1214
    %vm1221 = vmor %vm1219, %vm1220
    %v1222 = vsel %vm1221, %v1214, %v1218
    %v1223 = vand.u32 2147483647, %v1213
    %vm1224 = vcmp.eq.f32.partialorder %v1223, 8.507059e+37
    %v1225 = vand.u32 %v1213, 2147483648
    %v1226 = vor.u32 1.1754944e-38, %v1225
    %v1227 = vsel %vm1224, %v1226, %v1222
    %v1228 = vmul.f32 1.0, %v1227
    %v1229 = vmul.f32 %v1208, %v1104
    %v1230 = vmul.f32 %v1189, %v1209
    %v1231 = vadd.f32 %v1229, %v1230
    %v1232 = vtanh.pop %v1231
    %v1233 = vmul.f32 %v1228, %v1232
    %s1234 = scalar_lea.vmem %s4, 32
    %1235 = vst [vmem:[%s1234] sm:$0xff] %v1233
    %v1236 = vpack.c.bf16 %v1233, %v1233
    %s1237 = scalar_lea.vmem [#allocation2], 160
    %v1238 = vld [vmem:[%s1237] sm:$0xff]
    %v1239 = vld [vmem:[%s1237 + $0x8] sm:$0xff]
    %v1240 = vld [vmem:[%s1237 + $0x10] sm:$0xff]
    %v1241 = vld [vmem:[%s1237 + $0x18] sm:$0xff]
    %1242 = vmatpush.bf16.msra.mxu0 %v572
    %1243 = vmatpush.bf16.msra.mxu0 %v568
    %1244 = vmatpush.bf16.msra.mxu0 %v564
    %1245 = vmatpush.bf16.msra.mxu0 %v560
    %1246 = vmatpush.bf16.msra.mxu0 %v556
    %1247 = vmatpush.bf16.msra.mxu0 %v552
    %1248 = vmatpush.bf16.msra.mxu0 %v548
    %1249 = vmatpush.bf16.msra.mxu0 %v544
    %1250 = vmatmul.bf16.gmra.mxu0 %v1236
    %v1251 = vpop.f32.mrf.mxu0
    %v1252 = vadd.f32 0.0, %v1251
    %v1253 = vpop.f32.mrf.mxu0
    %1254 = vdwg.mxu0
    %1255 = vmatpush.bf16.msra.mxu0 %v573
    %1256 = vmatpush.bf16.msra.mxu0 %v569
    %1257 = vmatpush.bf16.msra.mxu0 %v565
    %1258 = vmatpush.bf16.msra.mxu0 %v561
    %1259 = vmatpush.bf16.msra.mxu0 %v557
    %1260 = vmatpush.bf16.msra.mxu0 %v553
    %1261 = vmatpush.bf16.msra.mxu0 %v549
    %1262 = vmatpush.bf16.msra.mxu0 %v545
    %1263 = vmatmul.bf16.gmra.mxu0 %v1236
    %v1264 = vpop.f32.mrf.mxu0
    %v1265 = vadd.f32 0.0, %v1264
    %v1266 = vpop.f32.mrf.mxu0
    %1267 = vdwg.mxu0
    %1268 = vmatpush.bf16.msra.mxu0 %v574
    %1269 = vmatpush.bf16.msra.mxu0 %v570
    %1270 = vmatpush.bf16.msra.mxu0 %v566
    %1271 = vmatpush.bf16.msra.mxu0 %v562
    %1272 = vmatpush.bf16.msra.mxu0 %v558
    %1273 = vmatpush.bf16.msra.mxu0 %v554
    %1274 = vmatpush.bf16.msra.mxu0 %v550
    %1275 = vmatpush.bf16.msra.mxu0 %v546
    %1276 = vmatmul.bf16.gmra.mxu0 %v1236
    %v1277 = vpop.f32.mrf.mxu0
    %v1278 = vadd.f32 0.0, %v1277
    %v1279 = vpop.f32.mrf.mxu0
    %1280 = vdwg.mxu0
    %1281 = vmatpush.bf16.msra.mxu0 %v575
    %1282 = vmatpush.bf16.msra.mxu0 %v571
    %1283 = vmatpush.bf16.msra.mxu0 %v567
    %1284 = vmatpush.bf16.msra.mxu0 %v563
    %1285 = vmatpush.bf16.msra.mxu0 %v559
    %1286 = vmatpush.bf16.msra.mxu0 %v555
    %1287 = vmatpush.bf16.msra.mxu0 %v551
    %1288 = vmatpush.bf16.msra.mxu0 %v547
    %1289 = vmatmul.bf16.gmra.mxu0 %v1236
    %v1290 = vpop.f32.mrf.mxu0
    %v1291 = vadd.f32 0.0, %v1290
    %v1292 = vpop.f32.mrf.mxu0
    %1293 = vdwg.mxu0
    %v1294 = vadd.f32 %v1238, %v1252
    %v1295 = vadd.f32 %v1239, %v1265
    %v1296 = vadd.f32 %v1240, %v1278
    %v1297 = vadd.f32 %v1241, %v1291
    %v1298 = vxor.u32 %v1294, 2147483648
    %v1299 = vmul.f32 %v1298, 1.442695
    %v1300 = vpow.pop %v1299
    %v1301 = vadd.f32 %v1300, 1.0
    %v1302 = vrcp.pop %v1301
    %v1303 = vmul.f32 %v1301, %v1302
    %v1304 = vsub.f32 1.0, %v1303
    %v1305 = vmul.f32 %v1302, %v1304
    %v1306 = vadd.f32 %v1302, %v1305
    %vm1307 = vweird.f32 %v1301
    %vm1308 = vweird.f32 %v1302
    %vm1309 = vmor %vm1307, %vm1308
    %v1310 = vsel %vm1309, %v1302, %v1306
    %v1311 = vand.u32 2147483647, %v1301
    %vm1312 = vcmp.eq.f32.partialorder %v1311, 8.507059e+37
    %v1313 = vand.u32 %v1301, 2147483648
    %v1314 = vor.u32 1.1754944e-38, %v1313
    %v1315 = vsel %vm1312, %v1314, %v1310
    %v1316 = vmul.f32 1.0, %v1315
    %v1317 = vxor.u32 %v1295, 2147483648
    %v1318 = vmul.f32 %v1317, 1.442695
    %v1319 = vpow.pop %v1318
    %v1320 = vadd.f32 %v1319, 1.0
    %v1321 = vrcp.pop %v1320
    %v1322 = vmul.f32 %v1320, %v1321
    %v1323 = vsub.f32 1.0, %v1322
    %v1324 = vmul.f32 %v1321, %v1323
    %v1325 = vadd.f32 %v1321, %v1324
    %vm1326 = vweird.f32 %v1320
    %vm1327 = vweird.f32 %v1321
    %vm1328 = vmor %vm1326, %vm1327
    %v1329 = vsel %vm1328, %v1321, %v1325
    %v1330 = vand.u32 2147483647, %v1320
    %vm1331 = vcmp.eq.f32.partialorder %v1330, 8.507059e+37
    %v1332 = vand.u32 %v1320, 2147483648
    %v1333 = vor.u32 1.1754944e-38, %v1332
    %v1334 = vsel %vm1331, %v1333, %v1329
    %v1335 = vmul.f32 1.0, %v1334
    %v1336 = vtanh.pop %v1296
    %v1337 = vxor.u32 %v1297, 2147483648
    %v1338 = vmul.f32 %v1337, 1.442695
    %v1339 = vpow.pop %v1338
    %v1340 = vadd.f32 %v1339, 1.0
    %v1341 = vrcp.pop %v1340
    %v1342 = vmul.f32 %v1340, %v1341
    %v1343 = vsub.f32 1.0, %v1342
    %v1344 = vmul.f32 %v1341, %v1343
    %v1345 = vadd.f32 %v1341, %v1344
    %vm1346 = vweird.f32 %v1340
    %vm1347 = vweird.f32 %v1341
    %vm1348 = vmor %vm1346, %vm1347
    %v1349 = vsel %vm1348, %v1341, %v1345
    %v1350 = vand.u32 2147483647, %v1340
    %vm1351 = vcmp.eq.f32.partialorder %v1350, 8.507059e+37
    %v1352 = vand.u32 %v1340, 2147483648
    %v1353 = vor.u32 1.1754944e-38, %v1352
    %v1354 = vsel %vm1351, %v1353, %v1349
    %v1355 = vmul.f32 1.0, %v1354
    %v1356 = vmul.f32 %v1335, %v1231
    %v1357 = vmul.f32 %v1316, %v1336
    %v1358 = vadd.f32 %v1356, %v1357
    %v1359 = vtanh.pop %v1358
    %v1360 = vmul.f32 %v1355, %v1359
    %s1361 = scalar_lea.vmem %s4, 40
    %1362 = vst [vmem:[%s1361] sm:$0xff] %v1360
    %v1363 = vpack.c.bf16 %v1360, %v1360
    %s1364 = scalar_lea.vmem [#allocation2], 192
    %v1365 = vld [vmem:[%s1364] sm:$0xff]
    %v1366 = vld [vmem:[%s1364 + $0x8] sm:$0xff]
    %v1367 = vld [vmem:[%s1364 + $0x10] sm:$0xff]
    %v1368 = vld [vmem:[%s1364 + $0x18] sm:$0xff]
    %1369 = vmatpush.bf16.msra.mxu0 %v572
    %1370 = vmatpush.bf16.msra.mxu0 %v568
    %1371 = vmatpush.bf16.msra.mxu0 %v564
    %1372 = vmatpush.bf16.msra.mxu0 %v560
    %1373 = vmatpush.bf16.msra.mxu0 %v556
    %1374 = vmatpush.bf16.msra.mxu0 %v552
    %1375 = vmatpush.bf16.msra.mxu0 %v548
    %1376 = vmatpush.bf16.msra.mxu0 %v544
    %1377 = vmatmul.bf16.gmra.mxu0 %v1363
    %v1378 = vpop.f32.mrf.mxu0
    %v1379 = vadd.f32 0.0, %v1378
    %v1380 = vpop.f32.mrf.mxu0
    %1381 = vdwg.mxu0
    %1382 = vmatpush.bf16.msra.mxu0 %v573
    %1383 = vmatpush.bf16.msra.mxu0 %v569
    %1384 = vmatpush.bf16.msra.mxu0 %v565
    %1385 = vmatpush.bf16.msra.mxu0 %v561
    %1386 = vmatpush.bf16.msra.mxu0 %v557
    %1387 = vmatpush.bf16.msra.mxu0 %v553
    %1388 = vmatpush.bf16.msra.mxu0 %v549
    %1389 = vmatpush.bf16.msra.mxu0 %v545
    %1390 = vmatmul.bf16.gmra.mxu0 %v1363
    %v1391 = vpop.f32.mrf.mxu0
    %v1392 = vadd.f32 0.0, %v1391
    %v1393 = vpop.f32.mrf.mxu0
    %1394 = vdwg.mxu0
    %1395 = vmatpush.bf16.msra.mxu0 %v574
    %1396 = vmatpush.bf16.msra.mxu0 %v570
    %1397 = vmatpush.bf16.msra.mxu0 %v566
    %1398 = vmatpush.bf16.msra.mxu0 %v562
    %1399 = vmatpush.bf16.msra.mxu0 %v558
    %1400 = vmatpush.bf16.msra.mxu0 %v554
    %1401 = vmatpush.bf16.msra.mxu0 %v550
    %1402 = vmatpush.bf16.msra.mxu0 %v546
    %1403 = vmatmul.bf16.gmra.mxu0 %v1363
    %v1404 = vpop.f32.mrf.mxu0
    %v1405 = vadd.f32 0.0, %v1404
    %v1406 = vpop.f32.mrf.mxu0
    %1407 = vdwg.mxu0
    %1408 = vmatpush.bf16.msra.mxu0 %v575
    %1409 = vmatpush.bf16.msra.mxu0 %v571
    %1410 = vmatpush.bf16.msra.mxu0 %v567
    %1411 = vmatpush.bf16.msra.mxu0 %v563
    %1412 = vmatpush.bf16.msra.mxu0 %v559
    %1413 = vmatpush.bf16.msra.mxu0 %v555
    %1414 = vmatpush.bf16.msra.mxu0 %v551
    %1415 = vmatpush.bf16.msra.mxu0 %v547
    %1416 = vmatmul.bf16.gmra.mxu0 %v1363
    %v1417 = vpop.f32.mrf.mxu0
    %v1418 = vadd.f32 0.0, %v1417
    %v1419 = vpop.f32.mrf.mxu0
    %1420 = vdwg.mxu0
    %v1421 = vadd.f32 %v1365, %v1379
    %v1422 = vadd.f32 %v1366, %v1392
    %v1423 = vadd.f32 %v1367, %v1405
    %v1424 = vadd.f32 %v1368, %v1418
    %v1425 = vxor.u32 %v1421, 2147483648
    %v1426 = vmul.f32 %v1425, 1.442695
    %v1427 = vpow.pop %v1426
    %v1428 = vadd.f32 %v1427, 1.0
    %v1429 = vrcp.pop %v1428
    %v1430 = vmul.f32 %v1428, %v1429
    %v1431 = vsub.f32 1.0, %v1430
    %v1432 = vmul.f32 %v1429, %v1431
    %v1433 = vadd.f32 %v1429, %v1432
    %vm1434 = vweird.f32 %v1428
    %vm1435 = vweird.f32 %v1429
    %vm1436 = vmor %vm1434, %vm1435
    %v1437 = vsel %vm1436, %v1429, %v1433
    %v1438 = vand.u32 2147483647, %v1428
    %vm1439 = vcmp.eq.f32.partialorder %v1438, 8.507059e+37
    %v1440 = vand.u32 %v1428, 2147483648
    %v1441 = vor.u32 1.1754944e-38, %v1440
    %v1442 = vsel %vm1439, %v1441, %v1437
    %v1443 = vmul.f32 1.0, %v1442
    %v1444 = vxor.u32 %v1422, 2147483648
    %v1445 = vmul.f32 %v1444, 1.442695
    %v1446 = vpow.pop %v1445
    %v1447 = vadd.f32 %v1446, 1.0
    %v1448 = vrcp.pop %v1447
    %v1449 = vmul.f32 %v1447, %v1448
    %v1450 = vsub.f32 1.0, %v1449
    %v1451 = vmul.f32 %v1448, %v1450
    %v1452 = vadd.f32 %v1448, %v1451
    %vm1453 = vweird.f32 %v1447
    %vm1454 = vweird.f32 %v1448
    %vm1455 = vmor %vm1453, %vm1454
    %v1456 = vsel %vm1455, %v1448, %v1452
    %v1457 = vand.u32 2147483647, %v1447
    %vm1458 = vcmp.eq.f32.partialorder %v1457, 8.507059e+37
    %v1459 = vand.u32 %v1447, 2147483648
    %v1460 = vor.u32 1.1754944e-38, %v1459
    %v1461 = vsel %vm1458, %v1460, %v1456
    %v1462 = vmul.f32 1.0, %v1461
    %v1463 = vtanh.pop %v1423
    %v1464 = vxor.u32 %v1424, 2147483648
    %v1465 = vmul.f32 %v1464, 1.442695
    %v1466 = vpow.pop %v1465
    %v1467 = vadd.f32 %v1466, 1.0
    %v1468 = vrcp.pop %v1467
    %v1469 = vmul.f32 %v1467, %v1468
    %v1470 = vsub.f32 1.0, %v1469
    %v1471 = vmul.f32 %v1468, %v1470
    %v1472 = vadd.f32 %v1468, %v1471
    %vm1473 = vweird.f32 %v1467
    %vm1474 = vweird.f32 %v1468
    %vm1475 = vmor %vm1473, %vm1474
    %v1476 = vsel %vm1475, %v1468, %v1472
    %v1477 = vand.u32 2147483647, %v1467
    %vm1478 = vcmp.eq.f32.partialorder %v1477, 8.507059e+37
    %v1479 = vand.u32 %v1467, 2147483648
    %v1480 = vor.u32 1.1754944e-38, %v1479
    %v1481 = vsel %vm1478, %v1480, %v1476
    %v1482 = vmul.f32 1.0, %v1481
    %v1483 = vmul.f32 %v1462, %v1358
    %v1484 = vmul.f32 %v1443, %v1463
    %v1485 = vadd.f32 %v1483, %v1484
    %v1486 = vtanh.pop %v1485
    %v1487 = vmul.f32 %v1482, %v1486
    %s1488 = scalar_lea.vmem %s4, 48
    %1489 = vst [vmem:[%s1488] sm:$0xff] %v1487
    %v1490 = vpack.c.bf16 %v1487, %v1487
    %s1491 = scalar_lea.vmem [#allocation2], 224
    %v1492 = vld [vmem:[%s1491] sm:$0xff]
    %v1493 = vld [vmem:[%s1491 + $0x8] sm:$0xff]
    %v1494 = vld [vmem:[%s1491 + $0x10] sm:$0xff]
    %v1495 = vld [vmem:[%s1491 + $0x18] sm:$0xff]
    %1496 = vmatpush.bf16.msra.mxu0 %v572
    %1497 = vmatpush.bf16.msra.mxu0 %v568
    %1498 = vmatpush.bf16.msra.mxu0 %v564
    %1499 = vmatpush.bf16.msra.mxu0 %v560
    %1500 = vmatpush.bf16.msra.mxu0 %v556
    %1501 = vmatpush.bf16.msra.mxu0 %v552
    %1502 = vmatpush.bf16.msra.mxu0 %v548
    %1503 = vmatpush.bf16.msra.mxu0 %v544
    %1504 = vmatmul.bf16.gmra.mxu0 %v1490
    %v1505 = vpop.f32.mrf.mxu0
    %v1506 = vadd.f32 0.0, %v1505
    %v1507 = vpop.f32.mrf.mxu0
    %1508 = vdwg.mxu0
    %1509 = vmatpush.bf16.msra.mxu0 %v573
    %1510 = vmatpush.bf16.msra.mxu0 %v569
    %1511 = vmatpush.bf16.msra.mxu0 %v565
    %1512 = vmatpush.bf16.msra.mxu0 %v561
    %1513 = vmatpush.bf16.msra.mxu0 %v557
    %1514 = vmatpush.bf16.msra.mxu0 %v553
    %1515 = vmatpush.bf16.msra.mxu0 %v549
    %1516 = vmatpush.bf16.msra.mxu0 %v545
    %1517 = vmatmul.bf16.gmra.mxu0 %v1490
    %v1518 = vpop.f32.mrf.mxu0
    %v1519 = vadd.f32 0.0, %v1518
    %v1520 = vpop.f32.mrf.mxu0
    %1521 = vdwg.mxu0
    %1522 = vmatpush.bf16.msra.mxu0 %v574
    %1523 = vmatpush.bf16.msra.mxu0 %v570
    %1524 = vmatpush.bf16.msra.mxu0 %v566
    %1525 = vmatpush.bf16.msra.mxu0 %v562
    %1526 = vmatpush.bf16.msra.mxu0 %v558
    %1527 = vmatpush.bf16.msra.mxu0 %v554
    %1528 = vmatpush.bf16.msra.mxu0 %v550
    %1529 = vmatpush.bf16.msra.mxu0 %v546
    %1530 = vmatmul.bf16.gmra.mxu0 %v1490
    %v1531 = vpop.f32.mrf.mxu0
    %v1532 = vadd.f32 0.0, %v1531
    %v1533 = vpop.f32.mrf.mxu0
    %1534 = vdwg.mxu0
    %1535 = vmatpush.bf16.msra.mxu0 %v575
    %1536 = vmatpush.bf16.msra.mxu0 %v571
    %1537 = vmatpush.bf16.msra.mxu0 %v567
    %1538 = vmatpush.bf16.msra.mxu0 %v563
    %1539 = vmatpush.bf16.msra.mxu0 %v559
    %1540 = vmatpush.bf16.msra.mxu0 %v555
    %1541 = vmatpush.bf16.msra.mxu0 %v551
    %1542 = vmatpush.bf16.msra.mxu0 %v547
    %1543 = vmatmul.bf16.gmra.mxu0 %v1490
    %v1544 = vpop.f32.mrf.mxu0
    %v1545 = vadd.f32 0.0, %v1544
    %v1546 = vpop.f32.mrf.mxu0
    %1547 = vdwg.mxu0
    %v1548 = vadd.f32 %v1492, %v1506
    %v1549 = vadd.f32 %v1493, %v1519
    %v1550 = vadd.f32 %v1494, %v1532
    %v1551 = vadd.f32 %v1495, %v1545
    %v1552 = vxor.u32 %v1548, 2147483648
    %v1553 = vmul.f32 %v1552, 1.442695
    %v1554 = vpow.pop %v1553
    %v1555 = vadd.f32 %v1554, 1.0
    %v1556 = vrcp.pop %v1555
    %v1557 = vmul.f32 %v1555, %v1556
    %v1558 = vsub.f32 1.0, %v1557
    %v1559 = vmul.f32 %v1556, %v1558
    %v1560 = vadd.f32 %v1556, %v1559
    %vm1561 = vweird.f32 %v1555
    %vm1562 = vweird.f32 %v1556
    %vm1563 = vmor %vm1561, %vm1562
    %v1564 = vsel %vm1563, %v1556, %v1560
    %v1565 = vand.u32 2147483647, %v1555
    %vm1566 = vcmp.eq.f32.partialorder %v1565, 8.507059e+37
    %v1567 = vand.u32 %v1555, 2147483648
    %v1568 = vor.u32 1.1754944e-38, %v1567
    %v1569 = vsel %vm1566, %v1568, %v1564
    %v1570 = vmul.f32 1.0, %v1569
    %v1571 = vxor.u32 %v1549, 2147483648
    %v1572 = vmul.f32 %v1571, 1.442695
    %v1573 = vpow.pop %v1572
    %v1574 = vadd.f32 %v1573, 1.0
    %v1575 = vrcp.pop %v1574
    %v1576 = vmul.f32 %v1574, %v1575
    %v1577 = vsub.f32 1.0, %v1576
    %v1578 = vmul.f32 %v1575, %v1577
    %v1579 = vadd.f32 %v1575, %v1578
    %vm1580 = vweird.f32 %v1574
    %vm1581 = vweird.f32 %v1575
    %vm1582 = vmor %vm1580, %vm1581
    %v1583 = vsel %vm1582, %v1575, %v1579
    %v1584 = vand.u32 2147483647, %v1574
    %vm1585 = vcmp.eq.f32.partialorder %v1584, 8.507059e+37
    %v1586 = vand.u32 %v1574, 2147483648
    %v1587 = vor.u32 1.1754944e-38, %v1586
    %v1588 = vsel %vm1585, %v1587, %v1583
    %v1589 = vmul.f32 1.0, %v1588
    %v1590 = vtanh.pop %v1550
    %v1591 = vxor.u32 %v1551, 2147483648
    %v1592 = vmul.f32 %v1591, 1.442695
    %v1593 = vpow.pop %v1592
    %v1594 = vadd.f32 %v1593, 1.0
    %v1595 = vrcp.pop %v1594
    %v1596 = vmul.f32 %v1594, %v1595
    %v1597 = vsub.f32 1.0, %v1596
    %v1598 = vmul.f32 %v1595, %v1597
    %v1599 = vadd.f32 %v1595, %v1598
    %vm1600 = vweird.f32 %v1594
    %vm1601 = vweird.f32 %v1595
    %vm1602 = vmor %vm1600, %vm1601
    %v1603 = vsel %vm1602, %v1595, %v1599
    %v1604 = vand.u32 2147483647, %v1594
    %vm1605 = vcmp.eq.f32.partialorder %v1604, 8.507059e+37
    %v1606 = vand.u32 %v1594, 2147483648
    %v1607 = vor.u32 1.1754944e-38, %v1606
    %v1608 = vsel %vm1605, %v1607, %v1603
    %v1609 = vmul.f32 1.0, %v1608
    %v1610 = vmul.f32 %v1589, %v1485
    %v1611 = vmul.f32 %v1570, %v1590
    %v1612 = vadd.f32 %v1610, %v1611
    %v1613 = vtanh.pop %v1612
    %v1614 = vmul.f32 %v1609, %v1613
    %s1615 = scalar_lea.vmem %s4, 56
    %1616 = vst [vmem:[%s1615] sm:$0xff] %v1614
    %v1617 = vld [vmem:[%s4] sm:$0xff]
    %v1618 = vld [vmem:[%s4 + $0x8] sm:$0xff]
    %v1619 = vld [vmem:[%s4 + $0x10] sm:$0xff]
    %v1620 = vld [vmem:[%s4 + $0x18] sm:$0xff]
    %v1621 = vld [vmem:[%s4 + $0x20] sm:$0xff]
    %v1622 = vld [vmem:[%s4 + $0x28] sm:$0xff]
    %v1623 = vld [vmem:[%s4 + $0x30] sm:$0xff]
    %v1624 = vld [vmem:[%s4 + $0x38] sm:$0xff]
    %v1625 = vpack.c.bf16 %v1618, %v1617
    %v1626 = vpack.c.bf16 %v1620, %v1619
    %v1627 = vpack.c.bf16 %v1622, %v1621
    %v1628 = vpack.c.bf16 %v1624, %v1623
    %s1629 = scalar_lea.vmem [#allocation3], 256
    %v1630 = vld [vmem:[%s1629] sm:$0xff]
    %v1631 = vld [vmem:[%s1629 + $0x8] sm:$0xff]
    %v1632 = vld [vmem:[%s1629 + $0x10] sm:$0xff]
    %v1633 = vld [vmem:[%s1629 + $0x18] sm:$0xff]
    %v1634 = vld [vmem:[%s1629 + $0x20] sm:$0xff]
    %v1635 = vld [vmem:[%s1629 + $0x28] sm:$0xff]
    %v1636 = vld [vmem:[%s1629 + $0x30] sm:$0xff]
    %v1637 = vld [vmem:[%s1629 + $0x38] sm:$0xff]
    %v1638 = vld [vmem:[%s1629 + $0x40] sm:$0xff]
    %v1639 = vld [vmem:[%s1629 + $0x48] sm:$0xff]
    %v1640 = vld [vmem:[%s1629 + $0x50] sm:$0xff]
    %v1641 = vld [vmem:[%s1629 + $0x58] sm:$0xff]
    %v1642 = vld [vmem:[%s1629 + $0x60] sm:$0xff]
    %v1643 = vld [vmem:[%s1629 + $0x68] sm:$0xff]
    %v1644 = vld [vmem:[%s1629 + $0x70] sm:$0xff]
    %v1645 = vld [vmem:[%s1629 + $0x78] sm:$0xff]
    %v1646 = vld [vmem:[%s1629 + $0x80] sm:$0xff]
    %v1647 = vld [vmem:[%s1629 + $0x88] sm:$0xff]
    %v1648 = vld [vmem:[%s1629 + $0x90] sm:$0xff]
    %v1649 = vld [vmem:[%s1629 + $0x98] sm:$0xff]
    %v1650 = vld [vmem:[%s1629 + $0xa0] sm:$0xff]
    %v1651 = vld [vmem:[%s1629 + $0xa8] sm:$0xff]
    %v1652 = vld [vmem:[%s1629 + $0xb0] sm:$0xff]
    %v1653 = vld [vmem:[%s1629 + $0xb8] sm:$0xff]
    %v1654 = vld [vmem:[%s1629 + $0xc0] sm:$0xff]
    %v1655 = vld [vmem:[%s1629 + $0xc8] sm:$0xff]
    %v1656 = vld [vmem:[%s1629 + $0xd0] sm:$0xff]
    %v1657 = vld [vmem:[%s1629 + $0xd8] sm:$0xff]
    %v1658 = vld [vmem:[%s1629 + $0xe0] sm:$0xff]
    %v1659 = vld [vmem:[%s1629 + $0xe8] sm:$0xff]
    %v1660 = vld [vmem:[%s1629 + $0xf0] sm:$0xff]
    %v1661 = vld [vmem:[%s1629 + $0xf8] sm:$0xff]
    %s1662 = scalar_lea.vmem %s3, 4
    %v1663 = vld [vmem:[%s1662] sm:$0xf]
    %v1665 = vperm.slane %v1663, 0
    %v1666 = vperm.slane %v1663, 1
    %v1667 = vperm.slane %v1663, 2
    %v1668 = vperm.slane %v1663, 3
    %v1705 = vunpack.c.l.b16 %v1630
    %v1706 = vunpack.c.h.b16 %v1630
    %v1707 = vunpack.c.l.b16 %v1631
    %v1708 = vunpack.c.h.b16 %v1631
    %v1709 = vunpack.c.l.b16 %v1632
    %v1710 = vunpack.c.h.b16 %v1632
    %v1711 = vunpack.c.l.b16 %v1633
    %v1712 = vunpack.c.h.b16 %v1633
    %v1713 = vunpack.c.l.b16 %v1634
    %v1714 = vunpack.c.h.b16 %v1634
    %v1715 = vunpack.c.l.b16 %v1635
    %v1716 = vunpack.c.h.b16 %v1635
    %v1717 = vunpack.c.l.b16 %v1636
    %v1718 = vunpack.c.h.b16 %v1636
    %v1719 = vunpack.c.l.b16 %v1637
    %v1720 = vunpack.c.h.b16 %v1637
    %v1721 = vunpack.c.l.b16 %v1638
    %v1722 = vunpack.c.h.b16 %v1638
    %v1723 = vunpack.c.l.b16 %v1639
    %v1724 = vunpack.c.h.b16 %v1639
    %v1725 = vunpack.c.l.b16 %v1640
    %v1726 = vunpack.c.h.b16 %v1640
    %v1727 = vunpack.c.l.b16 %v1641
    %v1728 = vunpack.c.h.b16 %v1641
    %v1729 = vunpack.c.l.b16 %v1642
    %v1730 = vunpack.c.h.b16 %v1642
    %v1731 = vunpack.c.l.b16 %v1643
    %v1732 = vunpack.c.h.b16 %v1643
    %v1733 = vunpack.c.l.b16 %v1644
    %v1734 = vunpack.c.h.b16 %v1644
    %v1735 = vunpack.c.l.b16 %v1645
    %v1736 = vunpack.c.h.b16 %v1645
    %v1737 = vunpack.c.l.b16 %v1646
    %v1738 = vunpack.c.h.b16 %v1646
    %v1739 = vunpack.c.l.b16 %v1647
    %v1740 = vunpack.c.h.b16 %v1647
    %v1741 = vunpack.c.l.b16 %v1648
    %v1742 = vunpack.c.h.b16 %v1648
    %v1743 = vunpack.c.l.b16 %v1649
    %v1744 = vunpack.c.h.b16 %v1649
    %v1745 = vunpack.c.l.b16 %v1650
    %v1746 = vunpack.c.h.b16 %v1650
    %v1747 = vunpack.c.l.b16 %v1651
    %v1748 = vunpack.c.h.b16 %v1651
    %v1749 = vunpack.c.l.b16 %v1652
    %v1750 = vunpack.c.h.b16 %v1652
    %v1751 = vunpack.c.l.b16 %v1653
    %v1752 = vunpack.c.h.b16 %v1653
    %v1753 = vunpack.c.l.b16 %v1654
    %v1754 = vunpack.c.h.b16 %v1654
    %v1755 = vunpack.c.l.b16 %v1655
    %v1756 = vunpack.c.h.b16 %v1655
    %v1757 = vunpack.c.l.b16 %v1656
    %v1758 = vunpack.c.h.b16 %v1656
    %v1759 = vunpack.c.l.b16 %v1657
    %v1760 = vunpack.c.h.b16 %v1657
    %v1761 = vunpack.c.l.b16 %v1658
    %v1762 = vunpack.c.h.b16 %v1658
    %v1763 = vunpack.c.l.b16 %v1659
    %v1764 = vunpack.c.h.b16 %v1659
    %v1765 = vunpack.c.l.b16 %v1660
    %v1766 = vunpack.c.h.b16 %v1660
    %v1767 = vunpack.c.l.b16 %v1661
    %v1768 = vunpack.c.h.b16 %v1661
    %v1769 = vpack.c.b16 %v1709, %v1705
    %v1770 = vpack.c.b16 %v1710, %v1706
    %v1771 = vpack.c.b16 %v1711, %v1707
    %v1772 = vpack.c.b16 %v1712, %v1708
    %v1773 = vpack.c.b16 %v1717, %v1713
    %v1774 = vpack.c.b16 %v1718, %v1714
    %v1775 = vpack.c.b16 %v1719, %v1715
    %v1776 = vpack.c.b16 %v1720, %v1716
    %v1777 = vpack.c.b16 %v1725, %v1721
    %v1778 = vpack.c.b16 %v1726, %v1722
    %v1779 = vpack.c.b16 %v1727, %v1723
    %v1780 = vpack.c.b16 %v1728, %v1724
    %v1781 = vpack.c.b16 %v1733, %v1729
    %v1782 = vpack.c.b16 %v1734, %v1730
    %v1783 = vpack.c.b16 %v1735, %v1731
    %v1784 = vpack.c.b16 %v1736, %v1732
    %v1785 = vpack.c.b16 %v1741, %v1737
    %v1786 = vpack.c.b16 %v1742, %v1738
    %v1787 = vpack.c.b16 %v1743, %v1739
    %v1788 = vpack.c.b16 %v1744, %v1740
    %v1789 = vpack.c.b16 %v1749, %v1745
    %v1790 = vpack.c.b16 %v1750, %v1746
    %v1791 = vpack.c.b16 %v1751, %v1747
    %v1792 = vpack.c.b16 %v1752, %v1748
    %v1793 = vpack.c.b16 %v1757, %v1753
    %v1794 = vpack.c.b16 %v1758, %v1754
    %v1795 = vpack.c.b16 %v1759, %v1755
    %v1796 = vpack.c.b16 %v1760, %v1756
    %v1797 = vpack.c.b16 %v1765, %v1761
    %v1798 = vpack.c.b16 %v1766, %v1762
    %v1799 = vpack.c.b16 %v1767, %v1763
    %v1800 = vpack.c.b16 %v1768, %v1764
    %1833 = vmatpush.bf16.msra.mxu0 %v1797
    %1834 = vmatpush.bf16.msra.mxu0 %v1793
    %1835 = vmatpush.bf16.msra.mxu0 %v1789
    %1836 = vmatpush.bf16.msra.mxu0 %v1785
    %1837 = vmatpush.bf16.msra.mxu0 %v1781
    %1838 = vmatpush.bf16.msra.mxu0 %v1777
    %1839 = vmatpush.bf16.msra.mxu0 %v1773
    %1840 = vmatpush.bf16.msra.mxu0 %v1769
    %1841 = vmatmul.bf16.gmra.mxu0 %v1625
    %v1842 = vpop.f32.mrf.mxu0
    %v1843 = vadd.f32 %v1665, %v1842
    %v1844 = vpop.f32.mrf.mxu0
    %v1845 = vadd.f32 %v1665, %v1844
    %1846 = vmatmul.bf16.gmra.mxu0 %v1626
    %v1847 = vpop.f32.mrf.mxu0
    %v1848 = vadd.f32 %v1665, %v1847
    %v1849 = vpop.f32.mrf.mxu0
    %v1850 = vadd.f32 %v1665, %v1849
    %1851 = vmatmul.bf16.gmra.mxu0 %v1627
    %v1852 = vpop.f32.mrf.mxu0
    %v1853 = vadd.f32 %v1665, %v1852
    %v1854 = vpop.f32.mrf.mxu0
    %v1855 = vadd.f32 %v1665, %v1854
    %1856 = vmatmul.bf16.gmra.mxu0 %v1628
    %v1857 = vpop.f32.mrf.mxu0
    %v1858 = vadd.f32 %v1665, %v1857
    %v1859 = vpop.f32.mrf.mxu0
    %v1860 = vadd.f32 %v1665, %v1859
    %1861 = vdwg.mxu0
    %1862 = vmatpush.bf16.msra.mxu0 %v1798
    %1863 = vmatpush.bf16.msra.mxu0 %v1794
    %1864 = vmatpush.bf16.msra.mxu0 %v1790
    %1865 = vmatpush.bf16.msra.mxu0 %v1786
    %1866 = vmatpush.bf16.msra.mxu0 %v1782
    %1867 = vmatpush.bf16.msra.mxu0 %v1778
    %1868 = vmatpush.bf16.msra.mxu0 %v1774
    %1869 = vmatpush.bf16.msra.mxu0 %v1770
    %1870 = vmatmul.bf16.gmra.mxu0 %v1625
    %v1871 = vpop.f32.mrf.mxu0
    %v1872 = vadd.f32 %v1666, %v1871
    %v1873 = vpop.f32.mrf.mxu0
    %v1874 = vadd.f32 %v1666, %v1873
    %1875 = vmatmul.bf16.gmra.mxu0 %v1626
    %v1876 = vpop.f32.mrf.mxu0
    %v1877 = vadd.f32 %v1666, %v1876
    %v1878 = vpop.f32.mrf.mxu0
    %v1879 = vadd.f32 %v1666, %v1878
    %1880 = vmatmul.bf16.gmra.mxu0 %v1627
    %v1881 = vpop.f32.mrf.mxu0
    %v1882 = vadd.f32 %v1666, %v1881
    %v1883 = vpop.f32.mrf.mxu0
    %v1884 = vadd.f32 %v1666, %v1883
    %1885 = vmatmul.bf16.gmra.mxu0 %v1628
    %v1886 = vpop.f32.mrf.mxu0
    %v1887 = vadd.f32 %v1666, %v1886
    %v1888 = vpop.f32.mrf.mxu0
    %v1889 = vadd.f32 %v1666, %v1888
    %1890 = vdwg.mxu0
    %1891 = vmatpush.bf16.msra.mxu0 %v1799
    %1892 = vmatpush.bf16.msra.mxu0 %v1795
    %1893 = vmatpush.bf16.msra.mxu0 %v1791
    %1894 = vmatpush.bf16.msra.mxu0 %v1787
    %1895 = vmatpush.bf16.msra.mxu0 %v1783
    %1896 = vmatpush.bf16.msra.mxu0 %v1779
    %1897 = vmatpush.bf16.msra.mxu0 %v1775
    %1898 = vmatpush.bf16.msra.mxu0 %v1771
    %1899 = vmatmul.bf16.gmra.mxu0 %v1625
    %v1900 = vpop.f32.mrf.mxu0
    %v1901 = vadd.f32 %v1667, %v1900
    %v1902 = vpop.f32.mrf.mxu0
    %v1903 = vadd.f32 %v1667, %v1902
    %1904 = vmatmul.bf16.gmra.mxu0 %v1626
    %v1905 = vpop.f32.mrf.mxu0
    %v1906 = vadd.f32 %v1667, %v1905
    %v1907 = vpop.f32.mrf.mxu0
    %v1908 = vadd.f32 %v1667, %v1907
    %1909 = vmatmul.bf16.gmra.mxu0 %v1627
    %v1910 = vpop.f32.mrf.mxu0
    %v1911 = vadd.f32 %v1667, %v1910
    %v1912 = vpop.f32.mrf.mxu0
    %v1913 = vadd.f32 %v1667, %v1912
    %1914 = vmatmul.bf16.gmra.mxu0 %v1628
    %v1915 = vpop.f32.mrf.mxu0
    %v1916 = vadd.f32 %v1667, %v1915
    %v1917 = vpop.f32.mrf.mxu0
    %v1918 = vadd.f32 %v1667, %v1917
    %1919 = vdwg.mxu0
    %1920 = vmatpush.bf16.msra.mxu0 %v1800
    %1921 = vmatpush.bf16.msra.mxu0 %v1796
    %1922 = vmatpush.bf16.msra.mxu0 %v1792
    %1923 = vmatpush.bf16.msra.mxu0 %v1788
    %1924 = vmatpush.bf16.msra.mxu0 %v1784
    %1925 = vmatpush.bf16.msra.mxu0 %v1780
    %1926 = vmatpush.bf16.msra.mxu0 %v1776
    %1927 = vmatpush.bf16.msra.mxu0 %v1772
    %1928 = vmatmul.bf16.gmra.mxu0 %v1625
    %v1929 = vpop.f32.mrf.mxu0
    %v1930 = vadd.f32 %v1668, %v1929
    %v1931 = vpop.f32.mrf.mxu0
    %v1932 = vadd.f32 %v1668, %v1931
    %1933 = vmatmul.bf16.gmra.mxu0 %v1626
    %v1934 = vpop.f32.mrf.mxu0
    %v1935 = vadd.f32 %v1668, %v1934
    %v1936 = vpop.f32.mrf.mxu0
    %v1937 = vadd.f32 %v1668, %v1936
    %1938 = vmatmul.bf16.gmra.mxu0 %v1627
    %v1939 = vpop.f32.mrf.mxu0
    %v1940 = vadd.f32 %v1668, %v1939
    %v1941 = vpop.f32.mrf.mxu0
    %v1942 = vadd.f32 %v1668, %v1941
    %1943 = vmatmul.bf16.gmra.mxu0 %v1628
    %v1944 = vpop.f32.mrf.mxu0
    %v1945 = vadd.f32 %v1668, %v1944
    %v1946 = vpop.f32.mrf.mxu0
    %v1947 = vadd.f32 %v1668, %v1946
    %1948 = vdwg.mxu0
    %1949 = vst [vmem:[#allocation2] sm:$0xff] %v1843
    %1950 = vst [vmem:[#allocation2 + $0x8] sm:$0xff] %v1872
    %1951 = vst [vmem:[#allocation2 + $0x10] sm:$0xff] %v1901
    %1952 = vst [vmem:[#allocation2 + $0x18] sm:$0xff] %v1930
    %1953 = vst [vmem:[#allocation2 + $0x20] sm:$0xff] %v1845
    %1954 = vst [vmem:[#allocation2 + $0x28] sm:$0xff] %v1874
    %1955 = vst [vmem:[#allocation2 + $0x30] sm:$0xff] %v1903
    %1956 = vst [vmem:[#allocation2 + $0x38] sm:$0xff] %v1932
    %1957 = vst [vmem:[#allocation2 + $0x40] sm:$0xff] %v1848
    %1958 = vst [vmem:[#allocation2 + $0x48] sm:$0xff] %v1877
    %1959 = vst [vmem:[#allocation2 + $0x50] sm:$0xff] %v1906
    %1960 = vst [vmem:[#allocation2 + $0x58] sm:$0xff] %v1935
    %1961 = vst [vmem:[#allocation2 + $0x60] sm:$0xff] %v1850
    %1962 = vst [vmem:[#allocation2 + $0x68] sm:$0xff] %v1879
    %1963 = vst [vmem:[#allocation2 + $0x70] sm:$0xff] %v1908
    %1964 = vst [vmem:[#allocation2 + $0x78] sm:$0xff] %v1937
    %1965 = vst [vmem:[#allocation2 + $0x80] sm:$0xff] %v1853
    %1966 = vst [vmem:[#allocation2 + $0x88] sm:$0xff] %v1882
    %1967 = vst [vmem:[#allocation2 + $0x90] sm:$0xff] %v1911
    %1968 = vst [vmem:[#allocation2 + $0x98] sm:$0xff] %v1940
    %1969 = vst [vmem:[#allocation2 + $0xa0] sm:$0xff] %v1855
    %1970 = vst [vmem:[#allocation2 + $0xa8] sm:$0xff] %v1884
    %1971 = vst [vmem:[#allocation2 + $0xb0] sm:$0xff] %v1913
    %1972 = vst [vmem:[#allocation2 + $0xb8] sm:$0xff] %v1942
    %1973 = vst [vmem:[#allocation2 + $0xc0] sm:$0xff] %v1858
    %1974 = vst [vmem:[#allocation2 + $0xc8] sm:$0xff] %v1887
    %1975 = vst [vmem:[#allocation2 + $0xd0] sm:$0xff] %v1916
    %1976 = vst [vmem:[#allocation2 + $0xd8] sm:$0xff] %v1945
    %1977 = vst [vmem:[#allocation2 + $0xe0] sm:$0xff] %v1860
    %1978 = vst [vmem:[#allocation2 + $0xe8] sm:$0xff] %v1889
    %1979 = vst [vmem:[#allocation2 + $0xf0] sm:$0xff] %v1918
    %1980 = vst [vmem:[#allocation2 + $0xf8] sm:$0xff] %v1947
    %s1981 = scalar_lea.vmem [#allocation5], 256
    %v1982 = vld [vmem:[%s1981] sm:$0xff]
    %v1983 = vld [vmem:[%s1981 + $0x8] sm:$0xff]
    %v1984 = vld [vmem:[%s1981 + $0x10] sm:$0xff]
    %v1985 = vld [vmem:[%s1981 + $0x18] sm:$0xff]
    %v1986 = vld [vmem:[%s1981 + $0x20] sm:$0xff]
    %v1987 = vld [vmem:[%s1981 + $0x28] sm:$0xff]
    %v1988 = vld [vmem:[%s1981 + $0x30] sm:$0xff]
    %v1989 = vld [vmem:[%s1981 + $0x38] sm:$0xff]
    %v1990 = vld [vmem:[%s1981 + $0x40] sm:$0xff]
    %v1991 = vld [vmem:[%s1981 + $0x48] sm:$0xff]
    %v1992 = vld [vmem:[%s1981 + $0x50] sm:$0xff]
    %v1993 = vld [vmem:[%s1981 + $0x58] sm:$0xff]
    %v1994 = vld [vmem:[%s1981 + $0x60] sm:$0xff]
    %v1995 = vld [vmem:[%s1981 + $0x68] sm:$0xff]
    %v1996 = vld [vmem:[%s1981 + $0x70] sm:$0xff]
    %v1997 = vld [vmem:[%s1981 + $0x78] sm:$0xff]
    %v1998 = vld [vmem:[%s1981 + $0x80] sm:$0xff]
    %v1999 = vld [vmem:[%s1981 + $0x88] sm:$0xff]
    %v2000 = vld [vmem:[%s1981 + $0x90] sm:$0xff]
    %v2001 = vld [vmem:[%s1981 + $0x98] sm:$0xff]
    %v2002 = vld [vmem:[%s1981 + $0xa0] sm:$0xff]
    %v2003 = vld [vmem:[%s1981 + $0xa8] sm:$0xff]
    %v2004 = vld [vmem:[%s1981 + $0xb0] sm:$0xff]
    %v2005 = vld [vmem:[%s1981 + $0xb8] sm:$0xff]
    %v2006 = vld [vmem:[%s1981 + $0xc0] sm:$0xff]
    %v2007 = vld [vmem:[%s1981 + $0xc8] sm:$0xff]
    %v2008 = vld [vmem:[%s1981 + $0xd0] sm:$0xff]
    %v2009 = vld [vmem:[%s1981 + $0xd8] sm:$0xff]
    %v2010 = vld [vmem:[%s1981 + $0xe0] sm:$0xff]
    %v2011 = vld [vmem:[%s1981 + $0xe8] sm:$0xff]
    %v2012 = vld [vmem:[%s1981 + $0xf0] sm:$0xff]
    %v2013 = vld [vmem:[%s1981 + $0xf8] sm:$0xff]
    %v2014 = vld [vmem:[#allocation2] sm:$0xff]
    %v2015 = vld [vmem:[#allocation2 + $0x8] sm:$0xff]
    %v2016 = vld [vmem:[#allocation2 + $0x10] sm:$0xff]
    %v2017 = vld [vmem:[#allocation2 + $0x18] sm:$0xff]
    %v2050 = vunpack.c.l.b16 %v1982
    %v2051 = vunpack.c.h.b16 %v1982
    %v2052 = vunpack.c.l.b16 %v1983
    %v2053 = vunpack.c.h.b16 %v1983
    %v2054 = vunpack.c.l.b16 %v1984
    %v2055 = vunpack.c.h.b16 %v1984
    %v2056 = vunpack.c.l.b16 %v1985
    %v2057 = vunpack.c.h.b16 %v1985
    %v2058 = vunpack.c.l.b16 %v1986
    %v2059 = vunpack.c.h.b16 %v1986
    %v2060 = vunpack.c.l.b16 %v1987
    %v2061 = vunpack.c.h.b16 %v1987
    %v2062 = vunpack.c.l.b16 %v1988
    %v2063 = vunpack.c.h.b16 %v1988
    %v2064 = vunpack.c.l.b16 %v1989
    %v2065 = vunpack.c.h.b16 %v1989
    %v2066 = vunpack.c.l.b16 %v1990
    %v2067 = vunpack.c.h.b16 %v1990
    %v2068 = vunpack.c.l.b16 %v1991
    %v2069 = vunpack.c.h.b16 %v1991
    %v2070 = vunpack.c.l.b16 %v1992
    %v2071 = vunpack.c.h.b16 %v1992
    %v2072 = vunpack.c.l.b16 %v1993
    %v2073 = vunpack.c.h.b16 %v1993
    %v2074 = vunpack.c.l.b16 %v1994
    %v2075 = vunpack.c.h.b16 %v1994
    %v2076 = vunpack.c.l.b16 %v1995
    %v2077 = vunpack.c.h.b16 %v1995
    %v2078 = vunpack.c.l.b16 %v1996
    %v2079 = vunpack.c.h.b16 %v1996
    %v2080 = vunpack.c.l.b16 %v1997
    %v2081 = vunpack.c.h.b16 %v1997
    %v2082 = vunpack.c.l.b16 %v1998
    %v2083 = vunpack.c.h.b16 %v1998
    %v2084 = vunpack.c.l.b16 %v1999
    %v2085 = vunpack.c.h.b16 %v1999
    %v2086 = vunpack.c.l.b16 %v2000
    %v2087 = vunpack.c.h.b16 %v2000
    %v2088 = vunpack.c.l.b16 %v2001
    %v2089 = vunpack.c.h.b16 %v2001
    %v2090 = vunpack.c.l.b16 %v2002
    %v2091 = vunpack.c.h.b16 %v2002
    %v2092 = vunpack.c.l.b16 %v2003
    %v2093 = vunpack.c.h.b16 %v2003
    %v2094 = vunpack.c.l.b16 %v2004
    %v2095 = vunpack.c.h.b16 %v2004
    %v2096 = vunpack.c.l.b16 %v2005
    %v2097 = vunpack.c.h.b16 %v2005
    %v2098 = vunpack.c.l.b16 %v2006
    %v2099 = vunpack.c.h.b16 %v2006
    %v2100 = vunpack.c.l.b16 %v2007
    %v2101 = vunpack.c.h.b16 %v2007
    %v2102 = vunpack.c.l.b16 %v2008
    %v2103 = vunpack.c.h.b16 %v2008
    %v2104 = vunpack.c.l.b16 %v2009
    %v2105 = vunpack.c.h.b16 %v2009
    %v2106 = vunpack.c.l.b16 %v2010
    %v2107 = vunpack.c.h.b16 %v2010
    %v2108 = vunpack.c.l.b16 %v2011
    %v2109 = vunpack.c.h.b16 %v2011
    %v2110 = vunpack.c.l.b16 %v2012
    %v2111 = vunpack.c.h.b16 %v2012
    %v2112 = vunpack.c.l.b16 %v2013
    %v2113 = vunpack.c.h.b16 %v2013
    %v2114 = vpack.c.b16 %v2054, %v2050
    %v2115 = vpack.c.b16 %v2055, %v2051
    %v2116 = vpack.c.b16 %v2056, %v2052
    %v2117 = vpack.c.b16 %v2057, %v2053
    %v2118 = vpack.c.b16 %v2062, %v2058
    %v2119 = vpack.c.b16 %v2063, %v2059
    %v2120 = vpack.c.b16 %v2064, %v2060
    %v2121 = vpack.c.b16 %v2065, %v2061
    %v2122 = vpack.c.b16 %v2070, %v2066
    %v2123 = vpack.c.b16 %v2071, %v2067
    %v2124 = vpack.c.b16 %v2072, %v2068
    %v2125 = vpack.c.b16 %v2073, %v2069
    %v2126 = vpack.c.b16 %v2078, %v2074
    %v2127 = vpack.c.b16 %v2079, %v2075
    %v2128 = vpack.c.b16 %v2080, %v2076
    %v2129 = vpack.c.b16 %v2081, %v2077
    %v2130 = vpack.c.b16 %v2086, %v2082
    %v2131 = vpack.c.b16 %v2087, %v2083
    %v2132 = vpack.c.b16 %v2088, %v2084
    %v2133 = vpack.c.b16 %v2089, %v2085
    %v2134 = vpack.c.b16 %v2094, %v2090
    %v2135 = vpack.c.b16 %v2095, %v2091
    %v2136 = vpack.c.b16 %v2096, %v2092
    %v2137 = vpack.c.b16 %v2097, %v2093
    %v2138 = vpack.c.b16 %v2102, %v2098
    %v2139 = vpack.c.b16 %v2103, %v2099
    %v2140 = vpack.c.b16 %v2104, %v2100
    %v2141 = vpack.c.b16 %v2105, %v2101
    %v2142 = vpack.c.b16 %v2110, %v2106
    %v2143 = vpack.c.b16 %v2111, %v2107
    %v2144 = vpack.c.b16 %v2112, %v2108
    %v2145 = vpack.c.b16 %v2113, %v2109
    %2178 = vmatpush.bf16.msra.mxu0 %v2142
    %2179 = vmatpush.bf16.msra.mxu0 %v2138
    %2180 = vmatpush.bf16.msra.mxu0 %v2134
    %2181 = vmatpush.bf16.msra.mxu0 %v2130
    %2182 = vmatpush.bf16.msra.mxu0 %v2126
    %2183 = vmatpush.bf16.msra.mxu0 %v2122
    %2184 = vmatpush.bf16.msra.mxu0 %v2118
    %2185 = vmatpush.bf16.msra.mxu0 %v2114
    %2186 = vmatmul.bf16.gmra.mxu0 0
    %v2187 = vpop.f32.mrf.mxu0
    %v2188 = vadd.f32 0.0, %v2187
    %v2189 = vpop.f32.mrf.mxu0
    %2190 = vdwg.mxu0
    %2191 = vmatpush.bf16.msra.mxu0 %v2143
    %2192 = vmatpush.bf16.msra.mxu0 %v2139
    %2193 = vmatpush.bf16.msra.mxu0 %v2135
    %2194 = vmatpush.bf16.msra.mxu0 %v2131
    %2195 = vmatpush.bf16.msra.mxu0 %v2127
    %2196 = vmatpush.bf16.msra.mxu0 %v2123
    %2197 = vmatpush.bf16.msra.mxu0 %v2119
    %2198 = vmatpush.bf16.msra.mxu0 %v2115
    %2199 = vmatmul.bf16.gmra.mxu0 0
    %v2200 = vpop.f32.mrf.mxu0
    %v2201 = vadd.f32 0.0, %v2200
    %v2202 = vpop.f32.mrf.mxu0
    %2203 = vdwg.mxu0
    %2204 = vmatpush.bf16.msra.mxu0 %v2144
    %2205 = vmatpush.bf16.msra.mxu0 %v2140
    %2206 = vmatpush.bf16.msra.mxu0 %v2136
    %2207 = vmatpush.bf16.msra.mxu0 %v2132
    %2208 = vmatpush.bf16.msra.mxu0 %v2128
    %2209 = vmatpush.bf16.msra.mxu0 %v2124
    %2210 = vmatpush.bf16.msra.mxu0 %v2120
    %2211 = vmatpush.bf16.msra.mxu0 %v2116
    %2212 = vmatmul.bf16.gmra.mxu0 0
    %v2213 = vpop.f32.mrf.mxu0
    %v2214 = vadd.f32 0.0, %v2213
    %v2215 = vpop.f32.mrf.mxu0
    %2216 = vdwg.mxu0
    %2217 = vmatpush.bf16.msra.mxu0 %v2145
    %2218 = vmatpush.bf16.msra.mxu0 %v2141
    %2219 = vmatpush.bf16.msra.mxu0 %v2137
    %2220 = vmatpush.bf16.msra.mxu0 %v2133
    %2221 = vmatpush.bf16.msra.mxu0 %v2129
    %2222 = vmatpush.bf16.msra.mxu0 %v2125
    %2223 = vmatpush.bf16.msra.mxu0 %v2121
    %2224 = vmatpush.bf16.msra.mxu0 %v2117
    %2225 = vmatmul.bf16.gmra.mxu0 0
    %v2226 = vpop.f32.mrf.mxu0
    %v2227 = vadd.f32 0.0, %v2226
    %v2228 = vpop.f32.mrf.mxu0
    %2229 = vdwg.mxu0
    %v2230 = vadd.f32 %v2014, %v2188
    %v2231 = vadd.f32 %v2015, %v2201
    %v2232 = vadd.f32 %v2016, %v2214
    %v2233 = vadd.f32 %v2017, %v2227
    %v2234 = vxor.u32 %v2230, 2147483648
    %v2235 = vmul.f32 %v2234, 1.442695
    %v2236 = vpow.pop %v2235
    %v2237 = vadd.f32 %v2236, 1.0
    %v2238 = vrcp.pop %v2237
    %v2239 = vmul.f32 %v2237, %v2238
    %v2240 = vsub.f32 1.0, %v2239
    %v2241 = vmul.f32 %v2238, %v2240
    %v2242 = vadd.f32 %v2238, %v2241
    %vm2243 = vweird.f32 %v2237
    %vm2244 = vweird.f32 %v2238
    %vm2245 = vmor %vm2243, %vm2244
    %v2246 = vsel %vm2245, %v2238, %v2242
    %v2247 = vand.u32 2147483647, %v2237
    %vm2248 = vcmp.eq.f32.partialorder %v2247, 8.507059e+37
    %v2249 = vand.u32 %v2237, 2147483648
    %v2250 = vor.u32 1.1754944e-38, %v2249
    %v2251 = vsel %vm2248, %v2250, %v2246
    %v2252 = vmul.f32 1.0, %v2251
    %v2253 = vxor.u32 %v2231, 2147483648
    %v2254 = vmul.f32 %v2253, 1.442695
    %v2255 = vpow.pop %v2254
    %v2256 = vadd.f32 %v2255, 1.0
    %v2257 = vrcp.pop %v2256
    %v2258 = vmul.f32 %v2256, %v2257
    %v2259 = vsub.f32 1.0, %v2258
    %v2260 = vmul.f32 %v2257, %v2259
    %v2261 = vadd.f32 %v2257, %v2260
    %vm2262 = vweird.f32 %v2256
    %vm2263 = vweird.f32 %v2257
    %vm2264 = vmor %vm2262, %vm2263
    %v2265 = vsel %vm2264, %v2257, %v2261
    %v2266 = vand.u32 2147483647, %v2256
    %vm2267 = vcmp.eq.f32.partialorder %v2266, 8.507059e+37
    %v2268 = vand.u32 %v2256, 2147483648
    %v2269 = vor.u32 1.1754944e-38, %v2268
    %v2270 = vsel %vm2267, %v2269, %v2265
    %v2271 = vmul.f32 1.0, %v2270
    %v2272 = vtanh.pop %v2232
    %v2273 = vxor.u32 %v2233, 2147483648
    %v2274 = vmul.f32 %v2273, 1.442695
    %v2275 = vpow.pop %v2274
    %v2276 = vadd.f32 %v2275, 1.0
    %v2277 = vrcp.pop %v2276
    %v2278 = vmul.f32 %v2276, %v2277
    %v2279 = vsub.f32 1.0, %v2278
    %v2280 = vmul.f32 %v2277, %v2279
    %v2281 = vadd.f32 %v2277, %v2280
    %vm2282 = vweird.f32 %v2276
    %vm2283 = vweird.f32 %v2277
    %vm2284 = vmor %vm2282, %vm2283
    %v2285 = vsel %vm2284, %v2277, %v2281
    %v2286 = vand.u32 2147483647, %v2276
    %vm2287 = vcmp.eq.f32.partialorder %v2286, 8.507059e+37
    %v2288 = vand.u32 %v2276, 2147483648
    %v2289 = vor.u32 1.1754944e-38, %v2288
    %v2290 = vsel %vm2287, %v2289, %v2285
    %v2291 = vmul.f32 1.0, %v2290
    %v2292 = vmul.f32 %v2271, 0.0
    %v2293 = vmul.f32 %v2252, %v2272
    %v2294 = vadd.f32 %v2292, %v2293
    %v2295 = vtanh.pop %v2294
    %v2296 = vmul.f32 %v2291, %v2295
    %2297 = vst [vmem:[%s4] sm:$0xff] %v2296
    %v2298 = vpack.c.bf16 %v2296, %v2296
    %v2299 = vld [vmem:[%s729] sm:$0xff]
    %v2300 = vld [vmem:[%s729 + $0x8] sm:$0xff]
    %v2301 = vld [vmem:[%s729 + $0x10] sm:$0xff]
    %v2302 = vld [vmem:[%s729 + $0x18] sm:$0xff]
    %2303 = vmatpush.bf16.msra.mxu0 %v2142
    %2304 = vmatpush.bf16.msra.mxu0 %v2138
    %2305 = vmatpush.bf16.msra.mxu0 %v2134
    %2306 = vmatpush.bf16.msra.mxu0 %v2130
    %2307 = vmatpush.bf16.msra.mxu0 %v2126
    %2308 = vmatpush.bf16.msra.mxu0 %v2122
    %2309 = vmatpush.bf16.msra.mxu0 %v2118
    %2310 = vmatpush.bf16.msra.mxu0 %v2114
    %2311 = vmatmul.bf16.gmra.mxu0 %v2298
    %v2312 = vpop.f32.mrf.mxu0
    %v2313 = vadd.f32 0.0, %v2312
    %v2314 = vpop.f32.mrf.mxu0
    %2315 = vdwg.mxu0
    %2316 = vmatpush.bf16.msra.mxu0 %v2143
    %2317 = vmatpush.bf16.msra.mxu0 %v2139
    %2318 = vmatpush.bf16.msra.mxu0 %v2135
    %2319 = vmatpush.bf16.msra.mxu0 %v2131
    %2320 = vmatpush.bf16.msra.mxu0 %v2127
    %2321 = vmatpush.bf16.msra.mxu0 %v2123
    %2322 = vmatpush.bf16.msra.mxu0 %v2119
    %2323 = vmatpush.bf16.msra.mxu0 %v2115
    %2324 = vmatmul.bf16.gmra.mxu0 %v2298
    %v2325 = vpop.f32.mrf.mxu0
    %v2326 = vadd.f32 0.0, %v2325
    %v2327 = vpop.f32.mrf.mxu0
    %2328 = vdwg.mxu0
    %2329 = vmatpush.bf16.msra.mxu0 %v2144
    %2330 = vmatpush.bf16.msra.mxu0 %v2140
    %2331 = vmatpush.bf16.msra.mxu0 %v2136
    %2332 = vmatpush.bf16.msra.mxu0 %v2132
    %2333 = vmatpush.bf16.msra.mxu0 %v2128
    %2334 = vmatpush.bf16.msra.mxu0 %v2124
    %2335 = vmatpush.bf16.msra.mxu0 %v2120
    %2336 = vmatpush.bf16.msra.mxu0 %v2116
    %2337 = vmatmul.bf16.gmra.mxu0 %v2298
    %v2338 = vpop.f32.mrf.mxu0
    %v2339 = vadd.f32 0.0, %v2338
    %v2340 = vpop.f32.mrf.mxu0
    %2341 = vdwg.mxu0
    %2342 = vmatpush.bf16.msra.mxu0 %v2145
    %2343 = vmatpush.bf16.msra.mxu0 %v2141
    %2344 = vmatpush.bf16.msra.mxu0 %v2137
    %2345 = vmatpush.bf16.msra.mxu0 %v2133
    %2346 = vmatpush.bf16.msra.mxu0 %v2129
    %2347 = vmatpush.bf16.msra.mxu0 %v2125
    %2348 = vmatpush.bf16.msra.mxu0 %v2121
    %2349 = vmatpush.bf16.msra.mxu0 %v2117
    %2350 = vmatmul.bf16.gmra.mxu0 %v2298
    %v2351 = vpop.f32.mrf.mxu0
    %v2352 = vadd.f32 0.0, %v2351
    %v2353 = vpop.f32.mrf.mxu0
    %2354 = vdwg.mxu0
    %v2355 = vadd.f32 %v2299, %v2313
    %v2356 = vadd.f32 %v2300, %v2326
    %v2357 = vadd.f32 %v2301, %v2339
    %v2358 = vadd.f32 %v2302, %v2352
    %v2359 = vxor.u32 %v2355, 2147483648
    %v2360 = vmul.f32 %v2359, 1.442695
    %v2361 = vpow.pop %v2360
    %v2362 = vadd.f32 %v2361, 1.0
    %v2363 = vrcp.pop %v2362
    %v2364 = vmul.f32 %v2362, %v2363
    %v2365 = vsub.f32 1.0, %v2364
    %v2366 = vmul.f32 %v2363, %v2365
    %v2367 = vadd.f32 %v2363, %v2366
    %vm2368 = vweird.f32 %v2362
    %vm2369 = vweird.f32 %v2363
    %vm2370 = vmor %vm2368, %vm2369
    %v2371 = vsel %vm2370, %v2363, %v2367
    %v2372 = vand.u32 2147483647, %v2362
    %vm2373 = vcmp.eq.f32.partialorder %v2372, 8.507059e+37
    %v2374 = vand.u32 %v2362, 2147483648
    %v2375 = vor.u32 1.1754944e-38, %v2374
    %v2376 = vsel %vm2373, %v2375, %v2371
    %v2377 = vmul.f32 1.0, %v2376
    %v2378 = vxor.u32 %v2356, 2147483648
    %v2379 = vmul.f32 %v2378, 1.442695
    %v2380 = vpow.pop %v2379
    %v2381 = vadd.f32 %v2380, 1.0
    %v2382 = vrcp.pop %v2381
    %v2383 = vmul.f32 %v2381, %v2382
    %v2384 = vsub.f32 1.0, %v2383
    %v2385 = vmul.f32 %v2382, %v2384
    %v2386 = vadd.f32 %v2382, %v2385
    %vm2387 = vweird.f32 %v2381
    %vm2388 = vweird.f32 %v2382
    %vm2389 = vmor %vm2387, %vm2388
    %v2390 = vsel %vm2389, %v2382, %v2386
    %v2391 = vand.u32 2147483647, %v2381
    %vm2392 = vcmp.eq.f32.partialorder %v2391, 8.507059e+37
    %v2393 = vand.u32 %v2381, 2147483648
    %v2394 = vor.u32 1.1754944e-38, %v2393
    %v2395 = vsel %vm2392, %v2394, %v2390
    %v2396 = vmul.f32 1.0, %v2395
    %v2397 = vtanh.pop %v2357
    %v2398 = vxor.u32 %v2358, 2147483648
    %v2399 = vmul.f32 %v2398, 1.442695
    %v2400 = vpow.pop %v2399
    %v2401 = vadd.f32 %v2400, 1.0
    %v2402 = vrcp.pop %v2401
    %v2403 = vmul.f32 %v2401, %v2402
    %v2404 = vsub.f32 1.0, %v2403
    %v2405 = vmul.f32 %v2402, %v2404
    %v2406 = vadd.f32 %v2402, %v2405
    %vm2407 = vweird.f32 %v2401
    %vm2408 = vweird.f32 %v2402
    %vm2409 = vmor %vm2407, %vm2408
    %v2410 = vsel %vm2409, %v2402, %v2406
    %v2411 = vand.u32 2147483647, %v2401
    %vm2412 = vcmp.eq.f32.partialorder %v2411, 8.507059e+37
    %v2413 = vand.u32 %v2401, 2147483648
    %v2414 = vor.u32 1.1754944e-38, %v2413
    %v2415 = vsel %vm2412, %v2414, %v2410
    %v2416 = vmul.f32 1.0, %v2415
    %v2417 = vmul.f32 %v2396, %v2294
    %v2418 = vmul.f32 %v2377, %v2397
    %v2419 = vadd.f32 %v2417, %v2418
    %v2420 = vtanh.pop %v2419
    %v2421 = vmul.f32 %v2416, %v2420
    %2422 = vst [vmem:[%s853] sm:$0xff] %v2421
    %v2423 = vpack.c.bf16 %v2421, %v2421
    %v2424 = vld [vmem:[%s856] sm:$0xff]
    %v2425 = vld [vmem:[%s856 + $0x8] sm:$0xff]
    %v2426 = vld [vmem:[%s856 + $0x10] sm:$0xff]
    %v2427 = vld [vmem:[%s856 + $0x18] sm:$0xff]
    %2428 = vmatpush.bf16.msra.mxu0 %v2142
    %2429 = vmatpush.bf16.msra.mxu0 %v2138
    %2430 = vmatpush.bf16.msra.mxu0 %v2134
    %2431 = vmatpush.bf16.msra.mxu0 %v2130
    %2432 = vmatpush.bf16.msra.mxu0 %v2126
    %2433 = vmatpush.bf16.msra.mxu0 %v2122
    %2434 = vmatpush.bf16.msra.mxu0 %v2118
    %2435 = vmatpush.bf16.msra.mxu0 %v2114
    %2436 = vmatmul.bf16.gmra.mxu0 %v2423
    %v2437 = vpop.f32.mrf.mxu0
    %v2438 = vadd.f32 0.0, %v2437
    %v2439 = vpop.f32.mrf.mxu0
    %2440 = vdwg.mxu0
    %2441 = vmatpush.bf16.msra.mxu0 %v2143
    %2442 = vmatpush.bf16.msra.mxu0 %v2139
    %2443 = vmatpush.bf16.msra.mxu0 %v2135
    %2444 = vmatpush.bf16.msra.mxu0 %v2131
    %2445 = vmatpush.bf16.msra.mxu0 %v2127
    %2446 = vmatpush.bf16.msra.mxu0 %v2123
    %2447 = vmatpush.bf16.msra.mxu0 %v2119
    %2448 = vmatpush.bf16.msra.mxu0 %v2115
    %2449 = vmatmul.bf16.gmra.mxu0 %v2423
    %v2450 = vpop.f32.mrf.mxu0
    %v2451 = vadd.f32 0.0, %v2450
    %v2452 = vpop.f32.mrf.mxu0
    %2453 = vdwg.mxu0
    %2454 = vmatpush.bf16.msra.mxu0 %v2144
    %2455 = vmatpush.bf16.msra.mxu0 %v2140
    %2456 = vmatpush.bf16.msra.mxu0 %v2136
    %2457 = vmatpush.bf16.msra.mxu0 %v2132
    %2458 = vmatpush.bf16.msra.mxu0 %v2128
    %2459 = vmatpush.bf16.msra.mxu0 %v2124
    %2460 = vmatpush.bf16.msra.mxu0 %v2120
    %2461 = vmatpush.bf16.msra.mxu0 %v2116
    %2462 = vmatmul.bf16.gmra.mxu0 %v2423
    %v2463 = vpop.f32.mrf.mxu0
    %v2464 = vadd.f32 0.0, %v2463
    %v2465 = vpop.f32.mrf.mxu0
    %2466 = vdwg.mxu0
    %2467 = vmatpush.bf16.msra.mxu0 %v2145
    %2468 = vmatpush.bf16.msra.mxu0 %v2141
    %2469 = vmatpush.bf16.msra.mxu0 %v2137
    %2470 = vmatpush.bf16.msra.mxu0 %v2133
    %2471 = vmatpush.bf16.msra.mxu0 %v2129
    %2472 = vmatpush.bf16.msra.mxu0 %v2125
    %2473 = vmatpush.bf16.msra.mxu0 %v2121
    %2474 = vmatpush.bf16.msra.mxu0 %v2117
    %2475 = vmatmul.bf16.gmra.mxu0 %v2423
    %v2476 = vpop.f32.mrf.mxu0
    %v2477 = vadd.f32 0.0, %v2476
    %v2478 = vpop.f32.mrf.mxu0
    %2479 = vdwg.mxu0
    %v2480 = vadd.f32 %v2424, %v2438
    %v2481 = vadd.f32 %v2425, %v2451
    %v2482 = vadd.f32 %v2426, %v2464
    %v2483 = vadd.f32 %v2427, %v2477
    %v2484 = vxor.u32 %v2480, 2147483648
    %v2485 = vmul.f32 %v2484, 1.442695
    %v2486 = vpow.pop %v2485
    %v2487 = vadd.f32 %v2486, 1.0
    %v2488 = vrcp.pop %v2487
    %v2489 = vmul.f32 %v2487, %v2488
    %v2490 = vsub.f32 1.0, %v2489
    %v2491 = vmul.f32 %v2488, %v2490
    %v2492 = vadd.f32 %v2488, %v2491
    %vm2493 = vweird.f32 %v2487
    %vm2494 = vweird.f32 %v2488
    %vm2495 = vmor %vm2493, %vm2494
    %v2496 = vsel %vm2495, %v2488, %v2492
    %v2497 = vand.u32 2147483647, %v2487
    %vm2498 = vcmp.eq.f32.partialorder %v2497, 8.507059e+37
    %v2499 = vand.u32 %v2487, 2147483648
    %v2500 = vor.u32 1.1754944e-38, %v2499
    %v2501 = vsel %vm2498, %v2500, %v2496
    %v2502 = vmul.f32 1.0, %v2501
    %v2503 = vxor.u32 %v2481, 2147483648
    %v2504 = vmul.f32 %v2503, 1.442695
    %v2505 = vpow.pop %v2504
    %v2506 = vadd.f32 %v2505, 1.0
    %v2507 = vrcp.pop %v2506
    %v2508 = vmul.f32 %v2506, %v2507
    %v2509 = vsub.f32 1.0, %v2508
    %v2510 = vmul.f32 %v2507, %v2509
    %v2511 = vadd.f32 %v2507, %v2510
    %vm2512 = vweird.f32 %v2506
    %vm2513 = vweird.f32 %v2507
    %vm2514 = vmor %vm2512, %vm2513
    %v2515 = vsel %vm2514, %v2507, %v2511
    %v2516 = vand.u32 2147483647, %v2506
    %vm2517 = vcmp.eq.f32.partialorder %v2516, 8.507059e+37
    %v2518 = vand.u32 %v2506, 2147483648
    %v2519 = vor.u32 1.1754944e-38, %v2518
    %v2520 = vsel %vm2517, %v2519, %v2515
    %v2521 = vmul.f32 1.0, %v2520
    %v2522 = vtanh.pop %v2482
    %v2523 = vxor.u32 %v2483, 2147483648
    %v2524 = vmul.f32 %v2523, 1.442695
    %v2525 = vpow.pop %v2524
    %v2526 = vadd.f32 %v2525, 1.0
    %v2527 = vrcp.pop %v2526
    %v2528 = vmul.f32 %v2526, %v2527
    %v2529 = vsub.f32 1.0, %v2528
    %v2530 = vmul.f32 %v2527, %v2529
    %v2531 = vadd.f32 %v2527, %v2530
    %vm2532 = vweird.f32 %v2526
    %vm2533 = vweird.f32 %v2527
    %vm2534 = vmor %vm2532, %vm2533
    %v2535 = vsel %vm2534, %v2527, %v2531
    %v2536 = vand.u32 2147483647, %v2526
    %vm2537 = vcmp.eq.f32.partialorder %v2536, 8.507059e+37
    %v2538 = vand.u32 %v2526, 2147483648
    %v2539 = vor.u32 1.1754944e-38, %v2538
    %v2540 = vsel %vm2537, %v2539, %v2535
    %v2541 = vmul.f32 1.0, %v2540
    %v2542 = vmul.f32 %v2521, %v2419
    %v2543 = vmul.f32 %v2502, %v2522
    %v2544 = vadd.f32 %v2542, %v2543
    %v2545 = vtanh.pop %v2544
    %v2546 = vmul.f32 %v2541, %v2545
    %2547 = vst [vmem:[%s980] sm:$0xff] %v2546
    %v2548 = vpack.c.bf16 %v2546, %v2546
    %v2549 = vld [vmem:[%s983] sm:$0xff]
    %v2550 = vld [vmem:[%s983 + $0x8] sm:$0xff]
    %v2551 = vld [vmem:[%s983 + $0x10] sm:$0xff]
    %v2552 = vld [vmem:[%s983 + $0x18] sm:$0xff]
    %2553 = vmatpush.bf16.msra.mxu0 %v2142
    %2554 = vmatpush.bf16.msra.mxu0 %v2138
    %2555 = vmatpush.bf16.msra.mxu0 %v2134
    %2556 = vmatpush.bf16.msra.mxu0 %v2130
    %2557 = vmatpush.bf16.msra.mxu0 %v2126
    %2558 = vmatpush.bf16.msra.mxu0 %v2122
    %2559 = vmatpush.bf16.msra.mxu0 %v2118
    %2560 = vmatpush.bf16.msra.mxu0 %v2114
    %2561 = vmatmul.bf16.gmra.mxu0 %v2548
    %v2562 = vpop.f32.mrf.mxu0
    %v2563 = vadd.f32 0.0, %v2562
    %v2564 = vpop.f32.mrf.mxu0
    %2565 = vdwg.mxu0
    %2566 = vmatpush.bf16.msra.mxu0 %v2143
    %2567 = vmatpush.bf16.msra.mxu0 %v2139
    %2568 = vmatpush.bf16.msra.mxu0 %v2135
    %2569 = vmatpush.bf16.msra.mxu0 %v2131
    %2570 = vmatpush.bf16.msra.mxu0 %v2127
    %2571 = vmatpush.bf16.msra.mxu0 %v2123
    %2572 = vmatpush.bf16.msra.mxu0 %v2119
    %2573 = vmatpush.bf16.msra.mxu0 %v2115
    %2574 = vmatmul.bf16.gmra.mxu0 %v2548
    %v2575 = vpop.f32.mrf.mxu0
    %v2576 = vadd.f32 0.0, %v2575
    %v2577 = vpop.f32.mrf.mxu0
    %2578 = vdwg.mxu0
    %2579 = vmatpush.bf16.msra.mxu0 %v2144
    %2580 = vmatpush.bf16.msra.mxu0 %v2140
    %2581 = vmatpush.bf16.msra.mxu0 %v2136
    %2582 = vmatpush.bf16.msra.mxu0 %v2132
    %2583 = vmatpush.bf16.msra.mxu0 %v2128
    %2584 = vmatpush.bf16.msra.mxu0 %v2124
    %2585 = vmatpush.bf16.msra.mxu0 %v2120
    %2586 = vmatpush.bf16.msra.mxu0 %v2116
    %2587 = vmatmul.bf16.gmra.mxu0 %v2548
    %v2588 = vpop.f32.mrf.mxu0
    %v2589 = vadd.f32 0.0, %v2588
    %v2590 = vpop.f32.mrf.mxu0
    %2591 = vdwg.mxu0
    %2592 = vmatpush.bf16.msra.mxu0 %v2145
    %2593 = vmatpush.bf16.msra.mxu0 %v2141
    %2594 = vmatpush.bf16.msra.mxu0 %v2137
    %2595 = vmatpush.bf16.msra.mxu0 %v2133
    %2596 = vmatpush.bf16.msra.mxu0 %v2129
    %2597 = vmatpush.bf16.msra.mxu0 %v2125
    %2598 = vmatpush.bf16.msra.mxu0 %v2121
    %2599 = vmatpush.bf16.msra.mxu0 %v2117
    %2600 = vmatmul.bf16.gmra.mxu0 %v2548
    %v2601 = vpop.f32.mrf.mxu0
    %v2602 = vadd.f32 0.0, %v2601
    %v2603 = vpop.f32.mrf.mxu0
    %2604 = vdwg.mxu0
    %v2605 = vadd.f32 %v2549, %v2563
    %v2606 = vadd.f32 %v2550, %v2576
    %v2607 = vadd.f32 %v2551, %v2589
    %v2608 = vadd.f32 %v2552, %v2602
    %v2609 = vxor.u32 %v2605, 2147483648
    %v2610 = vmul.f32 %v2609, 1.442695
    %v2611 = vpow.pop %v2610
    %v2612 = vadd.f32 %v2611, 1.0
    %v2613 = vrcp.pop %v2612
    %v2614 = vmul.f32 %v2612, %v2613
    %v2615 = vsub.f32 1.0, %v2614
    %v2616 = vmul.f32 %v2613, %v2615
    %v2617 = vadd.f32 %v2613, %v2616
    %vm2618 = vweird.f32 %v2612
    %vm2619 = vweird.f32 %v2613
    %vm2620 = vmor %vm2618, %vm2619
    %v2621 = vsel %vm2620, %v2613, %v2617
    %v2622 = vand.u32 2147483647, %v2612
    %vm2623 = vcmp.eq.f32.partialorder %v2622, 8.507059e+37
    %v2624 = vand.u32 %v2612, 2147483648
    %v2625 = vor.u32 1.1754944e-38, %v2624
    %v2626 = vsel %vm2623, %v2625, %v2621
    %v2627 = vmul.f32 1.0, %v2626
    %v2628 = vxor.u32 %v2606, 2147483648
    %v2629 = vmul.f32 %v2628, 1.442695
    %v2630 = vpow.pop %v2629
    %v2631 = vadd.f32 %v2630, 1.0
    %v2632 = vrcp.pop %v2631
    %v2633 = vmul.f32 %v2631, %v2632
    %v2634 = vsub.f32 1.0, %v2633
    %v2635 = vmul.f32 %v2632, %v2634
    %v2636 = vadd.f32 %v2632, %v2635
    %vm2637 = vweird.f32 %v2631
    %vm2638 = vweird.f32 %v2632
    %vm2639 = vmor %vm2637, %vm2638
    %v2640 = vsel %vm2639, %v2632, %v2636
    %v2641 = vand.u32 2147483647, %v2631
    %vm2642 = vcmp.eq.f32.partialorder %v2641, 8.507059e+37
    %v2643 = vand.u32 %v2631, 2147483648
    %v2644 = vor.u32 1.1754944e-38, %v2643
    %v2645 = vsel %vm2642, %v2644, %v2640
    %v2646 = vmul.f32 1.0, %v2645
    %v2647 = vtanh.pop %v2607
    %v2648 = vxor.u32 %v2608, 2147483648
    %v2649 = vmul.f32 %v2648, 1.442695
    %v2650 = vpow.pop %v2649
    %v2651 = vadd.f32 %v2650, 1.0
    %v2652 = vrcp.pop %v2651
    %v2653 = vmul.f32 %v2651, %v2652
    %v2654 = vsub.f32 1.0, %v2653
    %v2655 = vmul.f32 %v2652, %v2654
    %v2656 = vadd.f32 %v2652, %v2655
    %vm2657 = vweird.f32 %v2651
    %vm2658 = vweird.f32 %v2652
    %vm2659 = vmor %vm2657, %vm2658
    %v2660 = vsel %vm2659, %v2652, %v2656
    %v2661 = vand.u32 2147483647, %v2651
    %vm2662 = vcmp.eq.f32.partialorder %v2661, 8.507059e+37
    %v2663 = vand.u32 %v2651, 2147483648
    %v2664 = vor.u32 1.1754944e-38, %v2663
    %v2665 = vsel %vm2662, %v2664, %v2660
    %v2666 = vmul.f32 1.0, %v2665
    %v2667 = vmul.f32 %v2646, %v2544
    %v2668 = vmul.f32 %v2627, %v2647
    %v2669 = vadd.f32 %v2667, %v2668
    %v2670 = vtanh.pop %v2669
    %v2671 = vmul.f32 %v2666, %v2670
    %2672 = vst [vmem:[%s1107] sm:$0xff] %v2671
    %v2673 = vpack.c.bf16 %v2671, %v2671
    %v2674 = vld [vmem:[%s1110] sm:$0xff]
    %v2675 = vld [vmem:[%s1110 + $0x8] sm:$0xff]
    %v2676 = vld [vmem:[%s1110 + $0x10] sm:$0xff]
    %v2677 = vld [vmem:[%s1110 + $0x18] sm:$0xff]
    %2678 = vmatpush.bf16.msra.mxu0 %v2142
    %2679 = vmatpush.bf16.msra.mxu0 %v2138
    %2680 = vmatpush.bf16.msra.mxu0 %v2134
    %2681 = vmatpush.bf16.msra.mxu0 %v2130
    %2682 = vmatpush.bf16.msra.mxu0 %v2126
    %2683 = vmatpush.bf16.msra.mxu0 %v2122
    %2684 = vmatpush.bf16.msra.mxu0 %v2118
    %2685 = vmatpush.bf16.msra.mxu0 %v2114
    %2686 = vmatmul.bf16.gmra.mxu0 %v2673
    %v2687 = vpop.f32.mrf.mxu0
    %v2688 = vadd.f32 0.0, %v2687
    %v2689 = vpop.f32.mrf.mxu0
    %2690 = vdwg.mxu0
    %2691 = vmatpush.bf16.msra.mxu0 %v2143
    %2692 = vmatpush.bf16.msra.mxu0 %v2139
    %2693 = vmatpush.bf16.msra.mxu0 %v2135
    %2694 = vmatpush.bf16.msra.mxu0 %v2131
    %2695 = vmatpush.bf16.msra.mxu0 %v2127
    %2696 = vmatpush.bf16.msra.mxu0 %v2123
    %2697 = vmatpush.bf16.msra.mxu0 %v2119
    %2698 = vmatpush.bf16.msra.mxu0 %v2115
    %2699 = vmatmul.bf16.gmra.mxu0 %v2673
    %v2700 = vpop.f32.mrf.mxu0
    %v2701 = vadd.f32 0.0, %v2700
    %v2702 = vpop.f32.mrf.mxu0
    %2703 = vdwg.mxu0
    %2704 = vmatpush.bf16.msra.mxu0 %v2144
    %2705 = vmatpush.bf16.msra.mxu0 %v2140
    %2706 = vmatpush.bf16.msra.mxu0 %v2136
    %2707 = vmatpush.bf16.msra.mxu0 %v2132
    %2708 = vmatpush.bf16.msra.mxu0 %v2128
    %2709 = vmatpush.bf16.msra.mxu0 %v2124
    %2710 = vmatpush.bf16.msra.mxu0 %v2120
    %2711 = vmatpush.bf16.msra.mxu0 %v2116
    %2712 = vmatmul.bf16.gmra.mxu0 %v2673
    %v2713 = vpop.f32.mrf.mxu0
    %v2714 = vadd.f32 0.0, %v2713
    %v2715 = vpop.f32.mrf.mxu0
    %2716 = vdwg.mxu0
    %2717 = vmatpush.bf16.msra.mxu0 %v2145
    %2718 = vmatpush.bf16.msra.mxu0 %v2141
    %2719 = vmatpush.bf16.msra.mxu0 %v2137
    %2720 = vmatpush.bf16.msra.mxu0 %v2133
    %2721 = vmatpush.bf16.msra.mxu0 %v2129
    %2722 = vmatpush.bf16.msra.mxu0 %v2125
    %2723 = vmatpush.bf16.msra.mxu0 %v2121
    %2724 = vmatpush.bf16.msra.mxu0 %v2117
    %2725 = vmatmul.bf16.gmra.mxu0 %v2673
    %v2726 = vpop.f32.mrf.mxu0
    %v2727 = vadd.f32 0.0, %v2726
    %v2728 = vpop.f32.mrf.mxu0
    %2729 = vdwg.mxu0
    %v2730 = vadd.f32 %v2674, %v2688
    %v2731 = vadd.f32 %v2675, %v2701
    %v2732 = vadd.f32 %v2676, %v2714
    %v2733 = vadd.f32 %v2677, %v2727
    %v2734 = vxor.u32 %v2730, 2147483648
    %v2735 = vmul.f32 %v2734, 1.442695
    %v2736 = vpow.pop %v2735
    %v2737 = vadd.f32 %v2736, 1.0
    %v2738 = vrcp.pop %v2737
    %v2739 = vmul.f32 %v2737, %v2738
    %v2740 = vsub.f32 1.0, %v2739
    %v2741 = vmul.f32 %v2738, %v2740
    %v2742 = vadd.f32 %v2738, %v2741
    %vm2743 = vweird.f32 %v2737
    %vm2744 = vweird.f32 %v2738
    %vm2745 = vmor %vm2743, %vm2744
    %v2746 = vsel %vm2745, %v2738, %v2742
    %v2747 = vand.u32 2147483647, %v2737
    %vm2748 = vcmp.eq.f32.partialorder %v2747, 8.507059e+37
    %v2749 = vand.u32 %v2737, 2147483648
    %v2750 = vor.u32 1.1754944e-38, %v2749
    %v2751 = vsel %vm2748, %v2750, %v2746
    %v2752 = vmul.f32 1.0, %v2751
    %v2753 = vxor.u32 %v2731, 2147483648
    %v2754 = vmul.f32 %v2753, 1.442695
    %v2755 = vpow.pop %v2754
    %v2756 = vadd.f32 %v2755, 1.0
    %v2757 = vrcp.pop %v2756
    %v2758 = vmul.f32 %v2756, %v2757
    %v2759 = vsub.f32 1.0, %v2758
    %v2760 = vmul.f32 %v2757, %v2759
    %v2761 = vadd.f32 %v2757, %v2760
    %vm2762 = vweird.f32 %v2756
    %vm2763 = vweird.f32 %v2757
    %vm2764 = vmor %vm2762, %vm2763
    %v2765 = vsel %vm2764, %v2757, %v2761
    %v2766 = vand.u32 2147483647, %v2756
    %vm2767 = vcmp.eq.f32.partialorder %v2766, 8.507059e+37
    %v2768 = vand.u32 %v2756, 2147483648
    %v2769 = vor.u32 1.1754944e-38, %v2768
    %v2770 = vsel %vm2767, %v2769, %v2765
    %v2771 = vmul.f32 1.0, %v2770
    %v2772 = vtanh.pop %v2732
    %v2773 = vxor.u32 %v2733, 2147483648
    %v2774 = vmul.f32 %v2773, 1.442695
    %v2775 = vpow.pop %v2774
    %v2776 = vadd.f32 %v2775, 1.0
    %v2777 = vrcp.pop %v2776
    %v2778 = vmul.f32 %v2776, %v2777
    %v2779 = vsub.f32 1.0, %v2778
    %v2780 = vmul.f32 %v2777, %v2779
    %v2781 = vadd.f32 %v2777, %v2780
    %vm2782 = vweird.f32 %v2776
    %vm2783 = vweird.f32 %v2777
    %vm2784 = vmor %vm2782, %vm2783
    %v2785 = vsel %vm2784, %v2777, %v2781
    %v2786 = vand.u32 2147483647, %v2776
    %vm2787 = vcmp.eq.f32.partialorder %v2786, 8.507059e+37
    %v2788 = vand.u32 %v2776, 2147483648
    %v2789 = vor.u32 1.1754944e-38, %v2788
    %v2790 = vsel %vm2787, %v2789, %v2785
    %v2791 = vmul.f32 1.0, %v2790
    %v2792 = vmul.f32 %v2771, %v2669
    %v2793 = vmul.f32 %v2752, %v2772
    %v2794 = vadd.f32 %v2792, %v2793
    %v2795 = vtanh.pop %v2794
    %v2796 = vmul.f32 %v2791, %v2795
    %2797 = vst [vmem:[%s1234] sm:$0xff] %v2796
    %v2798 = vpack.c.bf16 %v2796, %v2796
    %v2799 = vld [vmem:[%s1237] sm:$0xff]
    %v2800 = vld [vmem:[%s1237 + $0x8] sm:$0xff]
    %v2801 = vld [vmem:[%s1237 + $0x10] sm:$0xff]
    %v2802 = vld [vmem:[%s1237 + $0x18] sm:$0xff]
    %2803 = vmatpush.bf16.msra.mxu0 %v2142
    %2804 = vmatpush.bf16.msra.mxu0 %v2138
    %2805 = vmatpush.bf16.msra.mxu0 %v2134
    %2806 = vmatpush.bf16.msra.mxu0 %v2130
    %2807 = vmatpush.bf16.msra.mxu0 %v2126
    %2808 = vmatpush.bf16.msra.mxu0 %v2122
    %2809 = vmatpush.bf16.msra.mxu0 %v2118
    %2810 = vmatpush.bf16.msra.mxu0 %v2114
    %2811 = vmatmul.bf16.gmra.mxu0 %v2798
    %v2812 = vpop.f32.mrf.mxu0
    %v2813 = vadd.f32 0.0, %v2812
    %v2814 = vpop.f32.mrf.mxu0
    %2815 = vdwg.mxu0
    %2816 = vmatpush.bf16.msra.mxu0 %v2143
    %2817 = vmatpush.bf16.msra.mxu0 %v2139
    %2818 = vmatpush.bf16.msra.mxu0 %v2135
    %2819 = vmatpush.bf16.msra.mxu0 %v2131
    %2820 = vmatpush.bf16.msra.mxu0 %v2127
    %2821 = vmatpush.bf16.msra.mxu0 %v2123
    %2822 = vmatpush.bf16.msra.mxu0 %v2119
    %2823 = vmatpush.bf16.msra.mxu0 %v2115
    %2824 = vmatmul.bf16.gmra.mxu0 %v2798
    %v2825 = vpop.f32.mrf.mxu0
    %v2826 = vadd.f32 0.0, %v2825
    %v2827 = vpop.f32.mrf.mxu0
    %2828 = vdwg.mxu0
    %2829 = vmatpush.bf16.msra.mxu0 %v2144
    %2830 = vmatpush.bf16.msra.mxu0 %v2140
    %2831 = vmatpush.bf16.msra.mxu0 %v2136
    %2832 = vmatpush.bf16.msra.mxu0 %v2132
    %2833 = vmatpush.bf16.msra.mxu0 %v2128
    %2834 = vmatpush.bf16.msra.mxu0 %v2124
    %2835 = vmatpush.bf16.msra.mxu0 %v2120
    %2836 = vmatpush.bf16.msra.mxu0 %v2116
    %2837 = vmatmul.bf16.gmra.mxu0 %v2798
    %v2838 = vpop.f32.mrf.mxu0
    %v2839 = vadd.f32 0.0, %v2838
    %v2840 = vpop.f32.mrf.mxu0
    %2841 = vdwg.mxu0
    %2842 = vmatpush.bf16.msra.mxu0 %v2145
    %2843 = vmatpush.bf16.msra.mxu0 %v2141
    %2844 = vmatpush.bf16.msra.mxu0 %v2137
    %2845 = vmatpush.bf16.msra.mxu0 %v2133
    %2846 = vmatpush.bf16.msra.mxu0 %v2129
    %2847 = vmatpush.bf16.msra.mxu0 %v2125
    %2848 = vmatpush.bf16.msra.mxu0 %v2121
    %2849 = vmatpush.bf16.msra.mxu0 %v2117
    %2850 = vmatmul.bf16.gmra.mxu0 %v2798
    %v2851 = vpop.f32.mrf.mxu0
    %v2852 = vadd.f32 0.0, %v2851
    %v2853 = vpop.f32.mrf.mxu0
    %2854 = vdwg.mxu0
    %v2855 = vadd.f32 %v2799, %v2813
    %v2856 = vadd.f32 %v2800, %v2826
    %v2857 = vadd.f32 %v2801, %v2839
    %v2858 = vadd.f32 %v2802, %v2852
    %v2859 = vxor.u32 %v2855, 2147483648
    %v2860 = vmul.f32 %v2859, 1.442695
    %v2861 = vpow.pop %v2860
    %v2862 = vadd.f32 %v2861, 1.0
    %v2863 = vrcp.pop %v2862
    %v2864 = vmul.f32 %v2862, %v2863
    %v2865 = vsub.f32 1.0, %v2864
    %v2866 = vmul.f32 %v2863, %v2865
    %v2867 = vadd.f32 %v2863, %v2866
    %vm2868 = vweird.f32 %v2862
    %vm2869 = vweird.f32 %v2863
    %vm2870 = vmor %vm2868, %vm2869
    %v2871 = vsel %vm2870, %v2863, %v2867
    %v2872 = vand.u32 2147483647, %v2862
    %vm2873 = vcmp.eq.f32.partialorder %v2872, 8.507059e+37
    %v2874 = vand.u32 %v2862, 2147483648
    %v2875 = vor.u32 1.1754944e-38, %v2874
    %v2876 = vsel %vm2873, %v2875, %v2871
    %v2877 = vmul.f32 1.0, %v2876
    %v2878 = vxor.u32 %v2856, 2147483648
    %v2879 = vmul.f32 %v2878, 1.442695
    %v2880 = vpow.pop %v2879
    %v2881 = vadd.f32 %v2880, 1.0
    %v2882 = vrcp.pop %v2881
    %v2883 = vmul.f32 %v2881, %v2882
    %v2884 = vsub.f32 1.0, %v2883
    %v2885 = vmul.f32 %v2882, %v2884
    %v2886 = vadd.f32 %v2882, %v2885
    %vm2887 = vweird.f32 %v2881
    %vm2888 = vweird.f32 %v2882
    %vm2889 = vmor %vm2887, %vm2888
    %v2890 = vsel %vm2889, %v2882, %v2886
    %v2891 = vand.u32 2147483647, %v2881
    %vm2892 = vcmp.eq.f32.partialorder %v2891, 8.507059e+37
    %v2893 = vand.u32 %v2881, 2147483648
    %v2894 = vor.u32 1.1754944e-38, %v2893
    %v2895 = vsel %vm2892, %v2894, %v2890
    %v2896 = vmul.f32 1.0, %v2895
    %v2897 = vtanh.pop %v2857
    %v2898 = vxor.u32 %v2858, 2147483648
    %v2899 = vmul.f32 %v2898, 1.442695
    %v2900 = vpow.pop %v2899
    %v2901 = vadd.f32 %v2900, 1.0
    %v2902 = vrcp.pop %v2901
    %v2903 = vmul.f32 %v2901, %v2902
    %v2904 = vsub.f32 1.0, %v2903
    %v2905 = vmul.f32 %v2902, %v2904
    %v2906 = vadd.f32 %v2902, %v2905
    %vm2907 = vweird.f32 %v2901
    %vm2908 = vweird.f32 %v2902
    %vm2909 = vmor %vm2907, %vm2908
    %v2910 = vsel %vm2909, %v2902, %v2906
    %v2911 = vand.u32 2147483647, %v2901
    %vm2912 = vcmp.eq.f32.partialorder %v2911, 8.507059e+37
    %v2913 = vand.u32 %v2901, 2147483648
    %v2914 = vor.u32 1.1754944e-38, %v2913
    %v2915 = vsel %vm2912, %v2914, %v2910
    %v2916 = vmul.f32 1.0, %v2915
    %v2917 = vmul.f32 %v2896, %v2794
    %v2918 = vmul.f32 %v2877, %v2897
    %v2919 = vadd.f32 %v2917, %v2918
    %v2920 = vtanh.pop %v2919
    %v2921 = vmul.f32 %v2916, %v2920
    %2922 = vst [vmem:[%s1361] sm:$0xff] %v2921
    %v2923 = vpack.c.bf16 %v2921, %v2921
    %v2924 = vld [vmem:[%s1364] sm:$0xff]
    %v2925 = vld [vmem:[%s1364 + $0x8] sm:$0xff]
    %v2926 = vld [vmem:[%s1364 + $0x10] sm:$0xff]
    %v2927 = vld [vmem:[%s1364 + $0x18] sm:$0xff]
    %2928 = vmatpush.bf16.msra.mxu0 %v2142
    %2929 = vmatpush.bf16.msra.mxu0 %v2138
    %2930 = vmatpush.bf16.msra.mxu0 %v2134
    %2931 = vmatpush.bf16.msra.mxu0 %v2130
    %2932 = vmatpush.bf16.msra.mxu0 %v2126
    %2933 = vmatpush.bf16.msra.mxu0 %v2122
    %2934 = vmatpush.bf16.msra.mxu0 %v2118
    %2935 = vmatpush.bf16.msra.mxu0 %v2114
    %2936 = vmatmul.bf16.gmra.mxu0 %v2923
    %v2937 = vpop.f32.mrf.mxu0
    %v2938 = vadd.f32 0.0, %v2937
    %v2939 = vpop.f32.mrf.mxu0
    %2940 = vdwg.mxu0
    %2941 = vmatpush.bf16.msra.mxu0 %v2143
    %2942 = vmatpush.bf16.msra.mxu0 %v2139
    %2943 = vmatpush.bf16.msra.mxu0 %v2135
    %2944 = vmatpush.bf16.msra.mxu0 %v2131
    %2945 = vmatpush.bf16.msra.mxu0 %v2127
    %2946 = vmatpush.bf16.msra.mxu0 %v2123
    %2947 = vmatpush.bf16.msra.mxu0 %v2119
    %2948 = vmatpush.bf16.msra.mxu0 %v2115
    %2949 = vmatmul.bf16.gmra.mxu0 %v2923
    %v2950 = vpop.f32.mrf.mxu0
    %v2951 = vadd.f32 0.0, %v2950
    %v2952 = vpop.f32.mrf.mxu0
    %2953 = vdwg.mxu0
    %2954 = vmatpush.bf16.msra.mxu0 %v2144
    %2955 = vmatpush.bf16.msra.mxu0 %v2140
    %2956 = vmatpush.bf16.msra.mxu0 %v2136
    %2957 = vmatpush.bf16.msra.mxu0 %v2132
    %2958 = vmatpush.bf16.msra.mxu0 %v2128
    %2959 = vmatpush.bf16.msra.mxu0 %v2124
    %2960 = vmatpush.bf16.msra.mxu0 %v2120
    %2961 = vmatpush.bf16.msra.mxu0 %v2116
    %2962 = vmatmul.bf16.gmra.mxu0 %v2923
    %v2963 = vpop.f32.mrf.mxu0
    %v2964 = vadd.f32 0.0, %v2963
    %v2965 = vpop.f32.mrf.mxu0
    %2966 = vdwg.mxu0
    %2967 = vmatpush.bf16.msra.mxu0 %v2145
    %2968 = vmatpush.bf16.msra.mxu0 %v2141
    %2969 = vmatpush.bf16.msra.mxu0 %v2137
    %2970 = vmatpush.bf16.msra.mxu0 %v2133
    %2971 = vmatpush.bf16.msra.mxu0 %v2129
    %2972 = vmatpush.bf16.msra.mxu0 %v2125
    %2973 = vmatpush.bf16.msra.mxu0 %v2121
    %2974 = vmatpush.bf16.msra.mxu0 %v2117
    %2975 = vmatmul.bf16.gmra.mxu0 %v2923
    %v2976 = vpop.f32.mrf.mxu0
    %v2977 = vadd.f32 0.0, %v2976
    %v2978 = vpop.f32.mrf.mxu0
    %2979 = vdwg.mxu0
    %v2980 = vadd.f32 %v2924, %v2938
    %v2981 = vadd.f32 %v2925, %v2951
    %v2982 = vadd.f32 %v2926, %v2964
    %v2983 = vadd.f32 %v2927, %v2977
    %v2984 = vxor.u32 %v2980, 2147483648
    %v2985 = vmul.f32 %v2984, 1.442695
    %v2986 = vpow.pop %v2985
    %v2987 = vadd.f32 %v2986, 1.0
    %v2988 = vrcp.pop %v2987
    %v2989 = vmul.f32 %v2987, %v2988
    %v2990 = vsub.f32 1.0, %v2989
    %v2991 = vmul.f32 %v2988, %v2990
    %v2992 = vadd.f32 %v2988, %v2991
    %vm2993 = vweird.f32 %v2987
    %vm2994 = vweird.f32 %v2988
    %vm2995 = vmor %vm2993, %vm2994
    %v2996 = vsel %vm2995, %v2988, %v2992
    %v2997 = vand.u32 2147483647, %v2987
    %vm2998 = vcmp.eq.f32.partialorder %v2997, 8.507059e+37
    %v2999 = vand.u32 %v2987, 2147483648
    %v3000 = vor.u32 1.1754944e-38, %v2999
    %v3001 = vsel %vm2998, %v3000, %v2996
    %v3002 = vmul.f32 1.0, %v3001
    %v3003 = vxor.u32 %v2981, 2147483648
    %v3004 = vmul.f32 %v3003, 1.442695
    %v3005 = vpow.pop %v3004
    %v3006 = vadd.f32 %v3005, 1.0
    %v3007 = vrcp.pop %v3006
    %v3008 = vmul.f32 %v3006, %v3007
    %v3009 = vsub.f32 1.0, %v3008
    %v3010 = vmul.f32 %v3007, %v3009
    %v3011 = vadd.f32 %v3007, %v3010
    %vm3012 = vweird.f32 %v3006
    %vm3013 = vweird.f32 %v3007
    %vm3014 = vmor %vm3012, %vm3013
    %v3015 = vsel %vm3014, %v3007, %v3011
    %v3016 = vand.u32 2147483647, %v3006
    %vm3017 = vcmp.eq.f32.partialorder %v3016, 8.507059e+37
    %v3018 = vand.u32 %v3006, 2147483648
    %v3019 = vor.u32 1.1754944e-38, %v3018
    %v3020 = vsel %vm3017, %v3019, %v3015
    %v3021 = vmul.f32 1.0, %v3020
    %v3022 = vtanh.pop %v2982
    %v3023 = vxor.u32 %v2983, 2147483648
    %v3024 = vmul.f32 %v3023, 1.442695
    %v3025 = vpow.pop %v3024
    %v3026 = vadd.f32 %v3025, 1.0
    %v3027 = vrcp.pop %v3026
    %v3028 = vmul.f32 %v3026, %v3027
    %v3029 = vsub.f32 1.0, %v3028
    %v3030 = vmul.f32 %v3027, %v3029
    %v3031 = vadd.f32 %v3027, %v3030
    %vm3032 = vweird.f32 %v3026
    %vm3033 = vweird.f32 %v3027
    %vm3034 = vmor %vm3032, %vm3033
    %v3035 = vsel %vm3034, %v3027, %v3031
    %v3036 = vand.u32 2147483647, %v3026
    %vm3037 = vcmp.eq.f32.partialorder %v3036, 8.507059e+37
    %v3038 = vand.u32 %v3026, 2147483648
    %v3039 = vor.u32 1.1754944e-38, %v3038
    %v3040 = vsel %vm3037, %v3039, %v3035
    %v3041 = vmul.f32 1.0, %v3040
    %v3042 = vmul.f32 %v3021, %v2919
    %v3043 = vmul.f32 %v3002, %v3022
    %v3044 = vadd.f32 %v3042, %v3043
    %v3045 = vtanh.pop %v3044
    %v3046 = vmul.f32 %v3041, %v3045
    %3047 = vst [vmem:[%s1488] sm:$0xff] %v3046
    %v3048 = vpack.c.bf16 %v3046, %v3046
    %v3049 = vld [vmem:[%s1491] sm:$0xff]
    %v3050 = vld [vmem:[%s1491 + $0x8] sm:$0xff]
    %v3051 = vld [vmem:[%s1491 + $0x10] sm:$0xff]
    %v3052 = vld [vmem:[%s1491 + $0x18] sm:$0xff]
    %3053 = vmatpush.bf16.msra.mxu0 %v2142
    %3054 = vmatpush.bf16.msra.mxu0 %v2138
    %3055 = vmatpush.bf16.msra.mxu0 %v2134
    %3056 = vmatpush.bf16.msra.mxu0 %v2130
    %3057 = vmatpush.bf16.msra.mxu0 %v2126
    %3058 = vmatpush.bf16.msra.mxu0 %v2122
    %3059 = vmatpush.bf16.msra.mxu0 %v2118
    %3060 = vmatpush.bf16.msra.mxu0 %v2114
    %3061 = vmatmul.bf16.gmra.mxu0 %v3048
    %v3062 = vpop.f32.mrf.mxu0
    %v3063 = vadd.f32 0.0, %v3062
    %v3064 = vpop.f32.mrf.mxu0
    %3065 = vdwg.mxu0
    %3066 = vmatpush.bf16.msra.mxu0 %v2143
    %3067 = vmatpush.bf16.msra.mxu0 %v2139
    %3068 = vmatpush.bf16.msra.mxu0 %v2135
    %3069 = vmatpush.bf16.msra.mxu0 %v2131
    %3070 = vmatpush.bf16.msra.mxu0 %v2127
    %3071 = vmatpush.bf16.msra.mxu0 %v2123
    %3072 = vmatpush.bf16.msra.mxu0 %v2119
    %3073 = vmatpush.bf16.msra.mxu0 %v2115
    %3074 = vmatmul.bf16.gmra.mxu0 %v3048
    %v3075 = vpop.f32.mrf.mxu0
    %v3076 = vadd.f32 0.0, %v3075
    %v3077 = vpop.f32.mrf.mxu0
    %3078 = vdwg.mxu0
    %3079 = vmatpush.bf16.msra.mxu0 %v2144
    %3080 = vmatpush.bf16.msra.mxu0 %v2140
    %3081 = vmatpush.bf16.msra.mxu0 %v2136
    %3082 = vmatpush.bf16.msra.mxu0 %v2132
    %3083 = vmatpush.bf16.msra.mxu0 %v2128
    %3084 = vmatpush.bf16.msra.mxu0 %v2124
    %3085 = vmatpush.bf16.msra.mxu0 %v2120
    %3086 = vmatpush.bf16.msra.mxu0 %v2116
    %3087 = vmatmul.bf16.gmra.mxu0 %v3048
    %v3088 = vpop.f32.mrf.mxu0
    %v3089 = vadd.f32 0.0, %v3088
    %v3090 = vpop.f32.mrf.mxu0
    %3091 = vdwg.mxu0
    %3092 = vmatpush.bf16.msra.mxu0 %v2145
    %3093 = vmatpush.bf16.msra.mxu0 %v2141
    %3094 = vmatpush.bf16.msra.mxu0 %v2137
    %3095 = vmatpush.bf16.msra.mxu0 %v2133
    %3096 = vmatpush.bf16.msra.mxu0 %v2129
    %3097 = vmatpush.bf16.msra.mxu0 %v2125
    %3098 = vmatpush.bf16.msra.mxu0 %v2121
    %3099 = vmatpush.bf16.msra.mxu0 %v2117
    %3100 = vmatmul.bf16.gmra.mxu0 %v3048
    %v3101 = vpop.f32.mrf.mxu0
    %v3102 = vadd.f32 0.0, %v3101
    %v3103 = vpop.f32.mrf.mxu0
    %3104 = vdwg.mxu0
    %v3105 = vadd.f32 %v3049, %v3063
    %v3106 = vadd.f32 %v3050, %v3076
    %v3107 = vadd.f32 %v3051, %v3089
    %v3108 = vadd.f32 %v3052, %v3102
    %v3109 = vxor.u32 %v3105, 2147483648
    %v3110 = vmul.f32 %v3109, 1.442695
    %v3111 = vpow.pop %v3110
    %v3112 = vadd.f32 %v3111, 1.0
    %v3113 = vrcp.pop %v3112
    %v3114 = vmul.f32 %v3112, %v3113
    %v3115 = vsub.f32 1.0, %v3114
    %v3116 = vmul.f32 %v3113, %v3115
    %v3117 = vadd.f32 %v3113, %v3116
    %vm3118 = vweird.f32 %v3112
    %vm3119 = vweird.f32 %v3113
    %vm3120 = vmor %vm3118, %vm3119
    %v3121 = vsel %vm3120, %v3113, %v3117
    %v3122 = vand.u32 2147483647, %v3112
    %vm3123 = vcmp.eq.f32.partialorder %v3122, 8.507059e+37
    %v3124 = vand.u32 %v3112, 2147483648
    %v3125 = vor.u32 1.1754944e-38, %v3124
    %v3126 = vsel %vm3123, %v3125, %v3121
    %v3127 = vmul.f32 1.0, %v3126
    %v3128 = vxor.u32 %v3106, 2147483648
    %v3129 = vmul.f32 %v3128, 1.442695
    %v3130 = vpow.pop %v3129
    %v3131 = vadd.f32 %v3130, 1.0
    %v3132 = vrcp.pop %v3131
    %v3133 = vmul.f32 %v3131, %v3132
    %v3134 = vsub.f32 1.0, %v3133
    %v3135 = vmul.f32 %v3132, %v3134
    %v3136 = vadd.f32 %v3132, %v3135
    %vm3137 = vweird.f32 %v3131
    %vm3138 = vweird.f32 %v3132
    %vm3139 = vmor %vm3137, %vm3138
    %v3140 = vsel %vm3139, %v3132, %v3136
    %v3141 = vand.u32 2147483647, %v3131
    %vm3142 = vcmp.eq.f32.partialorder %v3141, 8.507059e+37
    %v3143 = vand.u32 %v3131, 2147483648
    %v3144 = vor.u32 1.1754944e-38, %v3143
    %v3145 = vsel %vm3142, %v3144, %v3140
    %v3146 = vmul.f32 1.0, %v3145
    %v3147 = vtanh.pop %v3107
    %v3148 = vxor.u32 %v3108, 2147483648
    %v3149 = vmul.f32 %v3148, 1.442695
    %v3150 = vpow.pop %v3149
    %v3151 = vadd.f32 %v3150, 1.0
    %v3152 = vrcp.pop %v3151
    %v3153 = vmul.f32 %v3151, %v3152
    %v3154 = vsub.f32 1.0, %v3153
    %v3155 = vmul.f32 %v3152, %v3154
    %v3156 = vadd.f32 %v3152, %v3155
    %vm3157 = vweird.f32 %v3151
    %vm3158 = vweird.f32 %v3152
    %vm3159 = vmor %vm3157, %vm3158
    %v3160 = vsel %vm3159, %v3152, %v3156
    %v3161 = vand.u32 2147483647, %v3151
    %vm3162 = vcmp.eq.f32.partialorder %v3161, 8.507059e+37
    %v3163 = vand.u32 %v3151, 2147483648
    %v3164 = vor.u32 1.1754944e-38, %v3163
    %v3165 = vsel %vm3162, %v3164, %v3160
    %v3166 = vmul.f32 1.0, %v3165
    %v3167 = vmul.f32 %v3146, %v3044
    %v3168 = vmul.f32 %v3127, %v3147
    %v3169 = vadd.f32 %v3167, %v3168
    %v3170 = vtanh.pop %v3169
    %v3171 = vmul.f32 %v3166, %v3170
    %3172 = vst [vmem:[%s1615] sm:$0xff] %v3171
    // Predicated region
    $region26: #{_lstm_forward_impl.1} parent=1 // pred_check
      _
    $region27: #{_lstm_forward_impl.1} parent=1 // pred_check_branch
      %3174 = sbr.rel (0) target = $region29
    $region28: #{_lstm_forward_impl.1} parent=1 // pred_region
      _
    $region29: #{_lstm_forward_impl.1} parent=1 // pred_fallthru
      _
    // Predicated region
    $region30: #{_lstm_forward_impl.1} parent=1 // pred_check
      _
    $region31: #{_lstm_forward_impl.1} parent=1 // pred_check_branch
      %3176 = sbr.rel (0) target = $region33
    $region32: #{_lstm_forward_impl.1} parent=1 // pred_region
      _
    $region33: #{_lstm_forward_impl.1} parent=1 // pred_fallthru
      _
    %3177 = vsyncpa [#allocation4], 1
    %3178 = vsyncpa [#allocation6], 1

</llo_original>
